<compile_context>
chip_gen: v7x
topology: tpu7x:2x2x1
jax: 0.10.0
libtpu: 0.0.40
codegen_flags: <defaults>
</compile_context>

<pallas_src>
import functools

import jax
import jax.numpy as jnp
import numpy as np
from jax.experimental import pallas as pl
from jax.experimental.pallas import tpu as pltpu

BN_EPS = 1e-5
C1 = 4  # conv1 output channels (fixed by the module definition)


# ----------------------------- Pallas kernels ------------------------------ #

def _pass1_conv1_kernel(w1e_ref, x_ref, acts_ref, stats_ref, xp_ref, *, cin, h, w):
    """Per image: build halo in VMEM, conv1 (3x3, no bias) with all C1 output
    channels packed along the lane axis; store activations + BN partial stats."""
    f32 = jnp.float32

    # 1-px zero halo built in VMEM (input arrives unpadded from HBM).
    xp_ref[:, 0:1, :] = jnp.zeros((cin, 1, w + 2), f32)
    xp_ref[:, h + 1:h + 2, :] = jnp.zeros((cin, 1, w + 2), f32)
    xp_ref[:, :, 0:1] = jnp.zeros((cin, h + 2, 1), f32)
    xp_ref[:, :, w + 1:w + 2] = jnp.zeros((cin, h + 2, 1), f32)
    for ci in range(cin):
        xp_ref[ci, 1:h + 1, 1:w + 1] = x_ref[ci]

    # conv1: one wide FMA per (ci, dy, dx) tap over a (h, C1*w) accumulator.
    acc = jnp.zeros((h, C1 * w), f32)
    for ci in range(cin):
        for dy in range(3):
            for dx in range(3):
                tap = xp_ref[ci, dy:dy + h, dx:dx + w]          # (h, w)
                tap4 = jnp.concatenate([tap] * C1, axis=-1)     # (h, C1*w)
                wrow = w1e_ref[(ci * 3 + dy) * 3 + dx]          # (C1*w,)
                acc = acc + wrow[None, :] * tap4
    acts_ref[...] = acc                                          # lane-dense store

    # Per-channel partial sum / sum-of-squares for train-mode BatchNorm.
    # TODO(synk): E[x^2]-E[x]^2 in f32 loses precision for very large N*H*W or
    #   large-DC inputs; switch to a compensated combine if that regime matters.
    for co in range(C1):
        a = acc[:, co * w:(co + 1) * w]
        stats_ref[0:1, co:co + 1] = jnp.sum(a, keepdims=True)
        stats_ref[1:2, co:co + 1] = jnp.sum(a * a, keepdims=True)


def _pass2_bn_conv2_kernel(stats_ref, p2_ref, acts_ref, o_ref, a_ref, *, n, h, w):
    """Per image: finalize BN from SMEM stats, scale/shift + ReLU into a
    zero-bordered VMEM scratch, then conv2 (4->1) + bias + sigmoid (all VPU)."""
    f32 = jnp.float32
    inv_cnt = 1.0 / float(n * h * w)

    # Zero only the 1-px halo border (interior is fully overwritten below).
    a_ref[:, 0:1, :] = jnp.zeros((C1, 1, w + 2), f32)
    a_ref[:, h + 1:h + 2, :] = jnp.zeros((C1, 1, w + 2), f32)
    a_ref[:, :, 0:1] = jnp.zeros((C1, h + 2, 1), f32)
    a_ref[:, :, w + 1:w + 2] = jnp.zeros((C1, h + 2, 1), f32)

    # BN finalize (8 numbers) + folded scale/shift + ReLU, per channel.
    for co in range(C1):
        s = jnp.zeros((1, 1), f32)
        ss = jnp.zeros((1, 1), f32)
        for i in range(n):
            s = s + stats_ref[(i * 2 + 0) * C1 + co]
            ss = ss + stats_ref[(i * 2 + 1) * C1 + co]
        mean = s * inv_cnt
        var = ss * inv_cnt - mean * mean              # biased variance (train mode)
        inv_std = jax.lax.rsqrt(var + BN_EPS)         # (1,1) EUP rsqrt
        gamma = p2_ref[co]
        beta = p2_ref[C1 + co]
        act = acts_ref[:, co * w:(co + 1) * w]        # (h, w) stored conv1 output
        ybn = (act - mean) * (inv_std * gamma) + beta
        a_ref[co, 1:h + 1, 1:w + 1] = jnp.maximum(ybn, 0.0)

    # conv2: 36 broadcast FMAs with SMEM weights, then bias + sigmoid.
    # TODO(synk): check the Mosaic dump for materialized copies of the dx=1,2
    #   lane-shifted taps; if present, replace with pltpu.roll on loaded planes.
    out = jnp.zeros((h, w), f32)
    for co in range(C1):
        for dy in range(3):
            for dx in range(3):
                wgt = p2_ref[2 * C1 + (co * 3 + dy) * 3 + dx]
                out = out + wgt * a_ref[co, dy:dy + h, dx:dx + w]
    out = out + p2_ref[2 * C1 + 9 * C1]               # conv2 bias
    o_ref[...] = jax.nn.sigmoid(out)


# ------------------------------- wrapper ----------------------------------- #

def _pick_vmem_limit():
    """~3/4 of physical VMEM, capped: ~48 MiB on v7x, ~96 MiB on v5e/v6e."""
    try:
        cap = int(pltpu.get_tpu_info().vmem_capacity_bytes)
    except Exception:
        cap = 128 * 1024 * 1024
    return max(32 * 1024 * 1024, min(int(cap * 3 // 4), 96 * 1024 * 1024))


def _forward_impl(x_nchw, params):
    """x_nchw: (N, Cin, H, W) float32 -> (N, 1, H, W) float32."""
    n, cin, h, w = x_nchw.shape
    x = x_nchw.astype(jnp.float32)

    # Lane-expanded conv1 weights: w1e[(ci*3+dy)*3+dx, co*w + x] = w1[co, ci, dy, dx].
    w1 = params["w1"].astype(jnp.float32)                       # (C1, cin, 3, 3)
    w1t = jnp.transpose(w1, (1, 2, 3, 0)).reshape(cin * 9, C1)  # (taps, C1)
    w1e = jnp.repeat(w1t, w, axis=1)                            # (taps, C1*w)

    cparams = pltpu.CompilerParams(dimension_semantics=("parallel",),
                                   vmem_limit_bytes=_pick_vmem_limit())
    x_spec = pl.BlockSpec((None, cin, h, w), lambda i: (i, 0, 0, 0))
    w1e_spec = pl.BlockSpec((cin * 9, C1 * w), lambda i: (0, 0))
    smem_spec = pl.BlockSpec(memory_space=pltpu.MemorySpace.SMEM)

    # ---- pass 1: conv1 -> activations (lane-packed) + per-image BN stats ----
    acts, stats = pl.pallas_call(
        functools.partial(_pass1_conv1_kernel, cin=cin, h=h, w=w),
        out_shape=(jax.ShapeDtypeStruct((n, h, C1 * w), jnp.float32),
                   jax.ShapeDtypeStruct((n, 2, C1), jnp.float32)),
        grid=(n,),
        in_specs=[w1e_spec, x_spec],
        out_specs=(pl.BlockSpec((None, h, C1 * w), lambda i: (i, 0, 0)),
                   pl.BlockSpec((None, 2, C1), lambda i: (i, 0, 0))),
        scratch_shapes=[pltpu.VMEM((cin, h + 2, w + 2), jnp.float32)],
        compiler_params=cparams,
    )(w1e, x)

    # Tiny SMEM inputs for pass 2 (raw stats + gamma/beta + conv2 weights/bias).
    stats_flat = stats.reshape(-1)                              # (n*2*C1,)
    p2 = jnp.concatenate([params["gamma"].astype(jnp.float32),
                          params["beta"].astype(jnp.float32),
                          params["w2"].reshape(-1).astype(jnp.float32),
                          params["b2"].reshape(-1).astype(jnp.float32)])  # (45,)

    # ---- pass 2: BN finalize -> scale/shift -> ReLU -> conv2 -> sigmoid ----
    out = pl.pallas_call(
        functools.partial(_pass2_bn_conv2_kernel, n=n, h=h, w=w),
        out_shape=jax.ShapeDtypeStruct((n, h, w), jnp.float32),
        grid=(n,),
        in_specs=[smem_spec, smem_spec,
                  pl.BlockSpec((None, h, C1 * w), lambda i: (i, 0, 0))],
        out_specs=pl.BlockSpec((None, h, w), lambda i: (i, 0, 0)),
        scratch_shapes=[pltpu.VMEM((C1, h + 2, w + 2), jnp.float32)],
        compiler_params=cparams,
    )(stats_flat, p2, acts)

    return out.reshape(n, 1, h, w)


get_segmap_forward = jax.jit(_forward_impl)


# ------------------------------ params / ref -------------------------------- #

def init_params(num_in_layers, key):
    """Deterministic synthetic init (shapes as in get_segmap.__init__)."""
    k1, k2, k3, k4 = jax.random.split(key, 4)
    w1 = (jax.random.normal(k1, (C1, num_in_layers, 3, 3)) * 0.1).astype(jnp.float32)
    b1 = (jax.random.normal(k2, (C1,)) * 0.1).astype(jnp.float32)
    w2 = (jax.random.normal(k3, (1, C1, 3, 3)) * 0.1).astype(jnp.float32)
    b2 = (jax.random.normal(k4, (1,)) * 0.1).astype(jnp.float32)
    gamma = jnp.ones((C1,), jnp.float32)   # BatchNorm2d default affine init
    beta = jnp.zeros((C1,), jnp.float32)
    return dict(w1=w1, b1=b1, w2=w2, b2=b2, gamma=gamma, beta=beta)


def _ref_forward(x, p):
    """Pure-JAX reference (NCHW) mirroring the PyTorch forward (incl. b1)."""
    dn = ("NCHW", "OIHW", "NCHW")
    y = jax.lax.conv_general_dilated(x, p["w1"], (1, 1), "SAME", dimension_numbers=dn)
    y = y + p["b1"][None, :, None, None]
    mean = jnp.mean(y, axis=(0, 2, 3), keepdims=True)
    var = jnp.mean((y - mean) ** 2, axis=(0, 2, 3), keepdims=True)
    y = (y - mean) * jax.lax.rsqrt(var + BN_EPS)
    y = y * p["gamma"][None, :, None, None] + p["beta"][None, :, None, None]
    y = jnp.maximum(y, 0.0)
    y = jax.lax.conv_general_dilated(y, p["w2"], (1, 1), "SAME", dimension_numbers=dn)
    y = y + p["b2"][None, :, None, None]
    return jax.nn.sigmoid(y)


if __name__ == "__main__":
    N, CIN, H, W = 2, 4, 16, 16
    key = jax.random.PRNGKey(0)
    kx, kp = jax.random.split(key)
    x = jax.random.normal(kx, (N, CIN, H, W), dtype=jnp.float32)
    params = init_params(CIN, kp)

    out = jax.block_until_ready(get_segmap_forward(x, params))
    assert out.shape == (N, 1, H, W), out.shape

    ref = jax.block_until_ready(_ref_forward(x, params))
    np.testing.assert_allclose(np.asarray(out), np.asarray(ref), rtol=1e-3, atol=1e-3)

    print("KERNEL_OK")
</pallas_src>

<mosaic_0001>
module attributes {stable_mosaic.version = 11 : i64} {
  func.func @_pass1_conv1_kernel(%arg0: i32, %arg1: memref<36x64xf32, #tpu.memory_space<vmem>>, %arg2: memref<1x4x16x16xf32, #tpu.memory_space<vmem>>, %arg3: memref<1x16x64xf32, #tpu.memory_space<vmem>>, %arg4: memref<1x2x4xf32, #tpu.memory_space<vmem>>, %arg5: memref<4x18x18xf32, #tpu.memory_space<vmem>>) attributes {dimension_semantics = [#tpu.dimension_semantics<parallel>], iteration_bounds = array<i64: 2>, scalar_prefetch = 0 : i64, scratch_operands = 1 : i64, tpu.core_type = #tpu.core_type<tc>, window_params = [{pipeline_mode = #tpu.pipeline_mode<synchronous>, transform_indices = @transform_0, window_bounds = array<i64: 36, 64>}, {transform_indices = @transform_1, window_bounds = array<i64: 1, 4, 16, 16>}, {transform_indices = @transform_2, window_bounds = array<i64: 1, 16, 64>}, {transform_indices = @transform_3, window_bounds = array<i64: 1, 2, 4>}]} {
    %cst = arith.constant 0.000000e+00 : f32
    %0 = vector.broadcast %cst : f32 to vector<4x1x18xf32>
    %c0 = arith.constant 0 : index
    %c0_0 = arith.constant 0 : index
    %c0_1 = arith.constant 0 : index
    %1 = vector.load %arg5[%c0, %c0_0, %c0_1] : memref<4x18x18xf32, #tpu.memory_space<vmem>>, vector<4x1x18xf32>
    tpu.vector_store %arg5[%c0, %c0_0, %c0_1], %0 {strides = array<i32>} : memref<4x18x18xf32, #tpu.memory_space<vmem>>, vector<4x1x18xf32>,
    %cst_2 = arith.constant 0.000000e+00 : f32
    %2 = vector.broadcast %cst_2 : f32 to vector<4x1x18xf32>
    %c0_3 = arith.constant 0 : index
    %c17 = arith.constant 17 : index
    %c0_4 = arith.constant 0 : index
    %3 = vector.load %arg5[%c0_3, %c17, %c0_4] : memref<4x18x18xf32, #tpu.memory_space<vmem>>, vector<4x1x18xf32>
    tpu.vector_store %arg5[%c0_3, %c17, %c0_4], %2 {strides = array<i32>} : memref<4x18x18xf32, #tpu.memory_space<vmem>>, vector<4x1x18xf32>,
    %cst_5 = arith.constant 0.000000e+00 : f32
    %4 = vector.broadcast %cst_5 : f32 to vector<4x18x1xf32>
    %c0_6 = arith.constant 0 : index
    %c0_7 = arith.constant 0 : index
    %c0_8 = arith.constant 0 : index
    %5 = vector.load %arg5[%c0_6, %c0_7, %c0_8] : memref<4x18x18xf32, #tpu.memory_space<vmem>>, vector<4x18x1xf32>
    tpu.vector_store %arg5[%c0_6, %c0_7, %c0_8], %4 {strides = array<i32>} : memref<4x18x18xf32, #tpu.memory_space<vmem>>, vector<4x18x1xf32>,
    %cst_9 = arith.constant 0.000000e+00 : f32
    %6 = vector.broadcast %cst_9 : f32 to vector<4x18x1xf32>
    %c0_10 = arith.constant 0 : index
    %c0_11 = arith.constant 0 : index
    %c17_12 = arith.constant 17 : index
    %7 = vector.load %arg5[%c0_10, %c0_11, %c17_12] : memref<4x18x18xf32, #tpu.memory_space<vmem>>, vector<4x18x1xf32>
    tpu.vector_store %arg5[%c0_10, %c0_11, %c17_12], %6 {strides = array<i32>} : memref<4x18x18xf32, #tpu.memory_space<vmem>>, vector<4x18x1xf32>,
    %c0_13 = arith.constant 0 : index
    %c0_14 = arith.constant 0 : index
    %c0_15 = arith.constant 0 : index
    %c0_16 = arith.constant 0 : index
    %8 = vector.load %arg2[%c0_13, %c0_14, %c0_15, %c0_16] : memref<1x4x16x16xf32, #tpu.memory_space<vmem>>, vector<1x1x16x16xf32>
    %9 = vector.shape_cast %8 : vector<1x1x16x16xf32> to vector<16x16xf32>
    %c0_17 = arith.constant 0 : index
    %c1 = arith.constant 1 : index
    %c1_18 = arith.constant 1 : index
    %10 = vector.load %arg5[%c0_17, %c1, %c1_18] : memref<4x18x18xf32, #tpu.memory_space<vmem>>, vector<1x16x16xf32>
    %11 = vector.shape_cast %10 : vector<1x16x16xf32> to vector<16x16xf32>
    %12 = vector.shape_cast %9 : vector<16x16xf32> to vector<1x16x16xf32>
    tpu.vector_store %arg5[%c0_17, %c1, %c1_18], %12 {strides = array<i32>} : memref<4x18x18xf32, #tpu.memory_space<vmem>>, vector<1x16x16xf32>,
    %c0_19 = arith.constant 0 : index
    %c1_20 = arith.constant 1 : index
    %c0_21 = arith.constant 0 : index
    %c0_22 = arith.constant 0 : index
    %13 = vector.load %arg2[%c0_19, %c1_20, %c0_21, %c0_22] : memref<1x4x16x16xf32, #tpu.memory_space<vmem>>, vector<1x1x16x16xf32>
    %14 = vector.shape_cast %13 : vector<1x1x16x16xf32> to vector<16x16xf32>
    %c1_23 = arith.constant 1 : index
    %c1_24 = arith.constant 1 : index
    %c1_25 = arith.constant 1 : index
    %15 = vector.load %arg5[%c1_23, %c1_24, %c1_25] : memref<4x18x18xf32, #tpu.memory_space<vmem>>, vector<1x16x16xf32>
    %16 = vector.shape_cast %15 : vector<1x16x16xf32> to vector<16x16xf32>
    %17 = vector.shape_cast %14 : vector<16x16xf32> to vector<1x16x16xf32>
    tpu.vector_store %arg5[%c1_23, %c1_24, %c1_25], %17 {strides = array<i32>} : memref<4x18x18xf32, #tpu.memory_space<vmem>>, vector<1x16x16xf32>,
    %c0_26 = arith.constant 0 : index
    %c2 = arith.constant 2 : index
    %c0_27 = arith.constant 0 : index
    %c0_28 = arith.constant 0 : index
    %18 = vector.load %arg2[%c0_26, %c2, %c0_27, %c0_28] : memref<1x4x16x16xf32, #tpu.memory_space<vmem>>, vector<1x1x16x16xf32>
    %19 = vector.shape_cast %18 : vector<1x1x16x16xf32> to vector<16x16xf32>
    %c2_29 = arith.constant 2 : index
    %c1_30 = arith.constant 1 : index
    %c1_31 = arith.constant 1 : index
    %20 = vector.load %arg5[%c2_29, %c1_30, %c1_31] : memref<4x18x18xf32, #tpu.memory_space<vmem>>, vector<1x16x16xf32>
    %21 = vector.shape_cast %20 : vector<1x16x16xf32> to vector<16x16xf32>
    %22 = vector.shape_cast %19 : vector<16x16xf32> to vector<1x16x16xf32>
    tpu.vector_store %arg5[%c2_29, %c1_30, %c1_31], %22 {strides = array<i32>} : memref<4x18x18xf32, #tpu.memory_space<vmem>>, vector<1x16x16xf32>,
    %c0_32 = arith.constant 0 : index
    %c3 = arith.constant 3 : index
    %c0_33 = arith.constant 0 : index
    %c0_34 = arith.constant 0 : index
    %23 = vector.load %arg2[%c0_32, %c3, %c0_33, %c0_34] : memref<1x4x16x16xf32, #tpu.memory_space<vmem>>, vector<1x1x16x16xf32>
    %24 = vector.shape_cast %23 : vector<1x1x16x16xf32> to vector<16x16xf32>
    %c3_35 = arith.constant 3 : index
    %c1_36 = arith.constant 1 : index
    %c1_37 = arith.constant 1 : index
    %25 = vector.load %arg5[%c3_35, %c1_36, %c1_37] : memref<4x18x18xf32, #tpu.memory_space<vmem>>, vector<1x16x16xf32>
    %26 = vector.shape_cast %25 : vector<1x16x16xf32> to vector<16x16xf32>
    %27 = vector.shape_cast %24 : vector<16x16xf32> to vector<1x16x16xf32>
    tpu.vector_store %arg5[%c3_35, %c1_36, %c1_37], %27 {strides = array<i32>} : memref<4x18x18xf32, #tpu.memory_space<vmem>>, vector<1x16x16xf32>,
    %cst_38 = arith.constant 0.000000e+00 : f32
    %28 = vector.broadcast %cst_38 : f32 to vector<16x64xf32>
    %c0_39 = arith.constant 0 : index
    %c0_40 = arith.constant 0 : index
    %c0_41 = arith.constant 0 : index
    %29 = vector.load %arg5[%c0_39, %c0_40, %c0_41] : memref<4x18x18xf32, #tpu.memory_space<vmem>>, vector<1x16x16xf32>
    %30 = vector.shape_cast %29 : vector<1x16x16xf32> to vector<16x16xf32>
    %31 = tpu.concatenate %30, %30, %30, %30 in 1 : vector<16x16xf32>, vector<16x16xf32>, vector<16x16xf32>, vector<16x16xf32> -> vector<16x64xf32>
    %c0_42 = arith.constant 0 : index
    %c0_43 = arith.constant 0 : index
    %32 = vector.load %arg1[%c0_42, %c0_43] : memref<36x64xf32, #tpu.memory_space<vmem>>, vector<1x64xf32>
    %33 = vector.shape_cast %32 : vector<1x64xf32> to vector<64xf32>
    %34 = vector.shape_cast %33 : vector<64xf32> to vector<1x64xf32>
    %35 = vector.broadcast %34 : vector<1x64xf32> to vector<16x64xf32>
    %36 = arith.mulf %35, %31 : vector<16x64xf32>
    %37 = arith.addf %28, %36 : vector<16x64xf32>
    %c0_44 = arith.constant 0 : index
    %c0_45 = arith.constant 0 : index
    %c1_46 = arith.constant 1 : index
    %38 = vector.load %arg5[%c0_44, %c0_45, %c1_46] : memref<4x18x18xf32, #tpu.memory_space<vmem>>, vector<1x16x16xf32>
    %39 = vector.shape_cast %38 : vector<1x16x16xf32> to vector<16x16xf32>
    %40 = tpu.concatenate %39, %39, %39, %39 in 1 : vector<16x16xf32>, vector<16x16xf32>, vector<16x16xf32>, vector<16x16xf32> -> vector<16x64xf32>
    %c1_47 = arith.constant 1 : index
    %c0_48 = arith.constant 0 : index
    %41 = vector.load %arg1[%c1_47, %c0_48] : memref<36x64xf32, #tpu.memory_space<vmem>>, vector<1x64xf32>
    %42 = vector.shape_cast %41 : vector<1x64xf32> to vector<64xf32>
    %43 = vector.shape_cast %42 : vector<64xf32> to vector<1x64xf32>
    %44 = vector.broadcast %43 : vector<1x64xf32> to vector<16x64xf32>
    %45 = arith.mulf %44, %40 : vector<16x64xf32>
    %46 = arith.addf %37, %45 : vector<16x64xf32>
    %c0_49 = arith.constant 0 : index
    %c0_50 = arith.constant 0 : index
    %c2_51 = arith.constant 2 : index
    %47 = vector.load %arg5[%c0_49, %c0_50, %c2_51] : memref<4x18x18xf32, #tpu.memory_space<vmem>>, vector<1x16x16xf32>
    %48 = vector.shape_cast %47 : vector<1x16x16xf32> to vector<16x16xf32>
    %49 = tpu.concatenate %48, %48, %48, %48 in 1 : vector<16x16xf32>, vector<16x16xf32>, vector<16x16xf32>, vector<16x16xf32> -> vector<16x64xf32>
    %c2_52 = arith.constant 2 : index
    %c0_53 = arith.constant 0 : index
    %50 = vector.load %arg1[%c2_52, %c0_53] : memref<36x64xf32, #tpu.memory_space<vmem>>, vector<1x64xf32>
    %51 = vector.shape_cast %50 : vector<1x64xf32> to vector<64xf32>
    %52 = vector.shape_cast %51 : vector<64xf32> to vector<1x64xf32>
    %53 = vector.broadcast %52 : vector<1x64xf32> to vector<16x64xf32>
    %54 = arith.mulf %53, %49 : vector<16x64xf32>
    %55 = arith.addf %46, %54 : vector<16x64xf32>
    %c0_54 = arith.constant 0 : index
    %c1_55 = arith.constant 1 : index
    %c0_56 = arith.constant 0 : index
    %56 = vector.load %arg5[%c0_54, %c1_55, %c0_56] : memref<4x18x18xf32, #tpu.memory_space<vmem>>, vector<1x16x16xf32>
    %57 = vector.shape_cast %56 : vector<1x16x16xf32> to vector<16x16xf32>
    %58 = tpu.concatenate %57, %57, %57, %57 in 1 : vector<16x16xf32>, vector<16x16xf32>, vector<16x16xf32>, vector<16x16xf32> -> vector<16x64xf32>
    %c3_57 = arith.constant 3 : index
    %c0_58 = arith.constant 0 : index
    %59 = vector.load %arg1[%c3_57, %c0_58] : memref<36x64xf32, #tpu.memory_space<vmem>>, vector<1x64xf32>
    %60 = vector.shape_cast %59 : vector<1x64xf32> to vector<64xf32>
    %61 = vector.shape_cast %60 : vector<64xf32> to vector<1x64xf32>
    %62 = vector.broadcast %61 : vector<1x64xf32> to vector<16x64xf32>
    %63 = arith.mulf %62, %58 : vector<16x64xf32>
    %64 = arith.addf %55, %63 : vector<16x64xf32>
    %c0_59 = arith.constant 0 : index
    %c1_60 = arith.constant 1 : index
    %c1_61 = arith.constant 1 : index
    %65 = vector.load %arg5[%c0_59, %c1_60, %c1_61] : memref<4x18x18xf32, #tpu.memory_space<vmem>>, vector<1x16x16xf32>
    %66 = vector.shape_cast %65 : vector<1x16x16xf32> to vector<16x16xf32>
    %67 = tpu.concatenate %66, %66, %66, %66 in 1 : vector<16x16xf32>, vector<16x16xf32>, vector<16x16xf32>, vector<16x16xf32> -> vector<16x64xf32>
    %c4 = arith.constant 4 : index
    %c0_62 = arith.constant 0 : index
    %68 = vector.load %arg1[%c4, %c0_62] : memref<36x64xf32, #tpu.memory_space<vmem>>, vector<1x64xf32>
    %69 = vector.shape_cast %68 : vector<1x64xf32> to vector<64xf32>
    %70 = vector.shape_cast %69 : vector<64xf32> to vector<1x64xf32>
    %71 = vector.broadcast %70 : vector<1x64xf32> to vector<16x64xf32>
    %72 = arith.mulf %71, %67 : vector<16x64xf32>
    %73 = arith.addf %64, %72 : vector<16x64xf32>
    %c0_63 = arith.constant 0 : index
    %c1_64 = arith.constant 1 : index
    %c2_65 = arith.constant 2 : index
    %74 = vector.load %arg5[%c0_63, %c1_64, %c2_65] : memref<4x18x18xf32, #tpu.memory_space<vmem>>, vector<1x16x16xf32>
    %75 = vector.shape_cast %74 : vector<1x16x16xf32> to vector<16x16xf32>
    %76 = tpu.concatenate %75, %75, %75, %75 in 1 : vector<16x16xf32>, vector<16x16xf32>, vector<16x16xf32>, vector<16x16xf32> -> vector<16x64xf32>
    %c5 = arith.constant 5 : index
    %c0_66 = arith.constant 0 : index
    %77 = vector.load %arg1[%c5, %c0_66] : memref<36x64xf32, #tpu.memory_space<vmem>>, vector<1x64xf32>
    %78 = vector.shape_cast %77 : vector<1x64xf32> to vector<64xf32>
    %79 = vector.shape_cast %78 : vector<64xf32> to vector<1x64xf32>
    %80 = vector.broadcast %79 : vector<1x64xf32> to vector<16x64xf32>
    %81 = arith.mulf %80, %76 : vector<16x64xf32>
    %82 = arith.addf %73, %81 : vector<16x64xf32>
    %c0_67 = arith.constant 0 : index
    %c2_68 = arith.constant 2 : index
    %c0_69 = arith.constant 0 : index
    %83 = vector.load %arg5[%c0_67, %c2_68, %c0_69] : memref<4x18x18xf32, #tpu.memory_space<vmem>>, vector<1x16x16xf32>
    %84 = vector.shape_cast %83 : vector<1x16x16xf32> to vector<16x16xf32>
    %85 = tpu.concatenate %84, %84, %84, %84 in 1 : vector<16x16xf32>, vector<16x16xf32>, vector<16x16xf32>, vector<16x16xf32> -> vector<16x64xf32>
    %c6 = arith.constant 6 : index
    %c0_70 = arith.constant 0 : index
    %86 = vector.load %arg1[%c6, %c0_70] : memref<36x64xf32, #tpu.memory_space<vmem>>, vector<1x64xf32>
    %87 = vector.shape_cast %86 : vector<1x64xf32> to vector<64xf32>
    %88 = vector.shape_cast %87 : vector<64xf32> to vector<1x64xf32>
    %89 = vector.broadcast %88 : vector<1x64xf32> to vector<16x64xf32>
    %90 = arith.mulf %89, %85 : vector<16x64xf32>
    %91 = arith.addf %82, %90 : vector<16x64xf32>
    %c0_71 = arith.constant 0 : index
    %c2_72 = arith.constant 2 : index
    %c1_73 = arith.constant 1 : index
    %92 = vector.load %arg5[%c0_71, %c2_72, %c1_73] : memref<4x18x18xf32, #tpu.memory_space<vmem>>, vector<1x16x16xf32>
    %93 = vector.shape_cast %92 : vector<1x16x16xf32> to vector<16x16xf32>
    %94 = tpu.concatenate %93, %93, %93, %93 in 1 : vector<16x16xf32>, vector<16x16xf32>, vector<16x16xf32>, vector<16x16xf32> -> vector<16x64xf32>
    %c7 = arith.constant 7 : index
    %c0_74 = arith.constant 0 : index
    %95 = vector.load %arg1[%c7, %c0_74] : memref<36x64xf32, #tpu.memory_space<vmem>>, vector<1x64xf32>
    %96 = vector.shape_cast %95 : vector<1x64xf32> to vector<64xf32>
    %97 = vector.shape_cast %96 : vector<64xf32> to vector<1x64xf32>
    %98 = vector.broadcast %97 : vector<1x64xf32> to vector<16x64xf32>
    %99 = arith.mulf %98, %94 : vector<16x64xf32>
    %100 = arith.addf %91, %99 : vector<16x64xf32>
    %c0_75 = arith.constant 0 : index
    %c2_76 = arith.constant 2 : index
    %c2_77 = arith.constant 2 : index
    %101 = vector.load %arg5[%c0_75, %c2_76, %c2_77] : memref<4x18x18xf32, #tpu.memory_space<vmem>>, vector<1x16x16xf32>
    %102 = vector.shape_cast %101 : vector<1x16x16xf32> to vector<16x16xf32>
    %103 = tpu.concatenate %102, %102, %102, %102 in 1 : vector<16x16xf32>, vector<16x16xf32>, vector<16x16xf32>, vector<16x16xf32> -> vector<16x64xf32>
    %c8 = arith.constant 8 : index
    %c0_78 = arith.constant 0 : index
    %104 = vector.load %arg1[%c8, %c0_78] : memref<36x64xf32, #tpu.memory_space<vmem>>, vector<1x64xf32>
    %105 = vector.shape_cast %104 : vector<1x64xf32> to vector<64xf32>
    %106 = vector.shape_cast %105 : vector<64xf32> to vector<1x64xf32>
    %107 = vector.broadcast %106 : vector<1x64xf32> to vector<16x64xf32>
    %108 = arith.mulf %107, %103 : vector<16x64xf32>
    %109 = arith.addf %100, %108 : vector<16x64xf32>
    %c1_79 = arith.constant 1 : index
    %c0_80 = arith.constant 0 : index
    %c0_81 = arith.constant 0 : index
    %110 = vector.load %arg5[%c1_79, %c0_80, %c0_81] : memref<4x18x18xf32, #tpu.memory_space<vmem>>, vector<1x16x16xf32>
    %111 = vector.shape_cast %110 : vector<1x16x16xf32> to vector<16x16xf32>
    %112 = tpu.concatenate %111, %111, %111, %111 in 1 : vector<16x16xf32>, vector<16x16xf32>, vector<16x16xf32>, vector<16x16xf32> -> vector<16x64xf32>
    %c9 = arith.constant 9 : index
    %c0_82 = arith.constant 0 : index
    %113 = vector.load %arg1[%c9, %c0_82] : memref<36x64xf32, #tpu.memory_space<vmem>>, vector<1x64xf32>
    %114 = vector.shape_cast %113 : vector<1x64xf32> to vector<64xf32>
    %115 = vector.shape_cast %114 : vector<64xf32> to vector<1x64xf32>
    %116 = vector.broadcast %115 : vector<1x64xf32> to vector<16x64xf32>
    %117 = arith.mulf %116, %112 : vector<16x64xf32>
    %118 = arith.addf %109, %117 : vector<16x64xf32>
    %c1_83 = arith.constant 1 : index
    %c0_84 = arith.constant 0 : index
    %c1_85 = arith.constant 1 : index
    %119 = vector.load %arg5[%c1_83, %c0_84, %c1_85] : memref<4x18x18xf32, #tpu.memory_space<vmem>>, vector<1x16x16xf32>
    %120 = vector.shape_cast %119 : vector<1x16x16xf32> to vector<16x16xf32>
    %121 = tpu.concatenate %120, %120, %120, %120 in 1 : vector<16x16xf32>, vector<16x16xf32>, vector<16x16xf32>, vector<16x16xf32> -> vector<16x64xf32>
    %c10 = arith.constant 10 : index
    %c0_86 = arith.constant 0 : index
    %122 = vector.load %arg1[%c10, %c0_86] : memref<36x64xf32, #tpu.memory_space<vmem>>, vector<1x64xf32>
    %123 = vector.shape_cast %122 : vector<1x64xf32> to vector<64xf32>
    %124 = vector.shape_cast %123 : vector<64xf32> to vector<1x64xf32>
    %125 = vector.broadcast %124 : vector<1x64xf32> to vector<16x64xf32>
    %126 = arith.mulf %125, %121 : vector<16x64xf32>
    %127 = arith.addf %118, %126 : vector<16x64xf32>
    %c1_87 = arith.constant 1 : index
    %c0_88 = arith.constant 0 : index
    %c2_89 = arith.constant 2 : index
    %128 = vector.load %arg5[%c1_87, %c0_88, %c2_89] : memref<4x18x18xf32, #tpu.memory_space<vmem>>, vector<1x16x16xf32>
    %129 = vector.shape_cast %128 : vector<1x16x16xf32> to vector<16x16xf32>
    %130 = tpu.concatenate %129, %129, %129, %129 in 1 : vector<16x16xf32>, vector<16x16xf32>, vector<16x16xf32>, vector<16x16xf32> -> vector<16x64xf32>
    %c11 = arith.constant 11 : index
    %c0_90 = arith.constant 0 : index
    %131 = vector.load %arg1[%c11, %c0_90] : memref<36x64xf32, #tpu.memory_space<vmem>>, vector<1x64xf32>
    %132 = vector.shape_cast %131 : vector<1x64xf32> to vector<64xf32>
    %133 = vector.shape_cast %132 : vector<64xf32> to vector<1x64xf32>
    %134 = vector.broadcast %133 : vector<1x64xf32> to vector<16x64xf32>
    %135 = arith.mulf %134, %130 : vector<16x64xf32>
    %136 = arith.addf %127, %135 : vector<16x64xf32>
    %c1_91 = arith.constant 1 : index
    %c1_92 = arith.constant 1 : index
    %c0_93 = arith.constant 0 : index
    %137 = vector.load %arg5[%c1_91, %c1_92, %c0_93] : memref<4x18x18xf32, #tpu.memory_space<vmem>>, vector<1x16x16xf32>
    %138 = vector.shape_cast %137 : vector<1x16x16xf32> to vector<16x16xf32>
    %139 = tpu.concatenate %138, %138, %138, %138 in 1 : vector<16x16xf32>, vector<16x16xf32>, vector<16x16xf32>, vector<16x16xf32> -> vector<16x64xf32>
    %c12 = arith.constant 12 : index
    %c0_94 = arith.constant 0 : index
    %140 = vector.load %arg1[%c12, %c0_94] : memref<36x64xf32, #tpu.memory_space<vmem>>, vector<1x64xf32>
    %141 = vector.shape_cast %140 : vector<1x64xf32> to vector<64xf32>
    %142 = vector.shape_cast %141 : vector<64xf32> to vector<1x64xf32>
    %143 = vector.broadcast %142 : vector<1x64xf32> to vector<16x64xf32>
    %144 = arith.mulf %143, %139 : vector<16x64xf32>
    %145 = arith.addf %136, %144 : vector<16x64xf32>
    %c1_95 = arith.constant 1 : index
    %c1_96 = arith.constant 1 : index
    %c1_97 = arith.constant 1 : index
    %146 = vector.load %arg5[%c1_95, %c1_96, %c1_97] : memref<4x18x18xf32, #tpu.memory_space<vmem>>, vector<1x16x16xf32>
    %147 = vector.shape_cast %146 : vector<1x16x16xf32> to vector<16x16xf32>
    %148 = tpu.concatenate %147, %147, %147, %147 in 1 : vector<16x16xf32>, vector<16x16xf32>, vector<16x16xf32>, vector<16x16xf32> -> vector<16x64xf32>
    %c13 = arith.constant 13 : index
    %c0_98 = arith.constant 0 : index
    %149 = vector.load %arg1[%c13, %c0_98] : memref<36x64xf32, #tpu.memory_space<vmem>>, vector<1x64xf32>
    %150 = vector.shape_cast %149 : vector<1x64xf32> to vector<64xf32>
    %151 = vector.shape_cast %150 : vector<64xf32> to vector<1x64xf32>
    %152 = vector.broadcast %151 : vector<1x64xf32> to vector<16x64xf32>
    %153 = arith.mulf %152, %148 : vector<16x64xf32>
    %154 = arith.addf %145, %153 : vector<16x64xf32>
    %c1_99 = arith.constant 1 : index
    %c1_100 = arith.constant 1 : index
    %c2_101 = arith.constant 2 : index
    %155 = vector.load %arg5[%c1_99, %c1_100, %c2_101] : memref<4x18x18xf32, #tpu.memory_space<vmem>>, vector<1x16x16xf32>
    %156 = vector.shape_cast %155 : vector<1x16x16xf32> to vector<16x16xf32>
    %157 = tpu.concatenate %156, %156, %156, %156 in 1 : vector<16x16xf32>, vector<16x16xf32>, vector<16x16xf32>, vector<16x16xf32> -> vector<16x64xf32>
    %c14 = arith.constant 14 : index
    %c0_102 = arith.constant 0 : index
    %158 = vector.load %arg1[%c14, %c0_102] : memref<36x64xf32, #tpu.memory_space<vmem>>, vector<1x64xf32>
    %159 = vector.shape_cast %158 : vector<1x64xf32> to vector<64xf32>
    %160 = vector.shape_cast %159 : vector<64xf32> to vector<1x64xf32>
    %161 = vector.broadcast %160 : vector<1x64xf32> to vector<16x64xf32>
    %162 = arith.mulf %161, %157 : vector<16x64xf32>
    %163 = arith.addf %154, %162 : vector<16x64xf32>
    %c1_103 = arith.constant 1 : index
    %c2_104 = arith.constant 2 : index
    %c0_105 = arith.constant 0 : index
    %164 = vector.load %arg5[%c1_103, %c2_104, %c0_105] : memref<4x18x18xf32, #tpu.memory_space<vmem>>, vector<1x16x16xf32>
    %165 = vector.shape_cast %164 : vector<1x16x16xf32> to vector<16x16xf32>
    %166 = tpu.concatenate %165, %165, %165, %165 in 1 : vector<16x16xf32>, vector<16x16xf32>, vector<16x16xf32>, vector<16x16xf32> -> vector<16x64xf32>
    %c15 = arith.constant 15 : index
    %c0_106 = arith.constant 0 : index
    %167 = vector.load %arg1[%c15, %c0_106] : memref<36x64xf32, #tpu.memory_space<vmem>>, vector<1x64xf32>
    %168 = vector.shape_cast %167 : vector<1x64xf32> to vector<64xf32>
    %169 = vector.shape_cast %168 : vector<64xf32> to vector<1x64xf32>
    %170 = vector.broadcast %169 : vector<1x64xf32> to vector<16x64xf32>
    %171 = arith.mulf %170, %166 : vector<16x64xf32>
    %172 = arith.addf %163, %171 : vector<16x64xf32>
    %c1_107 = arith.constant 1 : index
    %c2_108 = arith.constant 2 : index
    %c1_109 = arith.constant 1 : index
    %173 = vector.load %arg5[%c1_107, %c2_108, %c1_109] : memref<4x18x18xf32, #tpu.memory_space<vmem>>, vector<1x16x16xf32>
    %174 = vector.shape_cast %173 : vector<1x16x16xf32> to vector<16x16xf32>
    %175 = tpu.concatenate %174, %174, %174, %174 in 1 : vector<16x16xf32>, vector<16x16xf32>, vector<16x16xf32>, vector<16x16xf32> -> vector<16x64xf32>
    %c16 = arith.constant 16 : index
    %c0_110 = arith.constant 0 : index
    %176 = vector.load %arg1[%c16, %c0_110] : memref<36x64xf32, #tpu.memory_space<vmem>>, vector<1x64xf32>
    %177 = vector.shape_cast %176 : vector<1x64xf32> to vector<64xf32>
    %178 = vector.shape_cast %177 : vector<64xf32> to vector<1x64xf32>
    %179 = vector.broadcast %178 : vector<1x64xf32> to vector<16x64xf32>
    %180 = arith.mulf %179, %175 : vector<16x64xf32>
    %181 = arith.addf %172, %180 : vector<16x64xf32>
    %c1_111 = arith.constant 1 : index
    %c2_112 = arith.constant 2 : index
    %c2_113 = arith.constant 2 : index
    %182 = vector.load %arg5[%c1_111, %c2_112, %c2_113] : memref<4x18x18xf32, #tpu.memory_space<vmem>>, vector<1x16x16xf32>
    %183 = vector.shape_cast %182 : vector<1x16x16xf32> to vector<16x16xf32>
    %184 = tpu.concatenate %183, %183, %183, %183 in 1 : vector<16x16xf32>, vector<16x16xf32>, vector<16x16xf32>, vector<16x16xf32> -> vector<16x64xf32>
    %c17_114 = arith.constant 17 : index
    %c0_115 = arith.constant 0 : index
    %185 = vector.load %arg1[%c17_114, %c0_115] : memref<36x64xf32, #tpu.memory_space<vmem>>, vector<1x64xf32>
    %186 = vector.shape_cast %185 : vector<1x64xf32> to vector<64xf32>
    %187 = vector.shape_cast %186 : vector<64xf32> to vector<1x64xf32>
    %188 = vector.broadcast %187 : vector<1x64xf32> to vector<16x64xf32>
    %189 = arith.mulf %188, %184 : vector<16x64xf32>
    %190 = arith.addf %181, %189 : vector<16x64xf32>
    %c2_116 = arith.constant 2 : index
    %c0_117 = arith.constant 0 : index
    %c0_118 = arith.constant 0 : index
    %191 = vector.load %arg5[%c2_116, %c0_117, %c0_118] : memref<4x18x18xf32, #tpu.memory_space<vmem>>, vector<1x16x16xf32>
    %192 = vector.shape_cast %191 : vector<1x16x16xf32> to vector<16x16xf32>
    %193 = tpu.concatenate %192, %192, %192, %192 in 1 : vector<16x16xf32>, vector<16x16xf32>, vector<16x16xf32>, vector<16x16xf32> -> vector<16x64xf32>
    %c18 = arith.constant 18 : index
    %c0_119 = arith.constant 0 : index
    %194 = vector.load %arg1[%c18, %c0_119] : memref<36x64xf32, #tpu.memory_space<vmem>>, vector<1x64xf32>
    %195 = vector.shape_cast %194 : vector<1x64xf32> to vector<64xf32>
    %196 = vector.shape_cast %195 : vector<64xf32> to vector<1x64xf32>
    %197 = vector.broadcast %196 : vector<1x64xf32> to vector<16x64xf32>
    %198 = arith.mulf %197, %193 : vector<16x64xf32>
    %199 = arith.addf %190, %198 : vector<16x64xf32>
    %c2_120 = arith.constant 2 : index
    %c0_121 = arith.constant 0 : index
    %c1_122 = arith.constant 1 : index
    %200 = vector.load %arg5[%c2_120, %c0_121, %c1_122] : memref<4x18x18xf32, #tpu.memory_space<vmem>>, vector<1x16x16xf32>
    %201 = vector.shape_cast %200 : vector<1x16x16xf32> to vector<16x16xf32>
    %202 = tpu.concatenate %201, %201, %201, %201 in 1 : vector<16x16xf32>, vector<16x16xf32>, vector<16x16xf32>, vector<16x16xf32> -> vector<16x64xf32>
    %c19 = arith.constant 19 : index
    %c0_123 = arith.constant 0 : index
    %203 = vector.load %arg1[%c19, %c0_123] : memref<36x64xf32, #tpu.memory_space<vmem>>, vector<1x64xf32>
    %204 = vector.shape_cast %203 : vector<1x64xf32> to vector<64xf32>
    %205 = vector.shape_cast %204 : vector<64xf32> to vector<1x64xf32>
    %206 = vector.broadcast %205 : vector<1x64xf32> to vector<16x64xf32>
    %207 = arith.mulf %206, %202 : vector<16x64xf32>
    %208 = arith.addf %199, %207 : vector<16x64xf32>
    %c2_124 = arith.constant 2 : index
    %c0_125 = arith.constant 0 : index
    %c2_126 = arith.constant 2 : index
    %209 = vector.load %arg5[%c2_124, %c0_125, %c2_126] : memref<4x18x18xf32, #tpu.memory_space<vmem>>, vector<1x16x16xf32>
    %210 = vector.shape_cast %209 : vector<1x16x16xf32> to vector<16x16xf32>
    %211 = tpu.concatenate %210, %210, %210, %210 in 1 : vector<16x16xf32>, vector<16x16xf32>, vector<16x16xf32>, vector<16x16xf32> -> vector<16x64xf32>
    %c20 = arith.constant 20 : index
    %c0_127 = arith.constant 0 : index
    %212 = vector.load %arg1[%c20, %c0_127] : memref<36x64xf32, #tpu.memory_space<vmem>>, vector<1x64xf32>
    %213 = vector.shape_cast %212 : vector<1x64xf32> to vector<64xf32>
    %214 = vector.shape_cast %213 : vector<64xf32> to vector<1x64xf32>
    %215 = vector.broadcast %214 : vector<1x64xf32> to vector<16x64xf32>
    %216 = arith.mulf %215, %211 : vector<16x64xf32>
    %217 = arith.addf %208, %216 : vector<16x64xf32>
    %c2_128 = arith.constant 2 : index
    %c1_129 = arith.constant 1 : index
    %c0_130 = arith.constant 0 : index
    %218 = vector.load %arg5[%c2_128, %c1_129, %c0_130] : memref<4x18x18xf32, #tpu.memory_space<vmem>>, vector<1x16x16xf32>
    %219 = vector.shape_cast %218 : vector<1x16x16xf32> to vector<16x16xf32>
    %220 = tpu.concatenate %219, %219, %219, %219 in 1 : vector<16x16xf32>, vector<16x16xf32>, vector<16x16xf32>, vector<16x16xf32> -> vector<16x64xf32>
    %c21 = arith.constant 21 : index
    %c0_131 = arith.constant 0 : index
    %221 = vector.load %arg1[%c21, %c0_131] : memref<36x64xf32, #tpu.memory_space<vmem>>, vector<1x64xf32>
    %222 = vector.shape_cast %221 : vector<1x64xf32> to vector<64xf32>
    %223 = vector.shape_cast %222 : vector<64xf32> to vector<1x64xf32>
    %224 = vector.broadcast %223 : vector<1x64xf32> to vector<16x64xf32>
    %225 = arith.mulf %224, %220 : vector<16x64xf32>
    %226 = arith.addf %217, %225 : vector<16x64xf32>
    %c2_132 = arith.constant 2 : index
    %c1_133 = arith.constant 1 : index
    %c1_134 = arith.constant 1 : index
    %227 = vector.load %arg5[%c2_132, %c1_133, %c1_134] : memref<4x18x18xf32, #tpu.memory_space<vmem>>, vector<1x16x16xf32>
    %228 = vector.shape_cast %227 : vector<1x16x16xf32> to vector<16x16xf32>
    %229 = tpu.concatenate %228, %228, %228, %228 in 1 : vector<16x16xf32>, vector<16x16xf32>, vector<16x16xf32>, vector<16x16xf32> -> vector<16x64xf32>
    %c22 = arith.constant 22 : index
    %c0_135 = arith.constant 0 : index
    %230 = vector.load %arg1[%c22, %c0_135] : memref<36x64xf32, #tpu.memory_space<vmem>>, vector<1x64xf32>
    %231 = vector.shape_cast %230 : vector<1x64xf32> to vector<64xf32>
    %232 = vector.shape_cast %231 : vector<64xf32> to vector<1x64xf32>
    %233 = vector.broadcast %232 : vector<1x64xf32> to vector<16x64xf32>
    %234 = arith.mulf %233, %229 : vector<16x64xf32>
    %235 = arith.addf %226, %234 : vector<16x64xf32>
    %c2_136 = arith.constant 2 : index
    %c1_137 = arith.constant 1 : index
    %c2_138 = arith.constant 2 : index
    %236 = vector.load %arg5[%c2_136, %c1_137, %c2_138] : memref<4x18x18xf32, #tpu.memory_space<vmem>>, vector<1x16x16xf32>
    %237 = vector.shape_cast %236 : vector<1x16x16xf32> to vector<16x16xf32>
    %238 = tpu.concatenate %237, %237, %237, %237 in 1 : vector<16x16xf32>, vector<16x16xf32>, vector<16x16xf32>, vector<16x16xf32> -> vector<16x64xf32>
    %c23 = arith.constant 23 : index
    %c0_139 = arith.constant 0 : index
    %239 = vector.load %arg1[%c23, %c0_139] : memref<36x64xf32, #tpu.memory_space<vmem>>, vector<1x64xf32>
    %240 = vector.shape_cast %239 : vector<1x64xf32> to vector<64xf32>
    %241 = vector.shape_cast %240 : vector<64xf32> to vector<1x64xf32>
    %242 = vector.broadcast %241 : vector<1x64xf32> to vector<16x64xf32>
    %243 = arith.mulf %242, %238 : vector<16x64xf32>
    %244 = arith.addf %235, %243 : vector<16x64xf32>
    %c2_140 = arith.constant 2 : index
    %c2_141 = arith.constant 2 : index
    %c0_142 = arith.constant 0 : index
    %245 = vector.load %arg5[%c2_140, %c2_141, %c0_142] : memref<4x18x18xf32, #tpu.memory_space<vmem>>, vector<1x16x16xf32>
    %246 = vector.shape_cast %245 : vector<1x16x16xf32> to vector<16x16xf32>
    %247 = tpu.concatenate %246, %246, %246, %246 in 1 : vector<16x16xf32>, vector<16x16xf32>, vector<16x16xf32>, vector<16x16xf32> -> vector<16x64xf32>
    %c24 = arith.constant 24 : index
    %c0_143 = arith.constant 0 : index
    %248 = vector.load %arg1[%c24, %c0_143] : memref<36x64xf32, #tpu.memory_space<vmem>>, vector<1x64xf32>
    %249 = vector.shape_cast %248 : vector<1x64xf32> to vector<64xf32>
    %250 = vector.shape_cast %249 : vector<64xf32> to vector<1x64xf32>
    %251 = vector.broadcast %250 : vector<1x64xf32> to vector<16x64xf32>
    %252 = arith.mulf %251, %247 : vector<16x64xf32>
    %253 = arith.addf %244, %252 : vector<16x64xf32>
    %c2_144 = arith.constant 2 : index
    %c2_145 = arith.constant 2 : index
    %c1_146 = arith.constant 1 : index
    %254 = vector.load %arg5[%c2_144, %c2_145, %c1_146] : memref<4x18x18xf32, #tpu.memory_space<vmem>>, vector<1x16x16xf32>
    %255 = vector.shape_cast %254 : vector<1x16x16xf32> to vector<16x16xf32>
    %256 = tpu.concatenate %255, %255, %255, %255 in 1 : vector<16x16xf32>, vector<16x16xf32>, vector<16x16xf32>, vector<16x16xf32> -> vector<16x64xf32>
    %c25 = arith.constant 25 : index
    %c0_147 = arith.constant 0 : index
    %257 = vector.load %arg1[%c25, %c0_147] : memref<36x64xf32, #tpu.memory_space<vmem>>, vector<1x64xf32>
    %258 = vector.shape_cast %257 : vector<1x64xf32> to vector<64xf32>
    %259 = vector.shape_cast %258 : vector<64xf32> to vector<1x64xf32>
    %260 = vector.broadcast %259 : vector<1x64xf32> to vector<16x64xf32>
    %261 = arith.mulf %260, %256 : vector<16x64xf32>
    %262 = arith.addf %253, %261 : vector<16x64xf32>
    %c2_148 = arith.constant 2 : index
    %c2_149 = arith.constant 2 : index
    %c2_150 = arith.constant 2 : index
    %263 = vector.load %arg5[%c2_148, %c2_149, %c2_150] : memref<4x18x18xf32, #tpu.memory_space<vmem>>, vector<1x16x16xf32>
    %264 = vector.shape_cast %263 : vector<1x16x16xf32> to vector<16x16xf32>
    %265 = tpu.concatenate %264, %264, %264, %264 in 1 : vector<16x16xf32>, vector<16x16xf32>, vector<16x16xf32>, vector<16x16xf32> -> vector<16x64xf32>
    %c26 = arith.constant 26 : index
    %c0_151 = arith.constant 0 : index
    %266 = vector.load %arg1[%c26, %c0_151] : memref<36x64xf32, #tpu.memory_space<vmem>>, vector<1x64xf32>
    %267 = vector.shape_cast %266 : vector<1x64xf32> to vector<64xf32>
    %268 = vector.shape_cast %267 : vector<64xf32> to vector<1x64xf32>
    %269 = vector.broadcast %268 : vector<1x64xf32> to vector<16x64xf32>
    %270 = arith.mulf %269, %265 : vector<16x64xf32>
    %271 = arith.addf %262, %270 : vector<16x64xf32>
    %c3_152 = arith.constant 3 : index
    %c0_153 = arith.constant 0 : index
    %c0_154 = arith.constant 0 : index
    %272 = vector.load %arg5[%c3_152, %c0_153, %c0_154] : memref<4x18x18xf32, #tpu.memory_space<vmem>>, vector<1x16x16xf32>
    %273 = vector.shape_cast %272 : vector<1x16x16xf32> to vector<16x16xf32>
    %274 = tpu.concatenate %273, %273, %273, %273 in 1 : vector<16x16xf32>, vector<16x16xf32>, vector<16x16xf32>, vector<16x16xf32> -> vector<16x64xf32>
    %c27 = arith.constant 27 : index
    %c0_155 = arith.constant 0 : index
    %275 = vector.load %arg1[%c27, %c0_155] : memref<36x64xf32, #tpu.memory_space<vmem>>, vector<1x64xf32>
    %276 = vector.shape_cast %275 : vector<1x64xf32> to vector<64xf32>
    %277 = vector.shape_cast %276 : vector<64xf32> to vector<1x64xf32>
    %278 = vector.broadcast %277 : vector<1x64xf32> to vector<16x64xf32>
    %279 = arith.mulf %278, %274 : vector<16x64xf32>
    %280 = arith.addf %271, %279 : vector<16x64xf32>
    %c3_156 = arith.constant 3 : index
    %c0_157 = arith.constant 0 : index
    %c1_158 = arith.constant 1 : index
    %281 = vector.load %arg5[%c3_156, %c0_157, %c1_158] : memref<4x18x18xf32, #tpu.memory_space<vmem>>, vector<1x16x16xf32>
    %282 = vector.shape_cast %281 : vector<1x16x16xf32> to vector<16x16xf32>
    %283 = tpu.concatenate %282, %282, %282, %282 in 1 : vector<16x16xf32>, vector<16x16xf32>, vector<16x16xf32>, vector<16x16xf32> -> vector<16x64xf32>
    %c28 = arith.constant 28 : index
    %c0_159 = arith.constant 0 : index
    %284 = vector.load %arg1[%c28, %c0_159] : memref<36x64xf32, #tpu.memory_space<vmem>>, vector<1x64xf32>
    %285 = vector.shape_cast %284 : vector<1x64xf32> to vector<64xf32>
    %286 = vector.shape_cast %285 : vector<64xf32> to vector<1x64xf32>
    %287 = vector.broadcast %286 : vector<1x64xf32> to vector<16x64xf32>
    %288 = arith.mulf %287, %283 : vector<16x64xf32>
    %289 = arith.addf %280, %288 : vector<16x64xf32>
    %c3_160 = arith.constant 3 : index
    %c0_161 = arith.constant 0 : index
    %c2_162 = arith.constant 2 : index
    %290 = vector.load %arg5[%c3_160, %c0_161, %c2_162] : memref<4x18x18xf32, #tpu.memory_space<vmem>>, vector<1x16x16xf32>
    %291 = vector.shape_cast %290 : vector<1x16x16xf32> to vector<16x16xf32>
    %292 = tpu.concatenate %291, %291, %291, %291 in 1 : vector<16x16xf32>, vector<16x16xf32>, vector<16x16xf32>, vector<16x16xf32> -> vector<16x64xf32>
    %c29 = arith.constant 29 : index
    %c0_163 = arith.constant 0 : index
    %293 = vector.load %arg1[%c29, %c0_163] : memref<36x64xf32, #tpu.memory_space<vmem>>, vector<1x64xf32>
    %294 = vector.shape_cast %293 : vector<1x64xf32> to vector<64xf32>
    %295 = vector.shape_cast %294 : vector<64xf32> to vector<1x64xf32>
    %296 = vector.broadcast %295 : vector<1x64xf32> to vector<16x64xf32>
    %297 = arith.mulf %296, %292 : vector<16x64xf32>
    %298 = arith.addf %289, %297 : vector<16x64xf32>
    %c3_164 = arith.constant 3 : index
    %c1_165 = arith.constant 1 : index
    %c0_166 = arith.constant 0 : index
    %299 = vector.load %arg5[%c3_164, %c1_165, %c0_166] : memref<4x18x18xf32, #tpu.memory_space<vmem>>, vector<1x16x16xf32>
    %300 = vector.shape_cast %299 : vector<1x16x16xf32> to vector<16x16xf32>
    %301 = tpu.concatenate %300, %300, %300, %300 in 1 : vector<16x16xf32>, vector<16x16xf32>, vector<16x16xf32>, vector<16x16xf32> -> vector<16x64xf32>
    %c30 = arith.constant 30 : index
    %c0_167 = arith.constant 0 : index
    %302 = vector.load %arg1[%c30, %c0_167] : memref<36x64xf32, #tpu.memory_space<vmem>>, vector<1x64xf32>
    %303 = vector.shape_cast %302 : vector<1x64xf32> to vector<64xf32>
    %304 = vector.shape_cast %303 : vector<64xf32> to vector<1x64xf32>
    %305 = vector.broadcast %304 : vector<1x64xf32> to vector<16x64xf32>
    %306 = arith.mulf %305, %301 : vector<16x64xf32>
    %307 = arith.addf %298, %306 : vector<16x64xf32>
    %c3_168 = arith.constant 3 : index
    %c1_169 = arith.constant 1 : index
    %c1_170 = arith.constant 1 : index
    %308 = vector.load %arg5[%c3_168, %c1_169, %c1_170] : memref<4x18x18xf32, #tpu.memory_space<vmem>>, vector<1x16x16xf32>
    %309 = vector.shape_cast %308 : vector<1x16x16xf32> to vector<16x16xf32>
    %310 = tpu.concatenate %309, %309, %309, %309 in 1 : vector<16x16xf32>, vector<16x16xf32>, vector<16x16xf32>, vector<16x16xf32> -> vector<16x64xf32>
    %c31 = arith.constant 31 : index
    %c0_171 = arith.constant 0 : index
    %311 = vector.load %arg1[%c31, %c0_171] : memref<36x64xf32, #tpu.memory_space<vmem>>, vector<1x64xf32>
    %312 = vector.shape_cast %311 : vector<1x64xf32> to vector<64xf32>
    %313 = vector.shape_cast %312 : vector<64xf32> to vector<1x64xf32>
    %314 = vector.broadcast %313 : vector<1x64xf32> to vector<16x64xf32>
    %315 = arith.mulf %314, %310 : vector<16x64xf32>
    %316 = arith.addf %307, %315 : vector<16x64xf32>
    %c3_172 = arith.constant 3 : index
    %c1_173 = arith.constant 1 : index
    %c2_174 = arith.constant 2 : index
    %317 = vector.load %arg5[%c3_172, %c1_173, %c2_174] : memref<4x18x18xf32, #tpu.memory_space<vmem>>, vector<1x16x16xf32>
    %318 = vector.shape_cast %317 : vector<1x16x16xf32> to vector<16x16xf32>
    %319 = tpu.concatenate %318, %318, %318, %318 in 1 : vector<16x16xf32>, vector<16x16xf32>, vector<16x16xf32>, vector<16x16xf32> -> vector<16x64xf32>
    %c32 = arith.constant 32 : index
    %c0_175 = arith.constant 0 : index
    %320 = vector.load %arg1[%c32, %c0_175] : memref<36x64xf32, #tpu.memory_space<vmem>>, vector<1x64xf32>
    %321 = vector.shape_cast %320 : vector<1x64xf32> to vector<64xf32>
    %322 = vector.shape_cast %321 : vector<64xf32> to vector<1x64xf32>
    %323 = vector.broadcast %322 : vector<1x64xf32> to vector<16x64xf32>
    %324 = arith.mulf %323, %319 : vector<16x64xf32>
    %325 = arith.addf %316, %324 : vector<16x64xf32>
    %c3_176 = arith.constant 3 : index
    %c2_177 = arith.constant 2 : index
    %c0_178 = arith.constant 0 : index
    %326 = vector.load %arg5[%c3_176, %c2_177, %c0_178] : memref<4x18x18xf32, #tpu.memory_space<vmem>>, vector<1x16x16xf32>
    %327 = vector.shape_cast %326 : vector<1x16x16xf32> to vector<16x16xf32>
    %328 = tpu.concatenate %327, %327, %327, %327 in 1 : vector<16x16xf32>, vector<16x16xf32>, vector<16x16xf32>, vector<16x16xf32> -> vector<16x64xf32>
    %c33 = arith.constant 33 : index
    %c0_179 = arith.constant 0 : index
    %329 = vector.load %arg1[%c33, %c0_179] : memref<36x64xf32, #tpu.memory_space<vmem>>, vector<1x64xf32>
    %330 = vector.shape_cast %329 : vector<1x64xf32> to vector<64xf32>
    %331 = vector.shape_cast %330 : vector<64xf32> to vector<1x64xf32>
    %332 = vector.broadcast %331 : vector<1x64xf32> to vector<16x64xf32>
    %333 = arith.mulf %332, %328 : vector<16x64xf32>
    %334 = arith.addf %325, %333 : vector<16x64xf32>
    %c3_180 = arith.constant 3 : index
    %c2_181 = arith.constant 2 : index
    %c1_182 = arith.constant 1 : index
    %335 = vector.load %arg5[%c3_180, %c2_181, %c1_182] : memref<4x18x18xf32, #tpu.memory_space<vmem>>, vector<1x16x16xf32>
    %336 = vector.shape_cast %335 : vector<1x16x16xf32> to vector<16x16xf32>
    %337 = tpu.concatenate %336, %336, %336, %336 in 1 : vector<16x16xf32>, vector<16x16xf32>, vector<16x16xf32>, vector<16x16xf32> -> vector<16x64xf32>
    %c34 = arith.constant 34 : index
    %c0_183 = arith.constant 0 : index
    %338 = vector.load %arg1[%c34, %c0_183] : memref<36x64xf32, #tpu.memory_space<vmem>>, vector<1x64xf32>
    %339 = vector.shape_cast %338 : vector<1x64xf32> to vector<64xf32>
    %340 = vector.shape_cast %339 : vector<64xf32> to vector<1x64xf32>
    %341 = vector.broadcast %340 : vector<1x64xf32> to vector<16x64xf32>
    %342 = arith.mulf %341, %337 : vector<16x64xf32>
    %343 = arith.addf %334, %342 : vector<16x64xf32>
    %c3_184 = arith.constant 3 : index
    %c2_185 = arith.constant 2 : index
    %c2_186 = arith.constant 2 : index
    %344 = vector.load %arg5[%c3_184, %c2_185, %c2_186] : memref<4x18x18xf32, #tpu.memory_space<vmem>>, vector<1x16x16xf32>
    %345 = vector.shape_cast %344 : vector<1x16x16xf32> to vector<16x16xf32>
    %346 = tpu.concatenate %345, %345, %345, %345 in 1 : vector<16x16xf32>, vector<16x16xf32>, vector<16x16xf32>, vector<16x16xf32> -> vector<16x64xf32>
    %c35 = arith.constant 35 : index
    %c0_187 = arith.constant 0 : index
    %347 = vector.load %arg1[%c35, %c0_187] : memref<36x64xf32, #tpu.memory_space<vmem>>, vector<1x64xf32>
    %348 = vector.shape_cast %347 : vector<1x64xf32> to vector<64xf32>
    %349 = vector.shape_cast %348 : vector<64xf32> to vector<1x64xf32>
    %350 = vector.broadcast %349 : vector<1x64xf32> to vector<16x64xf32>
    %351 = arith.mulf %350, %346 : vector<16x64xf32>
    %352 = arith.addf %343, %351 : vector<16x64xf32>
    %c0_188 = arith.constant 0 : index
    %c0_189 = arith.constant 0 : index
    %c0_190 = arith.constant 0 : index
    %353 = vector.load %arg3[%c0_188, %c0_189, %c0_190] : memref<1x16x64xf32, #tpu.memory_space<vmem>>, vector<1x16x64xf32>
    %354 = vector.shape_cast %353 : vector<1x16x64xf32> to vector<16x64xf32>
    %355 = vector.shape_cast %352 : vector<16x64xf32> to vector<1x16x64xf32>
    tpu.vector_store %arg3[%c0_188, %c0_189, %c0_190], %355 {strides = array<i32>} : memref<1x16x64xf32, #tpu.memory_space<vmem>>, vector<1x16x64xf32>,
    %356 = vector.extract_strided_slice %352 {offsets = [0, 0], sizes = [16, 16], strides = [1, 1]} : vector<16x64xf32> to vector<16x16xf32>
    %357 = vector.shape_cast %356 : vector<16x16xf32> to vector<1x16x16xf32>
    %cst_191 = arith.constant dense<0.000000e+00> : vector<1xf32>
    %358 = vector.multi_reduction <add>, %357, %cst_191 [1, 2] : vector<1x16x16xf32> to vector<1xf32>
    %359 = vector.shape_cast %358 : vector<1xf32> to vector<1x1x1xf32>
    %360 = vector.extract %359[0, 0, 0] : f32 from vector<1x1x1xf32>
    %361 = vector.broadcast %360 : f32 to vector<1x1xf32>
    %c0_192 = arith.constant 0 : index
    %c0_193 = arith.constant 0 : index
    %c0_194 = arith.constant 0 : index
    %362 = vector.load %arg4[%c0_192, %c0_193, %c0_194] : memref<1x2x4xf32, #tpu.memory_space<vmem>>, vector<1x1x1xf32>
    %363 = vector.shape_cast %362 : vector<1x1x1xf32> to vector<1x1xf32>
    %364 = vector.shape_cast %361 : vector<1x1xf32> to vector<1x1x1xf32>
    tpu.vector_store %arg4[%c0_192, %c0_193, %c0_194], %364 {strides = array<i32>} : memref<1x2x4xf32, #tpu.memory_space<vmem>>, vector<1x1x1xf32>,
    %365 = arith.mulf %356, %356 : vector<16x16xf32>
    %366 = vector.shape_cast %365 : vector<16x16xf32> to vector<1x16x16xf32>
    %cst_195 = arith.constant dense<0.000000e+00> : vector<1xf32>
    %367 = vector.multi_reduction <add>, %366, %cst_195 [1, 2] : vector<1x16x16xf32> to vector<1xf32>
    %368 = vector.shape_cast %367 : vector<1xf32> to vector<1x1x1xf32>
    %369 = vector.extract %368[0, 0, 0] : f32 from vector<1x1x1xf32>
    %370 = vector.broadcast %369 : f32 to vector<1x1xf32>
    %c0_196 = arith.constant 0 : index
    %c1_197 = arith.constant 1 : index
    %c0_198 = arith.constant 0 : index
    %371 = vector.load %arg4[%c0_196, %c1_197, %c0_198] : memref<1x2x4xf32, #tpu.memory_space<vmem>>, vector<1x1x1xf32>
    %372 = vector.shape_cast %371 : vector<1x1x1xf32> to vector<1x1xf32>
    %373 = vector.shape_cast %370 : vector<1x1xf32> to vector<1x1x1xf32>
    tpu.vector_store %arg4[%c0_196, %c1_197, %c0_198], %373 {strides = array<i32>} : memref<1x2x4xf32, #tpu.memory_space<vmem>>, vector<1x1x1xf32>,
    %374 = vector.extract_strided_slice %352 {offsets = [0, 16], sizes = [16, 16], strides = [1, 1]} : vector<16x64xf32> to vector<16x16xf32>
    %375 = vector.shape_cast %374 : vector<16x16xf32> to vector<1x16x16xf32>
    %cst_199 = arith.constant dense<0.000000e+00> : vector<1xf32>
    %376 = vector.multi_reduction <add>, %375, %cst_199 [1, 2] : vector<1x16x16xf32> to vector<1xf32>
    %377 = vector.shape_cast %376 : vector<1xf32> to vector<1x1x1xf32>
    %378 = vector.extract %377[0, 0, 0] : f32 from vector<1x1x1xf32>
    %379 = vector.broadcast %378 : f32 to vector<1x1xf32>
    %c0_200 = arith.constant 0 : index
    %c0_201 = arith.constant 0 : index
    %c1_202 = arith.constant 1 : index
    %380 = vector.load %arg4[%c0_200, %c0_201, %c1_202] : memref<1x2x4xf32, #tpu.memory_space<vmem>>, vector<1x1x1xf32>
    %381 = vector.shape_cast %380 : vector<1x1x1xf32> to vector<1x1xf32>
    %382 = vector.shape_cast %379 : vector<1x1xf32> to vector<1x1x1xf32>
    tpu.vector_store %arg4[%c0_200, %c0_201, %c1_202], %382 {strides = array<i32>} : memref<1x2x4xf32, #tpu.memory_space<vmem>>, vector<1x1x1xf32>,
    %383 = arith.mulf %374, %374 : vector<16x16xf32>
    %384 = vector.shape_cast %383 : vector<16x16xf32> to vector<1x16x16xf32>
    %cst_203 = arith.constant dense<0.000000e+00> : vector<1xf32>
    %385 = vector.multi_reduction <add>, %384, %cst_203 [1, 2] : vector<1x16x16xf32> to vector<1xf32>
    %386 = vector.shape_cast %385 : vector<1xf32> to vector<1x1x1xf32>
    %387 = vector.extract %386[0, 0, 0] : f32 from vector<1x1x1xf32>
    %388 = vector.broadcast %387 : f32 to vector<1x1xf32>
    %c0_204 = arith.constant 0 : index
    %c1_205 = arith.constant 1 : index
    %c1_206 = arith.constant 1 : index
    %389 = vector.load %arg4[%c0_204, %c1_205, %c1_206] : memref<1x2x4xf32, #tpu.memory_space<vmem>>, vector<1x1x1xf32>
    %390 = vector.shape_cast %389 : vector<1x1x1xf32> to vector<1x1xf32>
    %391 = vector.shape_cast %388 : vector<1x1xf32> to vector<1x1x1xf32>
    tpu.vector_store %arg4[%c0_204, %c1_205, %c1_206], %391 {strides = array<i32>} : memref<1x2x4xf32, #tpu.memory_space<vmem>>, vector<1x1x1xf32>,
    %392 = vector.extract_strided_slice %352 {offsets = [0, 32], sizes = [16, 16], strides = [1, 1]} : vector<16x64xf32> to vector<16x16xf32>
    %393 = vector.shape_cast %392 : vector<16x16xf32> to vector<1x16x16xf32>
    %cst_207 = arith.constant dense<0.000000e+00> : vector<1xf32>
    %394 = vector.multi_reduction <add>, %393, %cst_207 [1, 2] : vector<1x16x16xf32> to vector<1xf32>
    %395 = vector.shape_cast %394 : vector<1xf32> to vector<1x1x1xf32>
    %396 = vector.extract %395[0, 0, 0] : f32 from vector<1x1x1xf32>
    %397 = vector.broadcast %396 : f32 to vector<1x1xf32>
    %c0_208 = arith.constant 0 : index
    %c0_209 = arith.constant 0 : index
    %c2_210 = arith.constant 2 : index
    %398 = vector.load %arg4[%c0_208, %c0_209, %c2_210] : memref<1x2x4xf32, #tpu.memory_space<vmem>>, vector<1x1x1xf32>
    %399 = vector.shape_cast %398 : vector<1x1x1xf32> to vector<1x1xf32>
    %400 = vector.shape_cast %397 : vector<1x1xf32> to vector<1x1x1xf32>
    tpu.vector_store %arg4[%c0_208, %c0_209, %c2_210], %400 {strides = array<i32>} : memref<1x2x4xf32, #tpu.memory_space<vmem>>, vector<1x1x1xf32>,
    %401 = arith.mulf %392, %392 : vector<16x16xf32>
    %402 = vector.shape_cast %401 : vector<16x16xf32> to vector<1x16x16xf32>
    %cst_211 = arith.constant dense<0.000000e+00> : vector<1xf32>
    %403 = vector.multi_reduction <add>, %402, %cst_211 [1, 2] : vector<1x16x16xf32> to vector<1xf32>
    %404 = vector.shape_cast %403 : vector<1xf32> to vector<1x1x1xf32>
    %405 = vector.extract %404[0, 0, 0] : f32 from vector<1x1x1xf32>
    %406 = vector.broadcast %405 : f32 to vector<1x1xf32>
    %c0_212 = arith.constant 0 : index
    %c1_213 = arith.constant 1 : index
    %c2_214 = arith.constant 2 : index
    %407 = vector.load %arg4[%c0_212, %c1_213, %c2_214] : memref<1x2x4xf32, #tpu.memory_space<vmem>>, vector<1x1x1xf32>
    %408 = vector.shape_cast %407 : vector<1x1x1xf32> to vector<1x1xf32>
    %409 = vector.shape_cast %406 : vector<1x1xf32> to vector<1x1x1xf32>
    tpu.vector_store %arg4[%c0_212, %c1_213, %c2_214], %409 {strides = array<i32>} : memref<1x2x4xf32, #tpu.memory_space<vmem>>, vector<1x1x1xf32>,
    %410 = vector.extract_strided_slice %352 {offsets = [0, 48], sizes = [16, 16], strides = [1, 1]} : vector<16x64xf32> to vector<16x16xf32>
    %411 = vector.shape_cast %410 : vector<16x16xf32> to vector<1x16x16xf32>
    %cst_215 = arith.constant dense<0.000000e+00> : vector<1xf32>
    %412 = vector.multi_reduction <add>, %411, %cst_215 [1, 2] : vector<1x16x16xf32> to vector<1xf32>
    %413 = vector.shape_cast %412 : vector<1xf32> to vector<1x1x1xf32>
    %414 = vector.extract %413[0, 0, 0] : f32 from vector<1x1x1xf32>
    %415 = vector.broadcast %414 : f32 to vector<1x1xf32>
    %c0_216 = arith.constant 0 : index
    %c0_217 = arith.constant 0 : index
    %c3_218 = arith.constant 3 : index
    %416 = vector.load %arg4[%c0_216, %c0_217, %c3_218] : memref<1x2x4xf32, #tpu.memory_space<vmem>>, vector<1x1x1xf32>
    %417 = vector.shape_cast %416 : vector<1x1x1xf32> to vector<1x1xf32>
    %418 = vector.shape_cast %415 : vector<1x1xf32> to vector<1x1x1xf32>
    tpu.vector_store %arg4[%c0_216, %c0_217, %c3_218], %418 {strides = array<i32>} : memref<1x2x4xf32, #tpu.memory_space<vmem>>, vector<1x1x1xf32>,
    %419 = arith.mulf %410, %410 : vector<16x16xf32>
    %420 = vector.shape_cast %419 : vector<16x16xf32> to vector<1x16x16xf32>
    %cst_219 = arith.constant dense<0.000000e+00> : vector<1xf32>
    %421 = vector.multi_reduction <add>, %420, %cst_219 [1, 2] : vector<1x16x16xf32> to vector<1xf32>
    %422 = vector.shape_cast %421 : vector<1xf32> to vector<1x1x1xf32>
    %423 = vector.extract %422[0, 0, 0] : f32 from vector<1x1x1xf32>
    %424 = vector.broadcast %423 : f32 to vector<1x1xf32>
    %c0_220 = arith.constant 0 : index
    %c1_221 = arith.constant 1 : index
    %c3_222 = arith.constant 3 : index
    %425 = vector.load %arg4[%c0_220, %c1_221, %c3_222] : memref<1x2x4xf32, #tpu.memory_space<vmem>>, vector<1x1x1xf32>
    %426 = vector.shape_cast %425 : vector<1x1x1xf32> to vector<1x1xf32>
    %427 = vector.shape_cast %424 : vector<1x1xf32> to vector<1x1x1xf32>
    tpu.vector_store %arg4[%c0_220, %c1_221, %c3_222], %427 {strides = array<i32>} : memref<1x2x4xf32, #tpu.memory_space<vmem>>, vector<1x1x1xf32>,
    return
  }
  func.func @transform_0(%arg0: i32) -> (i32, i32) {
    %c0_i32 = arith.constant 0 : i32
    %c0_i32_0 = arith.constant 0 : i32
    %c0_i32_1 = arith.constant 0 : i32
    return %c0_i32, %c0_i32_0 : i32, i32
  }
  func.func @transform_1(%arg0: i32) -> (i32, i32, i32, i32) {
    %c0_i32 = arith.constant 0 : i32
    %c0_i32_0 = arith.constant 0 : i32
    %c0_i32_1 = arith.constant 0 : i32
    %c0_i32_2 = arith.constant 0 : i32
    return %arg0, %c0_i32, %c0_i32_0, %c0_i32_1 : i32, i32, i32, i32
  }
  func.func @transform_2(%arg0: i32) -> (i32, i32, i32) {
    %c0_i32 = arith.constant 0 : i32
    %c0_i32_0 = arith.constant 0 : i32
    %c0_i32_1 = arith.constant 0 : i32
    return %arg0, %c0_i32, %c0_i32_0 : i32, i32, i32
  }
  func.func @transform_3(%arg0: i32) -> (i32, i32, i32) {
    %c0_i32 = arith.constant 0 : i32
    %c0_i32_0 = arith.constant 0 : i32
    %c0_i32_1 = arith.constant 0 : i32
    return %arg0, %c0_i32, %c0_i32_0 : i32, i32, i32
  }
}

module attributes {stable_mosaic.version = 11 : i64} {
  func.func @_pass2_bn_conv2_kernel(%arg0: i32, %arg1: memref<16xf32, #tpu.memory_space<smem>>, %arg2: memref<45xf32, #tpu.memory_space<smem>>, %arg3: memref<1x16x64xf32, #tpu.memory_space<vmem>>, %arg4: memref<1x16x16xf32, #tpu.memory_space<vmem>>, %arg5: memref<4x18x18xf32, #tpu.memory_space<vmem>>) attributes {dimension_semantics = [#tpu.dimension_semantics<parallel>], iteration_bounds = array<i64: 2>, scalar_prefetch = 0 : i64, scratch_operands = 1 : i64, tpu.core_type = #tpu.core_type<tc>, window_params = [{transform_indices = @transform_0, window_bounds = array<i64: 16>}, {transform_indices = @transform_1, window_bounds = array<i64: 45>}, {transform_indices = @transform_2, window_bounds = array<i64: 1, 16, 64>}, {transform_indices = @transform_3, window_bounds = array<i64: 1, 16, 16>}]} {
    %cst = arith.constant 0.000000e+00 : f32
    %0 = vector.broadcast %cst : f32 to vector<4x1x18xf32>
    %c0 = arith.constant 0 : index
    %c0_0 = arith.constant 0 : index
    %c0_1 = arith.constant 0 : index
    %1 = vector.load %arg5[%c0, %c0_0, %c0_1] : memref<4x18x18xf32, #tpu.memory_space<vmem>>, vector<4x1x18xf32>
    tpu.vector_store %arg5[%c0, %c0_0, %c0_1], %0 {strides = array<i32>} : memref<4x18x18xf32, #tpu.memory_space<vmem>>, vector<4x1x18xf32>,
    %cst_2 = arith.constant 0.000000e+00 : f32
    %2 = vector.broadcast %cst_2 : f32 to vector<4x1x18xf32>
    %c0_3 = arith.constant 0 : index
    %c17 = arith.constant 17 : index
    %c0_4 = arith.constant 0 : index
    %3 = vector.load %arg5[%c0_3, %c17, %c0_4] : memref<4x18x18xf32, #tpu.memory_space<vmem>>, vector<4x1x18xf32>
    tpu.vector_store %arg5[%c0_3, %c17, %c0_4], %2 {strides = array<i32>} : memref<4x18x18xf32, #tpu.memory_space<vmem>>, vector<4x1x18xf32>,
    %cst_5 = arith.constant 0.000000e+00 : f32
    %4 = vector.broadcast %cst_5 : f32 to vector<4x18x1xf32>
    %c0_6 = arith.constant 0 : index
    %c0_7 = arith.constant 0 : index
    %c0_8 = arith.constant 0 : index
    %5 = vector.load %arg5[%c0_6, %c0_7, %c0_8] : memref<4x18x18xf32, #tpu.memory_space<vmem>>, vector<4x18x1xf32>
    tpu.vector_store %arg5[%c0_6, %c0_7, %c0_8], %4 {strides = array<i32>} : memref<4x18x18xf32, #tpu.memory_space<vmem>>, vector<4x18x1xf32>,
    %cst_9 = arith.constant 0.000000e+00 : f32
    %6 = vector.broadcast %cst_9 : f32 to vector<4x18x1xf32>
    %c0_10 = arith.constant 0 : index
    %c0_11 = arith.constant 0 : index
    %c17_12 = arith.constant 17 : index
    %7 = vector.load %arg5[%c0_10, %c0_11, %c17_12] : memref<4x18x18xf32, #tpu.memory_space<vmem>>, vector<4x18x1xf32>
    tpu.vector_store %arg5[%c0_10, %c0_11, %c17_12], %6 {strides = array<i32>} : memref<4x18x18xf32, #tpu.memory_space<vmem>>, vector<4x18x1xf32>,
    %cst_13 = arith.constant 0.000000e+00 : f32
    %8 = vector.broadcast %cst_13 : f32 to vector<1x1xf32>
    %cst_14 = arith.constant 0.000000e+00 : f32
    %9 = vector.broadcast %cst_14 : f32 to vector<1x1xf32>
    %c0_15 = arith.constant 0 : index
    %10 = memref.load %arg1[%c0_15] : memref<16xf32, #tpu.memory_space<smem>>
    %11 = vector.broadcast %10 : f32 to vector<1x1xf32>
    %12 = arith.addf %8, %11 : vector<1x1xf32>
    %c4 = arith.constant 4 : index
    %13 = memref.load %arg1[%c4] : memref<16xf32, #tpu.memory_space<smem>>
    %14 = vector.broadcast %13 : f32 to vector<1x1xf32>
    %15 = arith.addf %9, %14 : vector<1x1xf32>
    %c8 = arith.constant 8 : index
    %16 = memref.load %arg1[%c8] : memref<16xf32, #tpu.memory_space<smem>>
    %17 = vector.broadcast %16 : f32 to vector<1x1xf32>
    %18 = arith.addf %12, %17 : vector<1x1xf32>
    %c12 = arith.constant 12 : index
    %19 = memref.load %arg1[%c12] : memref<16xf32, #tpu.memory_space<smem>>
    %20 = vector.broadcast %19 : f32 to vector<1x1xf32>
    %21 = arith.addf %15, %20 : vector<1x1xf32>
    %cst_16 = arith.constant 0.001953125 : f32
    %22 = vector.broadcast %cst_16 : f32 to vector<1x1xf32>
    %23 = arith.mulf %18, %22 : vector<1x1xf32>
    %cst_17 = arith.constant 0.001953125 : f32
    %24 = vector.broadcast %cst_17 : f32 to vector<1x1xf32>
    %25 = arith.mulf %21, %24 : vector<1x1xf32>
    %26 = arith.mulf %23, %23 : vector<1x1xf32>
    %27 = arith.subf %25, %26 : vector<1x1xf32>
    %cst_18 = arith.constant 9.99999974E-6 : f32
    %28 = vector.broadcast %cst_18 : f32 to vector<1x1xf32>
    %29 = arith.addf %27, %28 : vector<1x1xf32>
    %30 = math.rsqrt %29 : vector<1x1xf32>
    %c0_19 = arith.constant 0 : index
    %31 = memref.load %arg2[%c0_19] : memref<45xf32, #tpu.memory_space<smem>>
    %c4_20 = arith.constant 4 : index
    %32 = memref.load %arg2[%c4_20] : memref<45xf32, #tpu.memory_space<smem>>
    %c0_21 = arith.constant 0 : index
    %c0_22 = arith.constant 0 : index
    %c0_23 = arith.constant 0 : index
    %33 = vector.load %arg3[%c0_21, %c0_22, %c0_23] : memref<1x16x64xf32, #tpu.memory_space<vmem>>, vector<1x16x16xf32>
    %34 = vector.shape_cast %33 : vector<1x16x16xf32> to vector<16x16xf32>
    %35 = vector.broadcast %23 : vector<1x1xf32> to vector<16x16xf32>
    %36 = arith.subf %34, %35 : vector<16x16xf32>
    %37 = vector.broadcast %31 : f32 to vector<1x1xf32>
    %38 = arith.mulf %30, %37 : vector<1x1xf32>
    %39 = vector.broadcast %38 : vector<1x1xf32> to vector<16x16xf32>
    %40 = arith.mulf %36, %39 : vector<16x16xf32>
    %41 = vector.broadcast %32 : f32 to vector<16x16xf32>
    %42 = arith.addf %40, %41 : vector<16x16xf32>
    %cst_24 = arith.constant 0.000000e+00 : f32
    %43 = vector.broadcast %cst_24 : f32 to vector<16x16xf32>
    %44 = arith.maximumf %42, %43 : vector<16x16xf32>
    %c0_25 = arith.constant 0 : index
    %c1 = arith.constant 1 : index
    %c1_26 = arith.constant 1 : index
    %45 = vector.load %arg5[%c0_25, %c1, %c1_26] : memref<4x18x18xf32, #tpu.memory_space<vmem>>, vector<1x16x16xf32>
    %46 = vector.shape_cast %45 : vector<1x16x16xf32> to vector<16x16xf32>
    %47 = vector.shape_cast %44 : vector<16x16xf32> to vector<1x16x16xf32>
    tpu.vector_store %arg5[%c0_25, %c1, %c1_26], %47 {strides = array<i32>} : memref<4x18x18xf32, #tpu.memory_space<vmem>>, vector<1x16x16xf32>,
    %cst_27 = arith.constant 0.000000e+00 : f32
    %48 = vector.broadcast %cst_27 : f32 to vector<1x1xf32>
    %cst_28 = arith.constant 0.000000e+00 : f32
    %49 = vector.broadcast %cst_28 : f32 to vector<1x1xf32>
    %c1_29 = arith.constant 1 : index
    %50 = memref.load %arg1[%c1_29] : memref<16xf32, #tpu.memory_space<smem>>
    %51 = vector.broadcast %50 : f32 to vector<1x1xf32>
    %52 = arith.addf %48, %51 : vector<1x1xf32>
    %c5 = arith.constant 5 : index
    %53 = memref.load %arg1[%c5] : memref<16xf32, #tpu.memory_space<smem>>
    %54 = vector.broadcast %53 : f32 to vector<1x1xf32>
    %55 = arith.addf %49, %54 : vector<1x1xf32>
    %c9 = arith.constant 9 : index
    %56 = memref.load %arg1[%c9] : memref<16xf32, #tpu.memory_space<smem>>
    %57 = vector.broadcast %56 : f32 to vector<1x1xf32>
    %58 = arith.addf %52, %57 : vector<1x1xf32>
    %c13 = arith.constant 13 : index
    %59 = memref.load %arg1[%c13] : memref<16xf32, #tpu.memory_space<smem>>
    %60 = vector.broadcast %59 : f32 to vector<1x1xf32>
    %61 = arith.addf %55, %60 : vector<1x1xf32>
    %cst_30 = arith.constant 0.001953125 : f32
    %62 = vector.broadcast %cst_30 : f32 to vector<1x1xf32>
    %63 = arith.mulf %58, %62 : vector<1x1xf32>
    %cst_31 = arith.constant 0.001953125 : f32
    %64 = vector.broadcast %cst_31 : f32 to vector<1x1xf32>
    %65 = arith.mulf %61, %64 : vector<1x1xf32>
    %66 = arith.mulf %63, %63 : vector<1x1xf32>
    %67 = arith.subf %65, %66 : vector<1x1xf32>
    %cst_32 = arith.constant 9.99999974E-6 : f32
    %68 = vector.broadcast %cst_32 : f32 to vector<1x1xf32>
    %69 = arith.addf %67, %68 : vector<1x1xf32>
    %70 = math.rsqrt %69 : vector<1x1xf32>
    %c1_33 = arith.constant 1 : index
    %71 = memref.load %arg2[%c1_33] : memref<45xf32, #tpu.memory_space<smem>>
    %c5_34 = arith.constant 5 : index
    %72 = memref.load %arg2[%c5_34] : memref<45xf32, #tpu.memory_space<smem>>
    %c0_35 = arith.constant 0 : index
    %c0_36 = arith.constant 0 : index
    %c16 = arith.constant 16 : index
    %73 = vector.load %arg3[%c0_35, %c0_36, %c16] : memref<1x16x64xf32, #tpu.memory_space<vmem>>, vector<1x16x16xf32>
    %74 = vector.shape_cast %73 : vector<1x16x16xf32> to vector<16x16xf32>
    %75 = vector.broadcast %63 : vector<1x1xf32> to vector<16x16xf32>
    %76 = arith.subf %74, %75 : vector<16x16xf32>
    %77 = vector.broadcast %71 : f32 to vector<1x1xf32>
    %78 = arith.mulf %70, %77 : vector<1x1xf32>
    %79 = vector.broadcast %78 : vector<1x1xf32> to vector<16x16xf32>
    %80 = arith.mulf %76, %79 : vector<16x16xf32>
    %81 = vector.broadcast %72 : f32 to vector<16x16xf32>
    %82 = arith.addf %80, %81 : vector<16x16xf32>
    %cst_37 = arith.constant 0.000000e+00 : f32
    %83 = vector.broadcast %cst_37 : f32 to vector<16x16xf32>
    %84 = arith.maximumf %82, %83 : vector<16x16xf32>
    %c1_38 = arith.constant 1 : index
    %c1_39 = arith.constant 1 : index
    %c1_40 = arith.constant 1 : index
    %85 = vector.load %arg5[%c1_38, %c1_39, %c1_40] : memref<4x18x18xf32, #tpu.memory_space<vmem>>, vector<1x16x16xf32>
    %86 = vector.shape_cast %85 : vector<1x16x16xf32> to vector<16x16xf32>
    %87 = vector.shape_cast %84 : vector<16x16xf32> to vector<1x16x16xf32>
    tpu.vector_store %arg5[%c1_38, %c1_39, %c1_40], %87 {strides = array<i32>} : memref<4x18x18xf32, #tpu.memory_space<vmem>>, vector<1x16x16xf32>,
    %cst_41 = arith.constant 0.000000e+00 : f32
    %88 = vector.broadcast %cst_41 : f32 to vector<1x1xf32>
    %cst_42 = arith.constant 0.000000e+00 : f32
    %89 = vector.broadcast %cst_42 : f32 to vector<1x1xf32>
    %c2 = arith.constant 2 : index
    %90 = memref.load %arg1[%c2] : memref<16xf32, #tpu.memory_space<smem>>
    %91 = vector.broadcast %90 : f32 to vector<1x1xf32>
    %92 = arith.addf %88, %91 : vector<1x1xf32>
    %c6 = arith.constant 6 : index
    %93 = memref.load %arg1[%c6] : memref<16xf32, #tpu.memory_space<smem>>
    %94 = vector.broadcast %93 : f32 to vector<1x1xf32>
    %95 = arith.addf %89, %94 : vector<1x1xf32>
    %c10 = arith.constant 10 : index
    %96 = memref.load %arg1[%c10] : memref<16xf32, #tpu.memory_space<smem>>
    %97 = vector.broadcast %96 : f32 to vector<1x1xf32>
    %98 = arith.addf %92, %97 : vector<1x1xf32>
    %c14 = arith.constant 14 : index
    %99 = memref.load %arg1[%c14] : memref<16xf32, #tpu.memory_space<smem>>
    %100 = vector.broadcast %99 : f32 to vector<1x1xf32>
    %101 = arith.addf %95, %100 : vector<1x1xf32>
    %cst_43 = arith.constant 0.001953125 : f32
    %102 = vector.broadcast %cst_43 : f32 to vector<1x1xf32>
    %103 = arith.mulf %98, %102 : vector<1x1xf32>
    %cst_44 = arith.constant 0.001953125 : f32
    %104 = vector.broadcast %cst_44 : f32 to vector<1x1xf32>
    %105 = arith.mulf %101, %104 : vector<1x1xf32>
    %106 = arith.mulf %103, %103 : vector<1x1xf32>
    %107 = arith.subf %105, %106 : vector<1x1xf32>
    %cst_45 = arith.constant 9.99999974E-6 : f32
    %108 = vector.broadcast %cst_45 : f32 to vector<1x1xf32>
    %109 = arith.addf %107, %108 : vector<1x1xf32>
    %110 = math.rsqrt %109 : vector<1x1xf32>
    %c2_46 = arith.constant 2 : index
    %111 = memref.load %arg2[%c2_46] : memref<45xf32, #tpu.memory_space<smem>>
    %c6_47 = arith.constant 6 : index
    %112 = memref.load %arg2[%c6_47] : memref<45xf32, #tpu.memory_space<smem>>
    %c0_48 = arith.constant 0 : index
    %c0_49 = arith.constant 0 : index
    %c32 = arith.constant 32 : index
    %113 = vector.load %arg3[%c0_48, %c0_49, %c32] : memref<1x16x64xf32, #tpu.memory_space<vmem>>, vector<1x16x16xf32>
    %114 = vector.shape_cast %113 : vector<1x16x16xf32> to vector<16x16xf32>
    %115 = vector.broadcast %103 : vector<1x1xf32> to vector<16x16xf32>
    %116 = arith.subf %114, %115 : vector<16x16xf32>
    %117 = vector.broadcast %111 : f32 to vector<1x1xf32>
    %118 = arith.mulf %110, %117 : vector<1x1xf32>
    %119 = vector.broadcast %118 : vector<1x1xf32> to vector<16x16xf32>
    %120 = arith.mulf %116, %119 : vector<16x16xf32>
    %121 = vector.broadcast %112 : f32 to vector<16x16xf32>
    %122 = arith.addf %120, %121 : vector<16x16xf32>
    %cst_50 = arith.constant 0.000000e+00 : f32
    %123 = vector.broadcast %cst_50 : f32 to vector<16x16xf32>
    %124 = arith.maximumf %122, %123 : vector<16x16xf32>
    %c2_51 = arith.constant 2 : index
    %c1_52 = arith.constant 1 : index
    %c1_53 = arith.constant 1 : index
    %125 = vector.load %arg5[%c2_51, %c1_52, %c1_53] : memref<4x18x18xf32, #tpu.memory_space<vmem>>, vector<1x16x16xf32>
    %126 = vector.shape_cast %125 : vector<1x16x16xf32> to vector<16x16xf32>
    %127 = vector.shape_cast %124 : vector<16x16xf32> to vector<1x16x16xf32>
    tpu.vector_store %arg5[%c2_51, %c1_52, %c1_53], %127 {strides = array<i32>} : memref<4x18x18xf32, #tpu.memory_space<vmem>>, vector<1x16x16xf32>,
    %cst_54 = arith.constant 0.000000e+00 : f32
    %128 = vector.broadcast %cst_54 : f32 to vector<1x1xf32>
    %cst_55 = arith.constant 0.000000e+00 : f32
    %129 = vector.broadcast %cst_55 : f32 to vector<1x1xf32>
    %c3 = arith.constant 3 : index
    %130 = memref.load %arg1[%c3] : memref<16xf32, #tpu.memory_space<smem>>
    %131 = vector.broadcast %130 : f32 to vector<1x1xf32>
    %132 = arith.addf %128, %131 : vector<1x1xf32>
    %c7 = arith.constant 7 : index
    %133 = memref.load %arg1[%c7] : memref<16xf32, #tpu.memory_space<smem>>
    %134 = vector.broadcast %133 : f32 to vector<1x1xf32>
    %135 = arith.addf %129, %134 : vector<1x1xf32>
    %c11 = arith.constant 11 : index
    %136 = memref.load %arg1[%c11] : memref<16xf32, #tpu.memory_space<smem>>
    %137 = vector.broadcast %136 : f32 to vector<1x1xf32>
    %138 = arith.addf %132, %137 : vector<1x1xf32>
    %c15 = arith.constant 15 : index
    %139 = memref.load %arg1[%c15] : memref<16xf32, #tpu.memory_space<smem>>
    %140 = vector.broadcast %139 : f32 to vector<1x1xf32>
    %141 = arith.addf %135, %140 : vector<1x1xf32>
    %cst_56 = arith.constant 0.001953125 : f32
    %142 = vector.broadcast %cst_56 : f32 to vector<1x1xf32>
    %143 = arith.mulf %138, %142 : vector<1x1xf32>
    %cst_57 = arith.constant 0.001953125 : f32
    %144 = vector.broadcast %cst_57 : f32 to vector<1x1xf32>
    %145 = arith.mulf %141, %144 : vector<1x1xf32>
    %146 = arith.mulf %143, %143 : vector<1x1xf32>
    %147 = arith.subf %145, %146 : vector<1x1xf32>
    %cst_58 = arith.constant 9.99999974E-6 : f32
    %148 = vector.broadcast %cst_58 : f32 to vector<1x1xf32>
    %149 = arith.addf %147, %148 : vector<1x1xf32>
    %150 = math.rsqrt %149 : vector<1x1xf32>
    %c3_59 = arith.constant 3 : index
    %151 = memref.load %arg2[%c3_59] : memref<45xf32, #tpu.memory_space<smem>>
    %c7_60 = arith.constant 7 : index
    %152 = memref.load %arg2[%c7_60] : memref<45xf32, #tpu.memory_space<smem>>
    %c0_61 = arith.constant 0 : index
    %c0_62 = arith.constant 0 : index
    %c48 = arith.constant 48 : index
    %153 = vector.load %arg3[%c0_61, %c0_62, %c48] : memref<1x16x64xf32, #tpu.memory_space<vmem>>, vector<1x16x16xf32>
    %154 = vector.shape_cast %153 : vector<1x16x16xf32> to vector<16x16xf32>
    %155 = vector.broadcast %143 : vector<1x1xf32> to vector<16x16xf32>
    %156 = arith.subf %154, %155 : vector<16x16xf32>
    %157 = vector.broadcast %151 : f32 to vector<1x1xf32>
    %158 = arith.mulf %150, %157 : vector<1x1xf32>
    %159 = vector.broadcast %158 : vector<1x1xf32> to vector<16x16xf32>
    %160 = arith.mulf %156, %159 : vector<16x16xf32>
    %161 = vector.broadcast %152 : f32 to vector<16x16xf32>
    %162 = arith.addf %160, %161 : vector<16x16xf32>
    %cst_63 = arith.constant 0.000000e+00 : f32
    %163 = vector.broadcast %cst_63 : f32 to vector<16x16xf32>
    %164 = arith.maximumf %162, %163 : vector<16x16xf32>
    %c3_64 = arith.constant 3 : index
    %c1_65 = arith.constant 1 : index
    %c1_66 = arith.constant 1 : index
    %165 = vector.load %arg5[%c3_64, %c1_65, %c1_66] : memref<4x18x18xf32, #tpu.memory_space<vmem>>, vector<1x16x16xf32>
    %166 = vector.shape_cast %165 : vector<1x16x16xf32> to vector<16x16xf32>
    %167 = vector.shape_cast %164 : vector<16x16xf32> to vector<1x16x16xf32>
    tpu.vector_store %arg5[%c3_64, %c1_65, %c1_66], %167 {strides = array<i32>} : memref<4x18x18xf32, #tpu.memory_space<vmem>>, vector<1x16x16xf32>,
    %cst_67 = arith.constant 0.000000e+00 : f32
    %168 = vector.broadcast %cst_67 : f32 to vector<16x16xf32>
    %c8_68 = arith.constant 8 : index
    %169 = memref.load %arg2[%c8_68] : memref<45xf32, #tpu.memory_space<smem>>
    %c0_69 = arith.constant 0 : index
    %c0_70 = arith.constant 0 : index
    %c0_71 = arith.constant 0 : index
    %170 = vector.load %arg5[%c0_69, %c0_70, %c0_71] : memref<4x18x18xf32, #tpu.memory_space<vmem>>, vector<1x16x16xf32>
    %171 = vector.shape_cast %170 : vector<1x16x16xf32> to vector<16x16xf32>
    %172 = vector.broadcast %169 : f32 to vector<16x16xf32>
    %173 = arith.mulf %172, %171 : vector<16x16xf32>
    %174 = arith.addf %168, %173 : vector<16x16xf32>
    %c9_72 = arith.constant 9 : index
    %175 = memref.load %arg2[%c9_72] : memref<45xf32, #tpu.memory_space<smem>>
    %c0_73 = arith.constant 0 : index
    %c0_74 = arith.constant 0 : index
    %c1_75 = arith.constant 1 : index
    %176 = vector.load %arg5[%c0_73, %c0_74, %c1_75] : memref<4x18x18xf32, #tpu.memory_space<vmem>>, vector<1x16x16xf32>
    %177 = vector.shape_cast %176 : vector<1x16x16xf32> to vector<16x16xf32>
    %178 = vector.broadcast %175 : f32 to vector<16x16xf32>
    %179 = arith.mulf %178, %177 : vector<16x16xf32>
    %180 = arith.addf %174, %179 : vector<16x16xf32>
    %c10_76 = arith.constant 10 : index
    %181 = memref.load %arg2[%c10_76] : memref<45xf32, #tpu.memory_space<smem>>
    %c0_77 = arith.constant 0 : index
    %c0_78 = arith.constant 0 : index
    %c2_79 = arith.constant 2 : index
    %182 = vector.load %arg5[%c0_77, %c0_78, %c2_79] : memref<4x18x18xf32, #tpu.memory_space<vmem>>, vector<1x16x16xf32>
    %183 = vector.shape_cast %182 : vector<1x16x16xf32> to vector<16x16xf32>
    %184 = vector.broadcast %181 : f32 to vector<16x16xf32>
    %185 = arith.mulf %184, %183 : vector<16x16xf32>
    %186 = arith.addf %180, %185 : vector<16x16xf32>
    %c11_80 = arith.constant 11 : index
    %187 = memref.load %arg2[%c11_80] : memref<45xf32, #tpu.memory_space<smem>>
    %c0_81 = arith.constant 0 : index
    %c1_82 = arith.constant 1 : index
    %c0_83 = arith.constant 0 : index
    %188 = vector.load %arg5[%c0_81, %c1_82, %c0_83] : memref<4x18x18xf32, #tpu.memory_space<vmem>>, vector<1x16x16xf32>
    %189 = vector.shape_cast %188 : vector<1x16x16xf32> to vector<16x16xf32>
    %190 = vector.broadcast %187 : f32 to vector<16x16xf32>
    %191 = arith.mulf %190, %189 : vector<16x16xf32>
    %192 = arith.addf %186, %191 : vector<16x16xf32>
    %c12_84 = arith.constant 12 : index
    %193 = memref.load %arg2[%c12_84] : memref<45xf32, #tpu.memory_space<smem>>
    %c0_85 = arith.constant 0 : index
    %c1_86 = arith.constant 1 : index
    %c1_87 = arith.constant 1 : index
    %194 = vector.load %arg5[%c0_85, %c1_86, %c1_87] : memref<4x18x18xf32, #tpu.memory_space<vmem>>, vector<1x16x16xf32>
    %195 = vector.shape_cast %194 : vector<1x16x16xf32> to vector<16x16xf32>
    %196 = vector.broadcast %193 : f32 to vector<16x16xf32>
    %197 = arith.mulf %196, %195 : vector<16x16xf32>
    %198 = arith.addf %192, %197 : vector<16x16xf32>
    %c13_88 = arith.constant 13 : index
    %199 = memref.load %arg2[%c13_88] : memref<45xf32, #tpu.memory_space<smem>>
    %c0_89 = arith.constant 0 : index
    %c1_90 = arith.constant 1 : index
    %c2_91 = arith.constant 2 : index
    %200 = vector.load %arg5[%c0_89, %c1_90, %c2_91] : memref<4x18x18xf32, #tpu.memory_space<vmem>>, vector<1x16x16xf32>
    %201 = vector.shape_cast %200 : vector<1x16x16xf32> to vector<16x16xf32>
    %202 = vector.broadcast %199 : f32 to vector<16x16xf32>
    %203 = arith.mulf %202, %201 : vector<16x16xf32>
    %204 = arith.addf %198, %203 : vector<16x16xf32>
    %c14_92 = arith.constant 14 : index
    %205 = memref.load %arg2[%c14_92] : memref<45xf32, #tpu.memory_space<smem>>
    %c0_93 = arith.constant 0 : index
    %c2_94 = arith.constant 2 : index
    %c0_95 = arith.constant 0 : index
    %206 = vector.load %arg5[%c0_93, %c2_94, %c0_95] : memref<4x18x18xf32, #tpu.memory_space<vmem>>, vector<1x16x16xf32>
    %207 = vector.shape_cast %206 : vector<1x16x16xf32> to vector<16x16xf32>
    %208 = vector.broadcast %205 : f32 to vector<16x16xf32>
    %209 = arith.mulf %208, %207 : vector<16x16xf32>
    %210 = arith.addf %204, %209 : vector<16x16xf32>
    %c15_96 = arith.constant 15 : index
    %211 = memref.load %arg2[%c15_96] : memref<45xf32, #tpu.memory_space<smem>>
    %c0_97 = arith.constant 0 : index
    %c2_98 = arith.constant 2 : index
    %c1_99 = arith.constant 1 : index
    %212 = vector.load %arg5[%c0_97, %c2_98, %c1_99] : memref<4x18x18xf32, #tpu.memory_space<vmem>>, vector<1x16x16xf32>
    %213 = vector.shape_cast %212 : vector<1x16x16xf32> to vector<16x16xf32>
    %214 = vector.broadcast %211 : f32 to vector<16x16xf32>
    %215 = arith.mulf %214, %213 : vector<16x16xf32>
    %216 = arith.addf %210, %215 : vector<16x16xf32>
    %c16_100 = arith.constant 16 : index
    %217 = memref.load %arg2[%c16_100] : memref<45xf32, #tpu.memory_space<smem>>
    %c0_101 = arith.constant 0 : index
    %c2_102 = arith.constant 2 : index
    %c2_103 = arith.constant 2 : index
    %218 = vector.load %arg5[%c0_101, %c2_102, %c2_103] : memref<4x18x18xf32, #tpu.memory_space<vmem>>, vector<1x16x16xf32>
    %219 = vector.shape_cast %218 : vector<1x16x16xf32> to vector<16x16xf32>
    %220 = vector.broadcast %217 : f32 to vector<16x16xf32>
    %221 = arith.mulf %220, %219 : vector<16x16xf32>
    %222 = arith.addf %216, %221 : vector<16x16xf32>
    %c17_104 = arith.constant 17 : index
    %223 = memref.load %arg2[%c17_104] : memref<45xf32, #tpu.memory_space<smem>>
    %c1_105 = arith.constant 1 : index
    %c0_106 = arith.constant 0 : index
    %c0_107 = arith.constant 0 : index
    %224 = vector.load %arg5[%c1_105, %c0_106, %c0_107] : memref<4x18x18xf32, #tpu.memory_space<vmem>>, vector<1x16x16xf32>
    %225 = vector.shape_cast %224 : vector<1x16x16xf32> to vector<16x16xf32>
    %226 = vector.broadcast %223 : f32 to vector<16x16xf32>
    %227 = arith.mulf %226, %225 : vector<16x16xf32>
    %228 = arith.addf %222, %227 : vector<16x16xf32>
    %c18 = arith.constant 18 : index
    %229 = memref.load %arg2[%c18] : memref<45xf32, #tpu.memory_space<smem>>
    %c1_108 = arith.constant 1 : index
    %c0_109 = arith.constant 0 : index
    %c1_110 = arith.constant 1 : index
    %230 = vector.load %arg5[%c1_108, %c0_109, %c1_110] : memref<4x18x18xf32, #tpu.memory_space<vmem>>, vector<1x16x16xf32>
    %231 = vector.shape_cast %230 : vector<1x16x16xf32> to vector<16x16xf32>
    %232 = vector.broadcast %229 : f32 to vector<16x16xf32>
    %233 = arith.mulf %232, %231 : vector<16x16xf32>
    %234 = arith.addf %228, %233 : vector<16x16xf32>
    %c19 = arith.constant 19 : index
    %235 = memref.load %arg2[%c19] : memref<45xf32, #tpu.memory_space<smem>>
    %c1_111 = arith.constant 1 : index
    %c0_112 = arith.constant 0 : index
    %c2_113 = arith.constant 2 : index
    %236 = vector.load %arg5[%c1_111, %c0_112, %c2_113] : memref<4x18x18xf32, #tpu.memory_space<vmem>>, vector<1x16x16xf32>
    %237 = vector.shape_cast %236 : vector<1x16x16xf32> to vector<16x16xf32>
    %238 = vector.broadcast %235 : f32 to vector<16x16xf32>
    %239 = arith.mulf %238, %237 : vector<16x16xf32>
    %240 = arith.addf %234, %239 : vector<16x16xf32>
    %c20 = arith.constant 20 : index
    %241 = memref.load %arg2[%c20] : memref<45xf32, #tpu.memory_space<smem>>
    %c1_114 = arith.constant 1 : index
    %c1_115 = arith.constant 1 : index
    %c0_116 = arith.constant 0 : index
    %242 = vector.load %arg5[%c1_114, %c1_115, %c0_116] : memref<4x18x18xf32, #tpu.memory_space<vmem>>, vector<1x16x16xf32>
    %243 = vector.shape_cast %242 : vector<1x16x16xf32> to vector<16x16xf32>
    %244 = vector.broadcast %241 : f32 to vector<16x16xf32>
    %245 = arith.mulf %244, %243 : vector<16x16xf32>
    %246 = arith.addf %240, %245 : vector<16x16xf32>
    %c21 = arith.constant 21 : index
    %247 = memref.load %arg2[%c21] : memref<45xf32, #tpu.memory_space<smem>>
    %c1_117 = arith.constant 1 : index
    %c1_118 = arith.constant 1 : index
    %c1_119 = arith.constant 1 : index
    %248 = vector.load %arg5[%c1_117, %c1_118, %c1_119] : memref<4x18x18xf32, #tpu.memory_space<vmem>>, vector<1x16x16xf32>
    %249 = vector.shape_cast %248 : vector<1x16x16xf32> to vector<16x16xf32>
    %250 = vector.broadcast %247 : f32 to vector<16x16xf32>
    %251 = arith.mulf %250, %249 : vector<16x16xf32>
    %252 = arith.addf %246, %251 : vector<16x16xf32>
    %c22 = arith.constant 22 : index
    %253 = memref.load %arg2[%c22] : memref<45xf32, #tpu.memory_space<smem>>
    %c1_120 = arith.constant 1 : index
    %c1_121 = arith.constant 1 : index
    %c2_122 = arith.constant 2 : index
    %254 = vector.load %arg5[%c1_120, %c1_121, %c2_122] : memref<4x18x18xf32, #tpu.memory_space<vmem>>, vector<1x16x16xf32>
    %255 = vector.shape_cast %254 : vector<1x16x16xf32> to vector<16x16xf32>
    %256 = vector.broadcast %253 : f32 to vector<16x16xf32>
    %257 = arith.mulf %256, %255 : vector<16x16xf32>
    %258 = arith.addf %252, %257 : vector<16x16xf32>
    %c23 = arith.constant 23 : index
    %259 = memref.load %arg2[%c23] : memref<45xf32, #tpu.memory_space<smem>>
    %c1_123 = arith.constant 1 : index
    %c2_124 = arith.constant 2 : index
    %c0_125 = arith.constant 0 : index
    %260 = vector.load %arg5[%c1_123, %c2_124, %c0_125] : memref<4x18x18xf32, #tpu.memory_space<vmem>>, vector<1x16x16xf32>
    %261 = vector.shape_cast %260 : vector<1x16x16xf32> to vector<16x16xf32>
    %262 = vector.broadcast %259 : f32 to vector<16x16xf32>
    %263 = arith.mulf %262, %261 : vector<16x16xf32>
    %264 = arith.addf %258, %263 : vector<16x16xf32>
    %c24 = arith.constant 24 : index
    %265 = memref.load %arg2[%c24] : memref<45xf32, #tpu.memory_space<smem>>
    %c1_126 = arith.constant 1 : index
    %c2_127 = arith.constant 2 : index
    %c1_128 = arith.constant 1 : index
    %266 = vector.load %arg5[%c1_126, %c2_127, %c1_128] : memref<4x18x18xf32, #tpu.memory_space<vmem>>, vector<1x16x16xf32>
    %267 = vector.shape_cast %266 : vector<1x16x16xf32> to vector<16x16xf32>
    %268 = vector.broadcast %265 : f32 to vector<16x16xf32>
    %269 = arith.mulf %268, %267 : vector<16x16xf32>
    %270 = arith.addf %264, %269 : vector<16x16xf32>
    %c25 = arith.constant 25 : index
    %271 = memref.load %arg2[%c25] : memref<45xf32, #tpu.memory_space<smem>>
    %c1_129 = arith.constant 1 : index
    %c2_130 = arith.constant 2 : index
    %c2_131 = arith.constant 2 : index
    %272 = vector.load %arg5[%c1_129, %c2_130, %c2_131] : memref<4x18x18xf32, #tpu.memory_space<vmem>>, vector<1x16x16xf32>
    %273 = vector.shape_cast %272 : vector<1x16x16xf32> to vector<16x16xf32>
    %274 = vector.broadcast %271 : f32 to vector<16x16xf32>
    %275 = arith.mulf %274, %273 : vector<16x16xf32>
    %276 = arith.addf %270, %275 : vector<16x16xf32>
    %c26 = arith.constant 26 : index
    %277 = memref.load %arg2[%c26] : memref<45xf32, #tpu.memory_space<smem>>
    %c2_132 = arith.constant 2 : index
    %c0_133 = arith.constant 0 : index
    %c0_134 = arith.constant 0 : index
    %278 = vector.load %arg5[%c2_132, %c0_133, %c0_134] : memref<4x18x18xf32, #tpu.memory_space<vmem>>, vector<1x16x16xf32>
    %279 = vector.shape_cast %278 : vector<1x16x16xf32> to vector<16x16xf32>
    %280 = vector.broadcast %277 : f32 to vector<16x16xf32>
    %281 = arith.mulf %280, %279 : vector<16x16xf32>
    %282 = arith.addf %276, %281 : vector<16x16xf32>
    %c27 = arith.constant 27 : index
    %283 = memref.load %arg2[%c27] : memref<45xf32, #tpu.memory_space<smem>>
    %c2_135 = arith.constant 2 : index
    %c0_136 = arith.constant 0 : index
    %c1_137 = arith.constant 1 : index
    %284 = vector.load %arg5[%c2_135, %c0_136, %c1_137] : memref<4x18x18xf32, #tpu.memory_space<vmem>>, vector<1x16x16xf32>
    %285 = vector.shape_cast %284 : vector<1x16x16xf32> to vector<16x16xf32>
    %286 = vector.broadcast %283 : f32 to vector<16x16xf32>
    %287 = arith.mulf %286, %285 : vector<16x16xf32>
    %288 = arith.addf %282, %287 : vector<16x16xf32>
    %c28 = arith.constant 28 : index
    %289 = memref.load %arg2[%c28] : memref<45xf32, #tpu.memory_space<smem>>
    %c2_138 = arith.constant 2 : index
    %c0_139 = arith.constant 0 : index
    %c2_140 = arith.constant 2 : index
    %290 = vector.load %arg5[%c2_138, %c0_139, %c2_140] : memref<4x18x18xf32, #tpu.memory_space<vmem>>, vector<1x16x16xf32>
    %291 = vector.shape_cast %290 : vector<1x16x16xf32> to vector<16x16xf32>
    %292 = vector.broadcast %289 : f32 to vector<16x16xf32>
    %293 = arith.mulf %292, %291 : vector<16x16xf32>
    %294 = arith.addf %288, %293 : vector<16x16xf32>
    %c29 = arith.constant 29 : index
    %295 = memref.load %arg2[%c29] : memref<45xf32, #tpu.memory_space<smem>>
    %c2_141 = arith.constant 2 : index
    %c1_142 = arith.constant 1 : index
    %c0_143 = arith.constant 0 : index
    %296 = vector.load %arg5[%c2_141, %c1_142, %c0_143] : memref<4x18x18xf32, #tpu.memory_space<vmem>>, vector<1x16x16xf32>
    %297 = vector.shape_cast %296 : vector<1x16x16xf32> to vector<16x16xf32>
    %298 = vector.broadcast %295 : f32 to vector<16x16xf32>
    %299 = arith.mulf %298, %297 : vector<16x16xf32>
    %300 = arith.addf %294, %299 : vector<16x16xf32>
    %c30 = arith.constant 30 : index
    %301 = memref.load %arg2[%c30] : memref<45xf32, #tpu.memory_space<smem>>
    %c2_144 = arith.constant 2 : index
    %c1_145 = arith.constant 1 : index
    %c1_146 = arith.constant 1 : index
    %302 = vector.load %arg5[%c2_144, %c1_145, %c1_146] : memref<4x18x18xf32, #tpu.memory_space<vmem>>, vector<1x16x16xf32>
    %303 = vector.shape_cast %302 : vector<1x16x16xf32> to vector<16x16xf32>
    %304 = vector.broadcast %301 : f32 to vector<16x16xf32>
    %305 = arith.mulf %304, %303 : vector<16x16xf32>
    %306 = arith.addf %300, %305 : vector<16x16xf32>
    %c31 = arith.constant 31 : index
    %307 = memref.load %arg2[%c31] : memref<45xf32, #tpu.memory_space<smem>>
    %c2_147 = arith.constant 2 : index
    %c1_148 = arith.constant 1 : index
    %c2_149 = arith.constant 2 : index
    %308 = vector.load %arg5[%c2_147, %c1_148, %c2_149] : memref<4x18x18xf32, #tpu.memory_space<vmem>>, vector<1x16x16xf32>
    %309 = vector.shape_cast %308 : vector<1x16x16xf32> to vector<16x16xf32>
    %310 = vector.broadcast %307 : f32 to vector<16x16xf32>
    %311 = arith.mulf %310, %309 : vector<16x16xf32>
    %312 = arith.addf %306, %311 : vector<16x16xf32>
    %c32_150 = arith.constant 32 : index
    %313 = memref.load %arg2[%c32_150] : memref<45xf32, #tpu.memory_space<smem>>
    %c2_151 = arith.constant 2 : index
    %c2_152 = arith.constant 2 : index
    %c0_153 = arith.constant 0 : index
    %314 = vector.load %arg5[%c2_151, %c2_152, %c0_153] : memref<4x18x18xf32, #tpu.memory_space<vmem>>, vector<1x16x16xf32>
    %315 = vector.shape_cast %314 : vector<1x16x16xf32> to vector<16x16xf32>
    %316 = vector.broadcast %313 : f32 to vector<16x16xf32>
    %317 = arith.mulf %316, %315 : vector<16x16xf32>
    %318 = arith.addf %312, %317 : vector<16x16xf32>
    %c33 = arith.constant 33 : index
    %319 = memref.load %arg2[%c33] : memref<45xf32, #tpu.memory_space<smem>>
    %c2_154 = arith.constant 2 : index
    %c2_155 = arith.constant 2 : index
    %c1_156 = arith.constant 1 : index
    %320 = vector.load %arg5[%c2_154, %c2_155, %c1_156] : memref<4x18x18xf32, #tpu.memory_space<vmem>>, vector<1x16x16xf32>
    %321 = vector.shape_cast %320 : vector<1x16x16xf32> to vector<16x16xf32>
    %322 = vector.broadcast %319 : f32 to vector<16x16xf32>
    %323 = arith.mulf %322, %321 : vector<16x16xf32>
    %324 = arith.addf %318, %323 : vector<16x16xf32>
    %c34 = arith.constant 34 : index
    %325 = memref.load %arg2[%c34] : memref<45xf32, #tpu.memory_space<smem>>
    %c2_157 = arith.constant 2 : index
    %c2_158 = arith.constant 2 : index
    %c2_159 = arith.constant 2 : index
    %326 = vector.load %arg5[%c2_157, %c2_158, %c2_159] : memref<4x18x18xf32, #tpu.memory_space<vmem>>, vector<1x16x16xf32>
    %327 = vector.shape_cast %326 : vector<1x16x16xf32> to vector<16x16xf32>
    %328 = vector.broadcast %325 : f32 to vector<16x16xf32>
    %329 = arith.mulf %328, %327 : vector<16x16xf32>
    %330 = arith.addf %324, %329 : vector<16x16xf32>
    %c35 = arith.constant 35 : index
    %331 = memref.load %arg2[%c35] : memref<45xf32, #tpu.memory_space<smem>>
    %c3_160 = arith.constant 3 : index
    %c0_161 = arith.constant 0 : index
    %c0_162 = arith.constant 0 : index
    %332 = vector.load %arg5[%c3_160, %c0_161, %c0_162] : memref<4x18x18xf32, #tpu.memory_space<vmem>>, vector<1x16x16xf32>
    %333 = vector.shape_cast %332 : vector<1x16x16xf32> to vector<16x16xf32>
    %334 = vector.broadcast %331 : f32 to vector<16x16xf32>
    %335 = arith.mulf %334, %333 : vector<16x16xf32>
    %336 = arith.addf %330, %335 : vector<16x16xf32>
    %c36 = arith.constant 36 : index
    %337 = memref.load %arg2[%c36] : memref<45xf32, #tpu.memory_space<smem>>
    %c3_163 = arith.constant 3 : index
    %c0_164 = arith.constant 0 : index
    %c1_165 = arith.constant 1 : index
    %338 = vector.load %arg5[%c3_163, %c0_164, %c1_165] : memref<4x18x18xf32, #tpu.memory_space<vmem>>, vector<1x16x16xf32>
    %339 = vector.shape_cast %338 : vector<1x16x16xf32> to vector<16x16xf32>
    %340 = vector.broadcast %337 : f32 to vector<16x16xf32>
    %341 = arith.mulf %340, %339 : vector<16x16xf32>
    %342 = arith.addf %336, %341 : vector<16x16xf32>
    %c37 = arith.constant 37 : index
    %343 = memref.load %arg2[%c37] : memref<45xf32, #tpu.memory_space<smem>>
    %c3_166 = arith.constant 3 : index
    %c0_167 = arith.constant 0 : index
    %c2_168 = arith.constant 2 : index
    %344 = vector.load %arg5[%c3_166, %c0_167, %c2_168] : memref<4x18x18xf32, #tpu.memory_space<vmem>>, vector<1x16x16xf32>
    %345 = vector.shape_cast %344 : vector<1x16x16xf32> to vector<16x16xf32>
    %346 = vector.broadcast %343 : f32 to vector<16x16xf32>
    %347 = arith.mulf %346, %345 : vector<16x16xf32>
    %348 = arith.addf %342, %347 : vector<16x16xf32>
    %c38 = arith.constant 38 : index
    %349 = memref.load %arg2[%c38] : memref<45xf32, #tpu.memory_space<smem>>
    %c3_169 = arith.constant 3 : index
    %c1_170 = arith.constant 1 : index
    %c0_171 = arith.constant 0 : index
    %350 = vector.load %arg5[%c3_169, %c1_170, %c0_171] : memref<4x18x18xf32, #tpu.memory_space<vmem>>, vector<1x16x16xf32>
    %351 = vector.shape_cast %350 : vector<1x16x16xf32> to vector<16x16xf32>
    %352 = vector.broadcast %349 : f32 to vector<16x16xf32>
    %353 = arith.mulf %352, %351 : vector<16x16xf32>
    %354 = arith.addf %348, %353 : vector<16x16xf32>
    %c39 = arith.constant 39 : index
    %355 = memref.load %arg2[%c39] : memref<45xf32, #tpu.memory_space<smem>>
    %c3_172 = arith.constant 3 : index
    %c1_173 = arith.constant 1 : index
    %c1_174 = arith.constant 1 : index
    %356 = vector.load %arg5[%c3_172, %c1_173, %c1_174] : memref<4x18x18xf32, #tpu.memory_space<vmem>>, vector<1x16x16xf32>
    %357 = vector.shape_cast %356 : vector<1x16x16xf32> to vector<16x16xf32>
    %358 = vector.broadcast %355 : f32 to vector<16x16xf32>
    %359 = arith.mulf %358, %357 : vector<16x16xf32>
    %360 = arith.addf %354, %359 : vector<16x16xf32>
    %c40 = arith.constant 40 : index
    %361 = memref.load %arg2[%c40] : memref<45xf32, #tpu.memory_space<smem>>
    %c3_175 = arith.constant 3 : index
    %c1_176 = arith.constant 1 : index
    %c2_177 = arith.constant 2 : index
    %362 = vector.load %arg5[%c3_175, %c1_176, %c2_177] : memref<4x18x18xf32, #tpu.memory_space<vmem>>, vector<1x16x16xf32>
    %363 = vector.shape_cast %362 : vector<1x16x16xf32> to vector<16x16xf32>
    %364 = vector.broadcast %361 : f32 to vector<16x16xf32>
    %365 = arith.mulf %364, %363 : vector<16x16xf32>
    %366 = arith.addf %360, %365 : vector<16x16xf32>
    %c41 = arith.constant 41 : index
    %367 = memref.load %arg2[%c41] : memref<45xf32, #tpu.memory_space<smem>>
    %c3_178 = arith.constant 3 : index
    %c2_179 = arith.constant 2 : index
    %c0_180 = arith.constant 0 : index
    %368 = vector.load %arg5[%c3_178, %c2_179, %c0_180] : memref<4x18x18xf32, #tpu.memory_space<vmem>>, vector<1x16x16xf32>
    %369 = vector.shape_cast %368 : vector<1x16x16xf32> to vector<16x16xf32>
    %370 = vector.broadcast %367 : f32 to vector<16x16xf32>
    %371 = arith.mulf %370, %369 : vector<16x16xf32>
    %372 = arith.addf %366, %371 : vector<16x16xf32>
    %c42 = arith.constant 42 : index
    %373 = memref.load %arg2[%c42] : memref<45xf32, #tpu.memory_space<smem>>
    %c3_181 = arith.constant 3 : index
    %c2_182 = arith.constant 2 : index
    %c1_183 = arith.constant 1 : index
    %374 = vector.load %arg5[%c3_181, %c2_182, %c1_183] : memref<4x18x18xf32, #tpu.memory_space<vmem>>, vector<1x16x16xf32>
    %375 = vector.shape_cast %374 : vector<1x16x16xf32> to vector<16x16xf32>
    %376 = vector.broadcast %373 : f32 to vector<16x16xf32>
    %377 = arith.mulf %376, %375 : vector<16x16xf32>
    %378 = arith.addf %372, %377 : vector<16x16xf32>
    %c43 = arith.constant 43 : index
    %379 = memref.load %arg2[%c43] : memref<45xf32, #tpu.memory_space<smem>>
    %c3_184 = arith.constant 3 : index
    %c2_185 = arith.constant 2 : index
    %c2_186 = arith.constant 2 : index
    %380 = vector.load %arg5[%c3_184, %c2_185, %c2_186] : memref<4x18x18xf32, #tpu.memory_space<vmem>>, vector<1x16x16xf32>
    %381 = vector.shape_cast %380 : vector<1x16x16xf32> to vector<16x16xf32>
    %382 = vector.broadcast %379 : f32 to vector<16x16xf32>
    %383 = arith.mulf %382, %381 : vector<16x16xf32>
    %384 = arith.addf %378, %383 : vector<16x16xf32>
    %c44 = arith.constant 44 : index
    %385 = memref.load %arg2[%c44] : memref<45xf32, #tpu.memory_space<smem>>
    %386 = vector.broadcast %385 : f32 to vector<16x16xf32>
    %387 = arith.addf %384, %386 : vector<16x16xf32>
    %388 = arith.negf %387 : vector<16x16xf32>
    %389 = math.exp %388 : vector<16x16xf32>
    %cst_187 = arith.constant 1.000000e+00 : f32
    %390 = vector.broadcast %cst_187 : f32 to vector<16x16xf32>
    %391 = arith.addf %390, %389 : vector<16x16xf32>
    %392 = arith.divf %390, %391 : vector<16x16xf32>
    %c0_188 = arith.constant 0 : index
    %c0_189 = arith.constant 0 : index
    %c0_190 = arith.constant 0 : index
    %393 = vector.load %arg4[%c0_188, %c0_189, %c0_190] : memref<1x16x16xf32, #tpu.memory_space<vmem>>, vector<1x16x16xf32>
    %394 = vector.shape_cast %393 : vector<1x16x16xf32> to vector<16x16xf32>
    %395 = vector.shape_cast %392 : vector<16x16xf32> to vector<1x16x16xf32>
    tpu.vector_store %arg4[%c0_188, %c0_189, %c0_190], %395 {strides = array<i32>} : memref<1x16x16xf32, #tpu.memory_space<vmem>>, vector<1x16x16xf32>,
    return
  }
  func.func @transform_0(%arg0: i32) -> i32 {
    %c0_i32 = arith.constant 0 : i32
    %c0_i32_0 = arith.constant 0 : i32
    return %c0_i32 : i32
  }
  func.func @transform_1(%arg0: i32) -> i32 {
    %c0_i32 = arith.constant 0 : i32
    %c0_i32_0 = arith.constant 0 : i32
    return %c0_i32 : i32
  }
  func.func @transform_2(%arg0: i32) -> (i32, i32, i32) {
    %c0_i32 = arith.constant 0 : i32
    %c0_i32_0 = arith.constant 0 : i32
    %c0_i32_1 = arith.constant 0 : i32
    return %arg0, %c0_i32, %c0_i32_0 : i32, i32, i32
  }
  func.func @transform_3(%arg0: i32) -> (i32, i32, i32) {
    %c0_i32 = arith.constant 0 : i32
    %c0_i32_0 = arith.constant 0 : i32
    %c0_i32_1 = arith.constant 0 : i32
    return %arg0, %c0_i32, %c0_i32_0 : i32, i32, i32
  }
}

</mosaic_0001>

<llo_original>
// kernel: _forward_impl.3
$region0: #{_forward_impl.3}
  #allocation0 [shape = 'u32[]', space=smem, size = 0x4, offset = 0x4, fixed_abs, tag = 'smem constant byte address 0x4 - core index']
  #allocation1 [shape = 'u32[144,128]{1,0:T(1,128)}', space=vmem, size = 0x12000, scoped, tag = 'internal scratch']
  #allocation2 [shape = 'f32[4,18,18]{2,1,0:T(8,128)}', space=vmem, size = 0xc000, scoped, tag = 'scratch operand']
  %s0 = inlined_call_operand.hbm [shape: f32[16], index: 0, kind: input, shape index: {}]
  %s1 = inlined_call_operand.hbm [shape: f32[45], index: 1, kind: input, shape index: {}]
  %s2 = inlined_call_operand.hbm [shape: f32[2,16,64], index: 2, kind: input, shape index: {}]
  %s3 = inlined_call_operand.hbm [shape: f32[2,16,16], index: 3, kind: output, shape index: {}]
  %s4 = sld [smem:[#allocation0]]
  $region57: #{_forward_impl.3} parent=0
    _
  %s6 = ssub.s32 1, %s4
  %s7 = scalar_select 0, %s6, %s4
  $region1: #{_forward_impl.3} parent=0
    #allocation3 [shape = 'u8[512]{0}', space=smem, size = 0x200, scoped, tag = 'input window, operand 0, single buffered']
    #allocation4 [shape = 's32[2]{0}', space=sflag, size = 0x8, scoped, tag = 'scoped memory for _forward_impl.3']
    #allocation5 [shape = 's32[2]{0}', space=sflag, size = 0x8, scoped, tag = 'scoped memory for _forward_impl.3']
    #allocation6 [shape = 's32[2]{0}', space=sflag, size = 0x8, scoped, tag = 'scoped memory for _forward_impl.3']
    #allocation7 [shape = 'u8[512]{0}', space=smem, size = 0x200, scoped, tag = 'input window, operand 1, single buffered']
    #allocation8 [shape = 's32[1]{0}', space=sflag, size = 0x4, scoped, tag = 'scoped memory for _forward_impl.3']
    #allocation9 [shape = 'u8[16384]{0}', space=vmem, size = 0x4000, scoped, tag = 'input window, operand 2']
    #allocation10 [shape = 'u8[16384]{0}', space=vmem, size = 0x4000, scoped, tag = 'output window, operand 0']
    %8 = vsyncpa [#allocation6], 0
    %9 = vsyncpa [#allocation8], 0
    %10 = vsyncpa [#allocation4], 0
    %s11 = scalar_lea.sflag [#allocation4], 1
    %12 = vsyncpa %s11, 0
    %13 = vsyncpa [#allocation5], 0
    %s14 = scalar_lea.sflag [#allocation5], 1
    %15 = vsyncpa %s14, 0
    loop: start=0, step=1, limit=4
    $region2: #{_forward_impl.3} parent=1 // loop_pre_header
      _
    $region3: #{_forward_impl.3} parent=1 // loop_header
      %s17 = sphi 0, %s21
      %p18 = scmp.ge.s32.totalorder %s17, 4
      %s25 = sphi 0, %s25
      %s27 = sphi 0, %s25
      %s28 = sphi 0, %s27
      %s42 = sphi 0, %s28
      %s46 = sphi 0, %s46
      %s48 = sphi 0, %s46
      %s49 = sphi 0, %s48
      %s63 = sphi 0, %s49
      %s69 = sphi 0, %s71
      %s72 = sphi 0, %s69
      %s73 = sphi 0, %s72
      %s89 = sphi 0, %s73
      %s95 = sphi 0, %s97
      %s98 = sphi 0, %s95
      %s99 = sphi 0, %s98
      %s115 = sphi 0, %s99
    $region4: #{_forward_impl.3} parent=1 // loop_header_branch
      %20 = sbr.rel (%p18) target = $region8
    $region5: #{_forward_impl.3} parent=1 // loop_body
      %s22 = ssub.s32 %s17, 1
      %s23 = ssub.s32 %s17, 2
      %s24 = sadd.s32 %s17, 1
      %s26 = sadd.s32 %s25, 1
      %p29 = scmp.eq.s32.totalorder %s17, 1
      %p30 = scmp.ne.s32.totalorder %s25, %s27
      %p31 = scmp.eq.s32.totalorder %s17, 0
      %p32 = por %p30, %p31
      %p33 = scmp.ne.s32.totalorder %s25, %s27
      %p34 = scmp.eq.s32.totalorder %s22, 1
      %p35 = por %p33, %p34
      %p36 = scmp.ne.s32.totalorder %s27, %s28
      %p37 = scmp.eq.s32.totalorder %s22, 0
      %p38 = por %p36, %p37
      %p39 = scmp.ne.s32.totalorder %s27, %s28
      %p40 = scmp.eq.s32.totalorder %s23, 1
      %p41 = por %p39, %p40
      %p43 = scmp.ne.s32.totalorder %s28, %s42
      %p44 = scmp.eq.s32.totalorder %s23, 0
      %p45 = por %p43, %p44
      %s47 = sadd.s32 %s46, 1
      %p50 = scmp.eq.s32.totalorder %s17, 1
      %p51 = scmp.ne.s32.totalorder %s46, %s48
      %p52 = scmp.eq.s32.totalorder %s17, 0
      %p53 = por %p51, %p52
      %p54 = scmp.ne.s32.totalorder %s46, %s48
      %p55 = scmp.eq.s32.totalorder %s22, 1
      %p56 = por %p54, %p55
      %p57 = scmp.ne.s32.totalorder %s48, %s49
      %p58 = scmp.eq.s32.totalorder %s22, 0
      %p59 = por %p57, %p58
      %p60 = scmp.ne.s32.totalorder %s48, %s49
      %p61 = scmp.eq.s32.totalorder %s23, 1
      %p62 = por %p60, %p61
      %p64 = scmp.ne.s32.totalorder %s49, %s63
      %p65 = scmp.eq.s32.totalorder %s23, 0
      %p66 = por %p64, %p65
      %s67 = ssub.s32 %s17, %s24
      %p68 = scmp.eq.s32.totalorder %s67, 0
      %s70 = sadd.s32 %s69, 1
      %s71 = scalar_select %p68, %s69, %s70
      %p74 = pneg %p68
      %p75 = scmp.eq.s32.totalorder %s17, 1
      %p76 = por %p74, %p75
      %p77 = scmp.ne.s32.totalorder %s69, %s72
      %p78 = scmp.eq.s32.totalorder %s17, 0
      %p79 = por %p77, %p78
      %p80 = scmp.ne.s32.totalorder %s69, %s72
      %p81 = scmp.eq.s32.totalorder %s22, 1
      %p82 = por %p80, %p81
      %p83 = scmp.ne.s32.totalorder %s72, %s73
      %p84 = scmp.eq.s32.totalorder %s22, 0
      %p85 = por %p83, %p84
      %p86 = scmp.ne.s32.totalorder %s72, %s73
      %p87 = scmp.eq.s32.totalorder %s23, 1
      %p88 = por %p86, %p87
      %p90 = scmp.ne.s32.totalorder %s73, %s89
      %p91 = scmp.eq.s32.totalorder %s23, 0
      %p92 = por %p90, %p91
      %s93 = ssub.s32 %s17, %s24
      %p94 = scmp.eq.s32.totalorder %s93, 0
      %s96 = sadd.s32 %s95, 1
      %s97 = scalar_select %p94, %s95, %s96
      %p100 = pneg %p94
      %p101 = scmp.eq.s32.totalorder %s17, 1
      %p102 = por %p100, %p101
      %p103 = scmp.ne.s32.totalorder %s95, %s98
      %p104 = scmp.eq.s32.totalorder %s17, 0
      %p105 = por %p103, %p104
      %p106 = scmp.ne.s32.totalorder %s95, %s98
      %p107 = scmp.eq.s32.totalorder %s22, 1
      %p108 = por %p106, %p107
      %p109 = scmp.ne.s32.totalorder %s98, %s99
      %p110 = scmp.eq.s32.totalorder %s22, 0
      %p111 = por %p109, %p110
      %p112 = scmp.ne.s32.totalorder %s98, %s99
      %p113 = scmp.eq.s32.totalorder %s23, 1
      %p114 = por %p112, %p113
      %p116 = scmp.ne.s32.totalorder %s99, %s115
      %p117 = scmp.eq.s32.totalorder %s23, 0
      %p118 = por %p116, %p117
      %p119 = scmp.le.s32.totalorder 1, %s17
      %p120 = scmp.lt.s32.totalorder %s17, 3
      %p121 = pnand %p119, %p120
      %p122 = pneg %p121
      // Predicated region
      $region9: #{_forward_impl.3} parent=5 // pred_check
        _
      $region10: #{_forward_impl.3} parent=5 // pred_check_branch
        %124 = sbr.rel (%p121) target = $region12
      $region11: #{_forward_impl.3} parent=5 // pred_region
        %s125 = ssub.s32 %s17, 1
        // Predicated region
        $region13: #{_forward_impl.3} parent=11 // pred_check
          %p126 = pneg %p38
        $region14: #{_forward_impl.3} parent=11 // pred_check_branch
          %128 = sbr.rel (%p126) target = $region16
        $region15: #{_forward_impl.3} parent=11 // pred_region
          %s130 = ssub.s32 16, 16
          %131 = vsyncadd [#allocation6], %s130
          %134 = dma.hbm_to_smem %s0, 16, [#allocation3], [#allocation6]
        $region16: #{_forward_impl.3} parent=11 // pred_fallthru
          _
        // Predicated region
        $region17: #{_forward_impl.3} parent=11 // pred_check
          %p135 = pneg %p59
        $region18: #{_forward_impl.3} parent=11 // pred_check_branch
          %137 = sbr.rel (%p135) target = $region20
        $region19: #{_forward_impl.3} parent=11 // pred_region
          %s139 = ssub.s32 16, 16
          %140 = vsyncadd [#allocation8], %s139
          %143 = dma.hbm_to_smem %s1, 16, [#allocation7], [#allocation8]
        $region20: #{_forward_impl.3} parent=11 // pred_fallthru
          _
      $region12: #{_forward_impl.3} parent=5 // pred_fallthru
        _
      %p144 = scmp.lt.s32.totalorder %s17, 2
      // Predicated region
      $region21: #{_forward_impl.3} parent=5 // pred_check
        %p145 = pneg %p144
      $region22: #{_forward_impl.3} parent=5 // pred_check_branch
        %147 = sbr.rel (%p145) target = $region24
      $region23: #{_forward_impl.3} parent=5 // pred_region
        // Predicated region
        $region25: #{_forward_impl.3} parent=23 // pred_check
          %p148 = pneg %p79
        $region26: #{_forward_impl.3} parent=23 // pred_check_branch
          %150 = sbr.rel (%p148) target = $region28
        $region27: #{_forward_impl.3} parent=23 // pred_region
          %s151 = sand.u32 %s69, 1
          %s152 = scalar_lea.sflag [#allocation4], %s151
          %s153 = sand.u32 %s69, 1
          %s154 = smul.addr %s153, 16
          %s155 = scalar_lea.vmem [#allocation9], %s154
          %s157 = ssub.s32 256, 256
          %158 = vsyncadd %s152, %s157
          %s159 = smul.addr %s17, 2
          %s160 = smul.addr %s159, 128
          %s161 = scalar_lea.hbm %s2, %s160
          %s162 = sshll.u32 %s155, 4
          %s163 = int_to_ptr.vmem [resolvable:$true] %s162
          %168 = dma.hbm_to_vmem [thread:$0]  %s161, 256, %s163, %s152, 128, 128, 8
        $region28: #{_forward_impl.3} parent=23 // pred_fallthru
          _
      $region24: #{_forward_impl.3} parent=5 // pred_fallthru
        _
      %p169 = scmp.le.s32.totalorder 1, %s17
      %p170 = scmp.lt.s32.totalorder %s17, 3
      %p171 = pnand %p169, %p170
      %p172 = pneg %p171
      // Predicated region
      $region29: #{_forward_impl.3} parent=5 // pred_check
        _
      $region30: #{_forward_impl.3} parent=5 // pred_check_branch
        %174 = sbr.rel (%p171) target = $region32
      $region31: #{_forward_impl.3} parent=5 // pred_region
        %s175 = ssub.s32 %s17, 1
        // Predicated region
        $region33: #{_forward_impl.3} parent=31 // pred_check
          %p176 = pneg %p38
        $region34: #{_forward_impl.3} parent=31 // pred_check_branch
          %178 = sbr.rel (%p176) target = $region36
        $region35: #{_forward_impl.3} parent=31 // pred_region
          %179 = dma.done [#allocation6], 16
        $region36: #{_forward_impl.3} parent=31 // pred_fallthru
          _
        // Predicated region
        $region37: #{_forward_impl.3} parent=31 // pred_check
          %p180 = pneg %p59
        $region38: #{_forward_impl.3} parent=31 // pred_check_branch
          %182 = sbr.rel (%p180) target = $region40
        $region39: #{_forward_impl.3} parent=31 // pred_region
          %183 = dma.done [#allocation8], 16
        $region40: #{_forward_impl.3} parent=31 // pred_fallthru
          _
        %s184 = sand.u32 %s72, 1
        %s185 = scalar_lea.sflag [#allocation4], %s184
        %s186 = sand.u32 %s72, 1
        %s187 = smul.addr %s186, 16
        %s188 = scalar_lea.vmem [#allocation9], %s187
        // Predicated region
        $region41: #{_forward_impl.3} parent=31 // pred_check
          %p189 = pneg %p85
        $region42: #{_forward_impl.3} parent=31 // pred_check_branch
          %191 = sbr.rel (%p189) target = $region44
        $region43: #{_forward_impl.3} parent=31 // pred_region
          %192 = dma.done %s185, 256
        $region44: #{_forward_impl.3} parent=31 // pred_fallthru
          _
        %193 = sfence
        %p194 = pneg %p38
        %p195 = pneg %p35
        %p196 = pneg %p59
        %p197 = pneg %p56
        %s198 = sand.u32 %s72, 1
        %s199 = scalar_lea.sflag [#allocation4], %s198
        %s200 = sand.u32 %s72, 1
        %s201 = smul.addr %s200, 16
        %s202 = scalar_lea.vmem [#allocation9], %s201
        %p203 = pneg %p85
        %p204 = pneg %p82
        %p205 = pneg %p111
        %p206 = pneg %p108
        %s207 = sand.u32 %s98, 1
        %s208 = scalar_lea.sflag [#allocation5], %s207
        %s209 = sand.u32 %s98, 1
        %s210 = smul.addr %s209, 16
        %s211 = scalar_lea.vmem [#allocation10], %s210
        %vm212 = vcmask 139264
        %213 = vst.msk [vmem:[#allocation2] sm:$0x1] %vm212, 0.0
        %214 = vst.msk [vmem:[#allocation2 + $0x18] sm:$0x1] %vm212, 0.0
        %215 = vst.msk [vmem:[#allocation2 + $0x30] sm:$0x1] %vm212, 0.0
        %216 = vst.msk [vmem:[#allocation2 + $0x48] sm:$0x1] %vm212, 0.0
        %217 = vst.msk [vmem:[#allocation2 + $0x11] sm:$0x1] %vm212, 0.0
        %218 = vst.msk [vmem:[#allocation2 + $0x29] sm:$0x1] %vm212, 0.0
        %219 = vst.msk [vmem:[#allocation2 + $0x41] sm:$0x1] %vm212, 0.0
        %220 = vst.msk [vmem:[#allocation2 + $0x59] sm:$0x1] %vm212, 0.0
        %vm221 = vcmask 7168
        %222 = vst.msk [vmem:[#allocation2] sm:$0xff] %vm221, 0.0
        %223 = vst.msk [vmem:[#allocation2 + $0x8] sm:$0xff] %vm221, 0.0
        %vm224 = vcmask 1024
        %225 = vst.msk [vmem:[#allocation2 + $0x10] sm:$0x3] %vm224, 0.0
        %226 = vst.msk [vmem:[#allocation2 + $0x18] sm:$0xff] %vm221, 0.0
        %227 = vst.msk [vmem:[#allocation2 + $0x20] sm:$0xff] %vm221, 0.0
        %228 = vst.msk [vmem:[#allocation2 + $0x28] sm:$0x3] %vm224, 0.0
        %229 = vst.msk [vmem:[#allocation2 + $0x30] sm:$0xff] %vm221, 0.0
        %230 = vst.msk [vmem:[#allocation2 + $0x38] sm:$0xff] %vm221, 0.0
        %231 = vst.msk [vmem:[#allocation2 + $0x40] sm:$0x3] %vm224, 0.0
        %232 = vst.msk [vmem:[#allocation2 + $0x48] sm:$0xff] %vm221, 0.0
        %233 = vst.msk [vmem:[#allocation2 + $0x50] sm:$0xff] %vm221, 0.0
        %234 = vst.msk [vmem:[#allocation2 + $0x58] sm:$0x3] %vm224, 0.0
        %vm235 = vcmask 146568
        %236 = vst.msk [vmem:[#allocation2] sm:$0xff] %vm235, 0.0
        %237 = vst.msk [vmem:[#allocation2 + $0x8] sm:$0xff] %vm235, 0.0
        %vm238 = vcmask 140424
        %239 = vst.msk [vmem:[#allocation2 + $0x10] sm:$0x3] %vm238, 0.0
        %240 = vst.msk [vmem:[#allocation2 + $0x18] sm:$0xff] %vm235, 0.0
        %241 = vst.msk [vmem:[#allocation2 + $0x20] sm:$0xff] %vm235, 0.0
        %242 = vst.msk [vmem:[#allocation2 + $0x28] sm:$0x3] %vm238, 0.0
        %243 = vst.msk [vmem:[#allocation2 + $0x30] sm:$0xff] %vm235, 0.0
        %244 = vst.msk [vmem:[#allocation2 + $0x38] sm:$0xff] %vm235, 0.0
        %245 = vst.msk [vmem:[#allocation2 + $0x40] sm:$0x3] %vm238, 0.0
        %246 = vst.msk [vmem:[#allocation2 + $0x48] sm:$0xff] %vm235, 0.0
        %247 = vst.msk [vmem:[#allocation2 + $0x50] sm:$0xff] %vm235, 0.0
        %248 = vst.msk [vmem:[#allocation2 + $0x58] sm:$0x3] %vm238, 0.0
        %s249 = sld [smem:[#allocation3]]
        %v250 = vstv %s249
        %v251 = vadd.f32 %v250, 0.0
        %s252 = sld [smem:[#allocation3 + $0x4]]
        %v253 = vstv %s252
        %v254 = vadd.f32 %v253, 0.0
        %s255 = sld [smem:[#allocation3 + $0x8]]
        %v256 = vstv %s255
        %v257 = vadd.f32 %v251, %v256
        %s258 = sld [smem:[#allocation3 + $0xc]]
        %v259 = vstv %s258
        %v260 = vadd.f32 %v254, %v259
        %v261 = vmul.f32 %v257, 0.001953125
        %v262 = vmul.f32 %v260, 0.001953125
        %v263 = vmul.f32 %v261, %v261
        %v264 = vsub.f32 %v262, %v263
        %v265 = vadd.f32 %v264, 1e-05
        %v266 = vrsqrt.pop %v265
        %s267 = sld [smem:[#allocation7]]
        %s268 = sld [smem:[#allocation7 + $0x4]]
        %v269 = vld [vmem:[%s188] sm:$0xff]
        %v270 = vld [vmem:[%s188 + $0x8] sm:$0xff]
        %v271 = vsub.f32 %v269, %v261
        %v272 = vsub.f32 %v270, %v261
        %v273 = vstv %s267
        %v274 = vmul.f32 %v266, %v273
        %v275 = vmul.f32 %v271, %v274
        %v276 = vmul.f32 %v272, %v274
        %v277 = vstv %s268
        %v278 = vadd.f32 %v275, %v277
        %v279 = vadd.f32 %v276, %v277
        %v280 = vmax.f32 %v278, 0.0
        %v281 = vmax.f32 %v279, 0.0
        %284 = vrot.lane.b32.xlu0 %v280, 1
        %v285 = vpop.permute.xlu0 %284
        %286 = vrot.lane.b32.xlu0 %v281, 1
        %v287 = vpop.permute.xlu0 %286
        %vm290 = vcmask 138248
        %291 = vst.msk [vmem:[#allocation2 + $0x1] sm:$0xff] %vm290, %v285
        %292 = vst.msk [vmem:[#allocation2 + $0x9] sm:$0xff] %vm290, %v287
        %s293 = sld [smem:[#allocation3 + $0x1]]
        %v294 = vstv %s293
        %v295 = vadd.f32 %v294, 0.0
        %s296 = sld [smem:[#allocation3 + $0x5]]
        %v297 = vstv %s296
        %v298 = vadd.f32 %v297, 0.0
        %s299 = sld [smem:[#allocation3 + $0x9]]
        %v300 = vstv %s299
        %v301 = vadd.f32 %v295, %v300
        %s302 = sld [smem:[#allocation3 + $0xd]]
        %v303 = vstv %s302
        %v304 = vadd.f32 %v298, %v303
        %v305 = vmul.f32 %v301, 0.001953125
        %v306 = vmul.f32 %v304, 0.001953125
        %v307 = vmul.f32 %v305, %v305
        %v308 = vsub.f32 %v306, %v307
        %v309 = vadd.f32 %v308, 1e-05
        %v310 = vrsqrt.pop %v309
        %s311 = sld [smem:[#allocation7 + $0x1]]
        %s312 = sld [smem:[#allocation7 + $0x5]]
        %v313 = vld [vmem:[%s188] sm:$0xff]
        %v314 = vld [vmem:[%s188 + $0x8] sm:$0xff]
        %v315 = vsub.f32 %v313, %v305
        %v316 = vsub.f32 %v314, %v305
        %v317 = vstv %s311
        %v318 = vmul.f32 %v310, %v317
        %v319 = vmul.f32 %v315, %v318
        %v320 = vmul.f32 %v316, %v318
        %v321 = vstv %s312
        %v322 = vadd.f32 %v319, %v321
        %v323 = vadd.f32 %v320, %v321
        %v324 = vmax.f32 %v322, 0.0
        %v325 = vmax.f32 %v323, 0.0
        %328 = vrot.lane.b32.xlu0 %v324, 113
        %v329 = vpop.permute.xlu0 %328
        %330 = vrot.lane.b32.xlu0 %v325, 113
        %v331 = vpop.permute.xlu0 %330
        %s334 = scalar_lea.vmem [#allocation2], 24
        %335 = vst.msk [vmem:[%s334 + $0x1] sm:$0xff] %vm290, %v329
        %336 = vst.msk [vmem:[%s334 + $0x9] sm:$0xff] %vm290, %v331
        %s337 = sld [smem:[#allocation3 + $0x2]]
        %v338 = vstv %s337
        %v339 = vadd.f32 %v338, 0.0
        %s340 = sld [smem:[#allocation3 + $0x6]]
        %v341 = vstv %s340
        %v342 = vadd.f32 %v341, 0.0
        %s343 = sld [smem:[#allocation3 + $0xa]]
        %v344 = vstv %s343
        %v345 = vadd.f32 %v339, %v344
        %s346 = sld [smem:[#allocation3 + $0xe]]
        %v347 = vstv %s346
        %v348 = vadd.f32 %v342, %v347
        %v349 = vmul.f32 %v345, 0.001953125
        %v350 = vmul.f32 %v348, 0.001953125
        %v351 = vmul.f32 %v349, %v349
        %v352 = vsub.f32 %v350, %v351
        %v353 = vadd.f32 %v352, 1e-05
        %v354 = vrsqrt.pop %v353
        %s355 = sld [smem:[#allocation7 + $0x2]]
        %s356 = sld [smem:[#allocation7 + $0x6]]
        %v357 = vld [vmem:[%s188] sm:$0xff]
        %v358 = vld [vmem:[%s188 + $0x8] sm:$0xff]
        %v359 = vsub.f32 %v357, %v349
        %v360 = vsub.f32 %v358, %v349
        %v361 = vstv %s355
        %v362 = vmul.f32 %v354, %v361
        %v363 = vmul.f32 %v359, %v362
        %v364 = vmul.f32 %v360, %v362
        %v365 = vstv %s356
        %v366 = vadd.f32 %v363, %v365
        %v367 = vadd.f32 %v364, %v365
        %v368 = vmax.f32 %v366, 0.0
        %v369 = vmax.f32 %v367, 0.0
        %372 = vrot.lane.b32.xlu0 %v368, 97
        %v373 = vpop.permute.xlu0 %372
        %374 = vrot.lane.b32.xlu0 %v369, 97
        %v375 = vpop.permute.xlu0 %374
        %s378 = scalar_lea.vmem [#allocation2], 48
        %379 = vst.msk [vmem:[%s378 + $0x1] sm:$0xff] %vm290, %v373
        %380 = vst.msk [vmem:[%s378 + $0x9] sm:$0xff] %vm290, %v375
        %s381 = sld [smem:[#allocation3 + $0x3]]
        %v382 = vstv %s381
        %v383 = vadd.f32 %v382, 0.0
        %s384 = sld [smem:[#allocation3 + $0x7]]
        %v385 = vstv %s384
        %v386 = vadd.f32 %v385, 0.0
        %s387 = sld [smem:[#allocation3 + $0xb]]
        %v388 = vstv %s387
        %v389 = vadd.f32 %v383, %v388
        %s390 = sld [smem:[#allocation3 + $0xf]]
        %v391 = vstv %s390
        %v392 = vadd.f32 %v386, %v391
        %v393 = vmul.f32 %v389, 0.001953125
        %v394 = vmul.f32 %v392, 0.001953125
        %v395 = vmul.f32 %v393, %v393
        %v396 = vsub.f32 %v394, %v395
        %v397 = vadd.f32 %v396, 1e-05
        %v398 = vrsqrt.pop %v397
        %s399 = sld [smem:[#allocation7 + $0x3]]
        %s400 = sld [smem:[#allocation7 + $0x7]]
        %v401 = vld [vmem:[%s188] sm:$0xff]
        %v402 = vld [vmem:[%s188 + $0x8] sm:$0xff]
        %v403 = vsub.f32 %v401, %v393
        %v404 = vsub.f32 %v402, %v393
        %v405 = vstv %s399
        %v406 = vmul.f32 %v398, %v405
        %v407 = vmul.f32 %v403, %v406
        %v408 = vmul.f32 %v404, %v406
        %v409 = vstv %s400
        %v410 = vadd.f32 %v407, %v409
        %v411 = vadd.f32 %v408, %v409
        %v412 = vmax.f32 %v410, 0.0
        %v413 = vmax.f32 %v411, 0.0
        %416 = vrot.lane.b32.xlu0 %v412, 81
        %v417 = vpop.permute.xlu0 %416
        %418 = vrot.lane.b32.xlu0 %v413, 81
        %v419 = vpop.permute.xlu0 %418
        %s422 = scalar_lea.vmem [#allocation2], 72
        %423 = vst.msk [vmem:[%s422 + $0x1] sm:$0xff] %vm290, %v417
        %424 = vst.msk [vmem:[%s422 + $0x9] sm:$0xff] %vm290, %v419
        %s425 = sld [smem:[#allocation7 + $0x8]]
        %v426 = vld [vmem:[#allocation2] sm:$0xff]
        %v427 = vld [vmem:[#allocation2 + $0x8] sm:$0xff]
        %v428 = vstv %s425
        %v429 = vmul.f32 %v428, %v426
        %v430 = vmul.f32 %v428, %v427
        %v431 = vadd.f32 %v429, 0.0
        %v432 = vadd.f32 %v430, 0.0
        %s433 = sld [smem:[#allocation7 + $0x9]]
        %v434 = vstv %s433
        %v435 = vmul.f32 %v434, %v426
        %v436 = vmul.f32 %v434, %v427
        %439 = vrot.lane.b32.xlu0 %v435, 127
        %v440 = vpop.permute.xlu0 %439
        %441 = vrot.lane.b32.xlu0 %v436, 127
        %v442 = vpop.permute.xlu0 %441
        %v445 = vadd.f32 %v431, %v440
        %v446 = vadd.f32 %v432, %v442
        %s447 = sld [smem:[#allocation7 + $0xa]]
        %v448 = vstv %s447
        %v449 = vmul.f32 %v448, %v426
        %v450 = vmul.f32 %v448, %v427
        %453 = vrot.lane.b32.xlu0 %v449, 126
        %v454 = vpop.permute.xlu0 %453
        %455 = vrot.lane.b32.xlu0 %v450, 126
        %v456 = vpop.permute.xlu0 %455
        %v459 = vadd.f32 %v445, %v454
        %v460 = vadd.f32 %v446, %v456
        %s461 = sld [smem:[#allocation7 + $0xb]]
        %v462 = vld [vmem:[#allocation2 + $0x1] sm:$0xff]
        %v463 = vld [vmem:[#allocation2 + $0x9] sm:$0xff]
        %v464 = vstv %s461
        %v465 = vmul.f32 %v464, %v462
        %v466 = vmul.f32 %v464, %v463
        %v467 = vadd.f32 %v459, %v465
        %v468 = vadd.f32 %v460, %v466
        %s469 = sld [smem:[#allocation7 + $0xc]]
        %v470 = vstv %s469
        %v471 = vmul.f32 %v470, %v462
        %v472 = vmul.f32 %v470, %v463
        %475 = vrot.lane.b32.xlu0 %v471, 127
        %v476 = vpop.permute.xlu0 %475
        %477 = vrot.lane.b32.xlu0 %v472, 127
        %v478 = vpop.permute.xlu0 %477
        %v481 = vadd.f32 %v467, %v476
        %v482 = vadd.f32 %v468, %v478
        %s483 = sld [smem:[#allocation7 + $0xd]]
        %v484 = vstv %s483
        %v485 = vmul.f32 %v484, %v462
        %v486 = vmul.f32 %v484, %v463
        %489 = vrot.lane.b32.xlu0 %v485, 126
        %v490 = vpop.permute.xlu0 %489
        %491 = vrot.lane.b32.xlu0 %v486, 126
        %v492 = vpop.permute.xlu0 %491
        %v495 = vadd.f32 %v481, %v490
        %v496 = vadd.f32 %v482, %v492
        %s497 = sld [smem:[#allocation7 + $0xe]]
        %v498 = vld [vmem:[#allocation2 + $0x2] sm:$0xff]
        %v499 = vld [vmem:[#allocation2 + $0xa] sm:$0xff]
        %v500 = vstv %s497
        %v501 = vmul.f32 %v500, %v498
        %v502 = vmul.f32 %v500, %v499
        %v503 = vadd.f32 %v495, %v501
        %v504 = vadd.f32 %v496, %v502
        %s505 = sld [smem:[#allocation7 + $0xf]]
        %v506 = vstv %s505
        %v507 = vmul.f32 %v506, %v498
        %v508 = vmul.f32 %v506, %v499
        %511 = vrot.lane.b32.xlu0 %v507, 127
        %v512 = vpop.permute.xlu0 %511
        %513 = vrot.lane.b32.xlu0 %v508, 127
        %v514 = vpop.permute.xlu0 %513
        %v517 = vadd.f32 %v503, %v512
        %v518 = vadd.f32 %v504, %v514
        %s519 = sld [smem:[#allocation7 + $0x10]]
        %v520 = vstv %s519
        %v521 = vmul.f32 %v520, %v498
        %v522 = vmul.f32 %v520, %v499
        %525 = vrot.lane.b32.xlu0 %v521, 126
        %v526 = vpop.permute.xlu0 %525
        %527 = vrot.lane.b32.xlu0 %v522, 126
        %v528 = vpop.permute.xlu0 %527
        %v531 = vadd.f32 %v517, %v526
        %v532 = vadd.f32 %v518, %v528
        %s533 = sld [smem:[#allocation7 + $0x11]]
        %v534 = vld [vmem:[%s334] sm:$0xff]
        %v535 = vld [vmem:[%s334 + $0x8] sm:$0xff]
        %v536 = vstv %s533
        %v537 = vmul.f32 %v536, %v534
        %v538 = vmul.f32 %v536, %v535
        %v539 = vadd.f32 %v531, %v537
        %v540 = vadd.f32 %v532, %v538
        %s541 = sld [smem:[#allocation7 + $0x12]]
        %v542 = vstv %s541
        %v543 = vmul.f32 %v542, %v534
        %v544 = vmul.f32 %v542, %v535
        %547 = vrot.lane.b32.xlu0 %v543, 127
        %v548 = vpop.permute.xlu0 %547
        %549 = vrot.lane.b32.xlu0 %v544, 127
        %v550 = vpop.permute.xlu0 %549
        %v553 = vadd.f32 %v539, %v548
        %v554 = vadd.f32 %v540, %v550
        %s555 = sld [smem:[#allocation7 + $0x13]]
        %v556 = vstv %s555
        %v557 = vmul.f32 %v556, %v534
        %v558 = vmul.f32 %v556, %v535
        %561 = vrot.lane.b32.xlu0 %v557, 126
        %v562 = vpop.permute.xlu0 %561
        %563 = vrot.lane.b32.xlu0 %v558, 126
        %v564 = vpop.permute.xlu0 %563
        %v567 = vadd.f32 %v553, %v562
        %v568 = vadd.f32 %v554, %v564
        %s569 = sld [smem:[#allocation7 + $0x14]]
        %v570 = vld [vmem:[%s334 + $0x1] sm:$0xff]
        %v571 = vld [vmem:[%s334 + $0x9] sm:$0xff]
        %v572 = vstv %s569
        %v573 = vmul.f32 %v572, %v570
        %v574 = vmul.f32 %v572, %v571
        %v575 = vadd.f32 %v567, %v573
        %v576 = vadd.f32 %v568, %v574
        %s577 = sld [smem:[#allocation7 + $0x15]]
        %v578 = vstv %s577
        %v579 = vmul.f32 %v578, %v570
        %v580 = vmul.f32 %v578, %v571
        %583 = vrot.lane.b32.xlu0 %v579, 127
        %v584 = vpop.permute.xlu0 %583
        %585 = vrot.lane.b32.xlu0 %v580, 127
        %v586 = vpop.permute.xlu0 %585
        %v589 = vadd.f32 %v575, %v584
        %v590 = vadd.f32 %v576, %v586
        %s591 = sld [smem:[#allocation7 + $0x16]]
        %v592 = vstv %s591
        %v593 = vmul.f32 %v592, %v570
        %v594 = vmul.f32 %v592, %v571
        %597 = vrot.lane.b32.xlu0 %v593, 126
        %v598 = vpop.permute.xlu0 %597
        %599 = vrot.lane.b32.xlu0 %v594, 126
        %v600 = vpop.permute.xlu0 %599
        %v603 = vadd.f32 %v589, %v598
        %v604 = vadd.f32 %v590, %v600
        %s605 = sld [smem:[#allocation7 + $0x17]]
        %v606 = vld [vmem:[%s334 + $0x2] sm:$0xff]
        %v607 = vld [vmem:[%s334 + $0xa] sm:$0xff]
        %v608 = vstv %s605
        %v609 = vmul.f32 %v608, %v606
        %v610 = vmul.f32 %v608, %v607
        %v611 = vadd.f32 %v603, %v609
        %v612 = vadd.f32 %v604, %v610
        %s613 = sld [smem:[#allocation7 + $0x18]]
        %v614 = vstv %s613
        %v615 = vmul.f32 %v614, %v606
        %v616 = vmul.f32 %v614, %v607
        %619 = vrot.lane.b32.xlu0 %v615, 127
        %v620 = vpop.permute.xlu0 %619
        %621 = vrot.lane.b32.xlu0 %v616, 127
        %v622 = vpop.permute.xlu0 %621
        %v625 = vadd.f32 %v611, %v620
        %v626 = vadd.f32 %v612, %v622
        %s627 = sld [smem:[#allocation7 + $0x19]]
        %v628 = vstv %s627
        %v629 = vmul.f32 %v628, %v606
        %v630 = vmul.f32 %v628, %v607
        %633 = vrot.lane.b32.xlu0 %v629, 126
        %v634 = vpop.permute.xlu0 %633
        %635 = vrot.lane.b32.xlu0 %v630, 126
        %v636 = vpop.permute.xlu0 %635
        %v639 = vadd.f32 %v625, %v634
        %v640 = vadd.f32 %v626, %v636
        %s641 = sld [smem:[#allocation7 + $0x1a]]
        %v642 = vld [vmem:[%s378] sm:$0xff]
        %v643 = vld [vmem:[%s378 + $0x8] sm:$0xff]
        %v644 = vstv %s641
        %v645 = vmul.f32 %v644, %v642
        %v646 = vmul.f32 %v644, %v643
        %v647 = vadd.f32 %v639, %v645
        %v648 = vadd.f32 %v640, %v646
        %s649 = sld [smem:[#allocation7 + $0x1b]]
        %v650 = vstv %s649
        %v651 = vmul.f32 %v650, %v642
        %v652 = vmul.f32 %v650, %v643
        %655 = vrot.lane.b32.xlu0 %v651, 127
        %v656 = vpop.permute.xlu0 %655
        %657 = vrot.lane.b32.xlu0 %v652, 127
        %v658 = vpop.permute.xlu0 %657
        %v661 = vadd.f32 %v647, %v656
        %v662 = vadd.f32 %v648, %v658
        %s663 = sld [smem:[#allocation7 + $0x1c]]
        %v664 = vstv %s663
        %v665 = vmul.f32 %v664, %v642
        %v666 = vmul.f32 %v664, %v643
        %669 = vrot.lane.b32.xlu0 %v665, 126
        %v670 = vpop.permute.xlu0 %669
        %671 = vrot.lane.b32.xlu0 %v666, 126
        %v672 = vpop.permute.xlu0 %671
        %v675 = vadd.f32 %v661, %v670
        %v676 = vadd.f32 %v662, %v672
        %s677 = sld [smem:[#allocation7 + $0x1d]]
        %v678 = vld [vmem:[%s378 + $0x1] sm:$0xff]
        %v679 = vld [vmem:[%s378 + $0x9] sm:$0xff]
        %v680 = vstv %s677
        %v681 = vmul.f32 %v680, %v678
        %v682 = vmul.f32 %v680, %v679
        %v683 = vadd.f32 %v675, %v681
        %v684 = vadd.f32 %v676, %v682
        %s685 = sld [smem:[#allocation7 + $0x1e]]
        %v686 = vstv %s685
        %v687 = vmul.f32 %v686, %v678
        %v688 = vmul.f32 %v686, %v679
        %691 = vrot.lane.b32.xlu0 %v687, 127
        %v692 = vpop.permute.xlu0 %691
        %693 = vrot.lane.b32.xlu0 %v688, 127
        %v694 = vpop.permute.xlu0 %693
        %v697 = vadd.f32 %v683, %v692
        %v698 = vadd.f32 %v684, %v694
        %s699 = sld [smem:[#allocation7 + $0x1f]]
        %v700 = vstv %s699
        %v701 = vmul.f32 %v700, %v678
        %v702 = vmul.f32 %v700, %v679
        %705 = vrot.lane.b32.xlu0 %v701, 126
        %v706 = vpop.permute.xlu0 %705
        %707 = vrot.lane.b32.xlu0 %v702, 126
        %v708 = vpop.permute.xlu0 %707
        %v711 = vadd.f32 %v697, %v706
        %v712 = vadd.f32 %v698, %v708
        %s713 = sld [smem:[#allocation7 + $0x20]]
        %v714 = vld [vmem:[%s378 + $0x2] sm:$0xff]
        %v715 = vld [vmem:[%s378 + $0xa] sm:$0xff]
        %v716 = vstv %s713
        %v717 = vmul.f32 %v716, %v714
        %v718 = vmul.f32 %v716, %v715
        %v719 = vadd.f32 %v711, %v717
        %v720 = vadd.f32 %v712, %v718
        %s721 = sld [smem:[#allocation7 + $0x21]]
        %v722 = vstv %s721
        %v723 = vmul.f32 %v722, %v714
        %v724 = vmul.f32 %v722, %v715
        %727 = vrot.lane.b32.xlu0 %v723, 127
        %v728 = vpop.permute.xlu0 %727
        %729 = vrot.lane.b32.xlu0 %v724, 127
        %v730 = vpop.permute.xlu0 %729
        %v733 = vadd.f32 %v719, %v728
        %v734 = vadd.f32 %v720, %v730
        %s735 = sld [smem:[#allocation7 + $0x22]]
        %v736 = vstv %s735
        %v737 = vmul.f32 %v736, %v714
        %v738 = vmul.f32 %v736, %v715
        %741 = vrot.lane.b32.xlu0 %v737, 126
        %v742 = vpop.permute.xlu0 %741
        %743 = vrot.lane.b32.xlu0 %v738, 126
        %v744 = vpop.permute.xlu0 %743
        %v747 = vadd.f32 %v733, %v742
        %v748 = vadd.f32 %v734, %v744
        %s749 = sld [smem:[#allocation7 + $0x23]]
        %v750 = vld [vmem:[%s422] sm:$0xff]
        %v751 = vld [vmem:[%s422 + $0x8] sm:$0xff]
        %v752 = vstv %s749
        %v753 = vmul.f32 %v752, %v750
        %v754 = vmul.f32 %v752, %v751
        %v755 = vadd.f32 %v747, %v753
        %v756 = vadd.f32 %v748, %v754
        %s757 = sld [smem:[#allocation7 + $0x24]]
        %v758 = vstv %s757
        %v759 = vmul.f32 %v758, %v750
        %v760 = vmul.f32 %v758, %v751
        %763 = vrot.lane.b32.xlu0 %v759, 127
        %v764 = vpop.permute.xlu0 %763
        %765 = vrot.lane.b32.xlu0 %v760, 127
        %v766 = vpop.permute.xlu0 %765
        %v769 = vadd.f32 %v755, %v764
        %v770 = vadd.f32 %v756, %v766
        %s771 = sld [smem:[#allocation7 + $0x25]]
        %v772 = vstv %s771
        %v773 = vmul.f32 %v772, %v750
        %v774 = vmul.f32 %v772, %v751
        %777 = vrot.lane.b32.xlu0 %v773, 126
        %v778 = vpop.permute.xlu0 %777
        %779 = vrot.lane.b32.xlu0 %v774, 126
        %v780 = vpop.permute.xlu0 %779
        %v783 = vadd.f32 %v769, %v778
        %v784 = vadd.f32 %v770, %v780
        %s785 = sld [smem:[#allocation7 + $0x26]]
        %v786 = vld [vmem:[%s422 + $0x1] sm:$0xff]
        %v787 = vld [vmem:[%s422 + $0x9] sm:$0xff]
        %v788 = vstv %s785
        %v789 = vmul.f32 %v788, %v786
        %v790 = vmul.f32 %v788, %v787
        %v791 = vadd.f32 %v783, %v789
        %v792 = vadd.f32 %v784, %v790
        %s793 = sld [smem:[#allocation7 + $0x27]]
        %v794 = vstv %s793
        %v795 = vmul.f32 %v794, %v786
        %v796 = vmul.f32 %v794, %v787
        %799 = vrot.lane.b32.xlu0 %v795, 127
        %v800 = vpop.permute.xlu0 %799
        %801 = vrot.lane.b32.xlu0 %v796, 127
        %v802 = vpop.permute.xlu0 %801
        %v805 = vadd.f32 %v791, %v800
        %v806 = vadd.f32 %v792, %v802
        %s807 = sld [smem:[#allocation7 + $0x28]]
        %v808 = vstv %s807
        %v809 = vmul.f32 %v808, %v786
        %v810 = vmul.f32 %v808, %v787
        %813 = vrot.lane.b32.xlu0 %v809, 126
        %v814 = vpop.permute.xlu0 %813
        %815 = vrot.lane.b32.xlu0 %v810, 126
        %v816 = vpop.permute.xlu0 %815
        %v819 = vadd.f32 %v805, %v814
        %v820 = vadd.f32 %v806, %v816
        %s821 = sld [smem:[#allocation7 + $0x29]]
        %v822 = vld [vmem:[%s422 + $0x2] sm:$0xff]
        %v823 = vld [vmem:[%s422 + $0xa] sm:$0xff]
        %v824 = vstv %s821
        %v825 = vmul.f32 %v824, %v822
        %v826 = vmul.f32 %v824, %v823
        %v827 = vadd.f32 %v819, %v825
        %v828 = vadd.f32 %v820, %v826
        %s829 = sld [smem:[#allocation7 + $0x2a]]
        %v830 = vstv %s829
        %v831 = vmul.f32 %v830, %v822
        %v832 = vmul.f32 %v830, %v823
        %835 = vrot.lane.b32.xlu0 %v831, 127
        %v836 = vpop.permute.xlu0 %835
        %837 = vrot.lane.b32.xlu0 %v832, 127
        %v838 = vpop.permute.xlu0 %837
        %v841 = vadd.f32 %v827, %v836
        %v842 = vadd.f32 %v828, %v838
        %s843 = sld [smem:[#allocation7 + $0x2b]]
        %v844 = vstv %s843
        %v845 = vmul.f32 %v844, %v822
        %v846 = vmul.f32 %v844, %v823
        %849 = vrot.lane.b32.xlu0 %v845, 126
        %v850 = vpop.permute.xlu0 %849
        %851 = vrot.lane.b32.xlu0 %v846, 126
        %v852 = vpop.permute.xlu0 %851
        %v855 = vadd.f32 %v841, %v850
        %v856 = vadd.f32 %v842, %v852
        %s857 = sld [smem:[#allocation7 + $0x2c]]
        %v858 = vstv %s857
        %v859 = vadd.f32 %v855, %v858
        %v860 = vadd.f32 %v856, %v858
        %v861 = vxor.u32 %v859, 2147483648
        %v862 = vxor.u32 %v860, 2147483648
        %v863 = vmul.f32 %v861, 1.442695
        %v864 = vpow.pop %v863
        %v865 = vmul.f32 %v862, 1.442695
        %v866 = vpow.pop %v865
        %v867 = vadd.f32 %v864, 1.0
        %v868 = vadd.f32 %v866, 1.0
        %v869 = vrcp.pop %v867
        %v870 = vmul.f32 1.0, %v869
        %v871 = vrcp.pop %v868
        %v872 = vmul.f32 1.0, %v871
        %vm873 = vcmask 130048
        %874 = vst.msk [vmem:[%s211] sm:$0xff] %vm873, %v870
        %875 = vst.msk [vmem:[%s211 + $0x8] sm:$0xff] %vm873, %v872
        %s876 = sand.u32 %s98, 1
        %s877 = scalar_lea.sflag [#allocation5], %s876
        %s878 = sand.u32 %s98, 1
        %s879 = smul.addr %s878, 16
        %s880 = scalar_lea.vmem [#allocation10], %s879
        // Predicated region
        $region45: #{_forward_impl.3} parent=31 // pred_check
          %p881 = pneg %p108
        $region46: #{_forward_impl.3} parent=31 // pred_check_branch
          %883 = sbr.rel (%p881) target = $region48
        $region47: #{_forward_impl.3} parent=31 // pred_region
          %s885 = ssub.s32 256, 256
          %886 = vsyncadd %s877, %s885
          %s887 = smul.addr %s22, 2
          %s888 = smul.addr %s887, 128
          %s889 = scalar_lea.hbm %s3, %s888
          %s890 = sshll.u32 %s880, 4
          %s891 = int_to_ptr.vmem [resolvable:$true] %s890
          %896 = dma.vmem_to_hbm [thread:$0]  %s891, 256, %s889, %s877, 128, 128, 8
        $region48: #{_forward_impl.3} parent=31 // pred_fallthru
          _
      $region32: #{_forward_impl.3} parent=5 // pred_fallthru
        _
      %p897 = scmp.le.s32.totalorder 2, %s17
      // Predicated region
      $region49: #{_forward_impl.3} parent=5 // pred_check
        %p898 = pneg %p897
      $region50: #{_forward_impl.3} parent=5 // pred_check_branch
        %900 = sbr.rel (%p898) target = $region52
      $region51: #{_forward_impl.3} parent=5 // pred_region
        %s901 = ssub.s32 %s17, 2
        // Predicated region
        $region53: #{_forward_impl.3} parent=51 // pred_check
          %p902 = pneg %p114
        $region54: #{_forward_impl.3} parent=51 // pred_check_branch
          %904 = sbr.rel (%p902) target = $region56
        $region55: #{_forward_impl.3} parent=51 // pred_region
          %s905 = sand.u32 %s99, 1
          %s906 = scalar_lea.sflag [#allocation5], %s905
          %s907 = sand.u32 %s99, 1
          %s908 = smul.addr %s907, 16
          %s909 = scalar_lea.vmem [#allocation10], %s908
          %910 = dma.done %s906, 256
        $region56: #{_forward_impl.3} parent=51 // pred_fallthru
          _
      $region52: #{_forward_impl.3} parent=5 // pred_fallthru
        _
    $region6: #{_forward_impl.3} parent=1 // loop_footer
      %s21 = sadd.s32 1, %s17
    $region7: #{_forward_impl.3} parent=1 // loop_footer_branch
      %16 = sbr.rel target = $region3
    $region8: #{_forward_impl.3} parent=1 // loop_exit
      _
    %911 = vsyncpa [#allocation4], 1
    %s912 = scalar_lea.sflag [#allocation4], 1
    %913 = vsyncpa %s912, 1
    %914 = vsyncpa [#allocation5], 1
    %s915 = scalar_lea.sflag [#allocation5], 1
    %916 = vsyncpa %s915, 1
    %917 = vsyncpa [#allocation6], 1
    %s918 = scalar_lea.sflag [#allocation6], 1
    %919 = vsyncpa %s918, 1
    %920 = vsyncpa [#allocation8], 1

// kernel: _forward_impl.2
$region0: #{_forward_impl.2}
  #allocation0 [shape = 'u32[]', space=smem, size = 0x4, offset = 0x4, fixed_abs, tag = 'smem constant byte address 0x4 - core index']
  #allocation1 [shape = 'u32[144,128]{1,0:T(1,128)}', space=vmem, size = 0x12000, scoped, tag = 'internal scratch']
  #allocation2 [shape = 'f32[4,18,18]{2,1,0:T(8,128)}', space=vmem, size = 0xc000, scoped, tag = 'scratch operand']
  %s0 = inlined_call_operand.hbm [shape: f32[36,64], index: 0, kind: input, shape index: {}]
  %s1 = inlined_call_operand.hbm [shape: f32[2,4,16,16], index: 1, kind: input, shape index: {}]
  %s2 = inlined_call_operand.hbm [shape: f32[2,16,64], index: 2, kind: output, shape index: {0}]
  %s3 = inlined_call_operand.hbm [shape: f32[2,2,4], index: 3, kind: output, shape index: {1}]
  %4 = xla_tuple %s2, %s3
  %s5 = sld [smem:[#allocation0]]
  $region57: #{_forward_impl.2} parent=0
    _
  %s7 = ssub.s32 1, %s5
  %s8 = scalar_select 0, %s7, %s5
  $region1: #{_forward_impl.2} parent=0
    #allocation3 [shape = 'u8[20480]{0}', space=vmem, size = 0x5000, scoped, tag = 'input window, operand 0, single buffered']
    #allocation4 [shape = 's32[2]{0}', space=sflag, size = 0x8, scoped, tag = 'scoped memory for _forward_impl.2']
    #allocation5 [shape = 's32[2]{0}', space=sflag, size = 0x8, scoped, tag = 'scoped memory for _forward_impl.2']
    #allocation6 [shape = 'u8[65536]{0}', space=vmem, size = 0x10000, scoped, tag = 'input window, operand 1']
    #allocation7 [shape = 's32[2]{0}', space=sflag, size = 0x8, scoped, tag = 'scoped memory for _forward_impl.2']
    #allocation8 [shape = 'u8[16384]{0}', space=vmem, size = 0x4000, scoped, tag = 'output window, operand 0']
    #allocation9 [shape = 'u8[2048]{0}', space=vmem, size = 0x800, scoped, tag = 'output window, operand 1']
    #allocation10 [shape = 's32[2]{0}', space=sflag, size = 0x8, scoped, tag = 'scoped memory for _forward_impl.2']
    %9 = vsyncpa [#allocation4], 0
    %10 = vsyncpa [#allocation7], 0
    %s11 = scalar_lea.sflag [#allocation7], 1
    %12 = vsyncpa %s11, 0
    %13 = vsyncpa [#allocation5], 0
    %s14 = scalar_lea.sflag [#allocation5], 1
    %15 = vsyncpa %s14, 0
    %16 = vsyncpa [#allocation10], 0
    %s17 = scalar_lea.sflag [#allocation10], 1
    %18 = vsyncpa %s17, 0
    loop: start=0, step=1, limit=4
    $region2: #{_forward_impl.2} parent=1 // loop_pre_header
      _
    $region3: #{_forward_impl.2} parent=1 // loop_header
      %s20 = sphi 0, %s24
      %p21 = scmp.ge.s32.totalorder %s20, 4
      %s28 = sphi 0, %s28
      %s30 = sphi 0, %s28
      %s31 = sphi 0, %s30
      %s45 = sphi 0, %s31
      %s51 = sphi 0, %s53
      %s54 = sphi 0, %s51
      %s55 = sphi 0, %s54
      %s71 = sphi 0, %s55
      %s77 = sphi 0, %s79
      %s80 = sphi 0, %s77
      %s81 = sphi 0, %s80
      %s97 = sphi 0, %s81
      %s103 = sphi 0, %s105
      %s106 = sphi 0, %s103
      %s107 = sphi 0, %s106
      %s123 = sphi 0, %s107
    $region4: #{_forward_impl.2} parent=1 // loop_header_branch
      %23 = sbr.rel (%p21) target = $region8
    $region5: #{_forward_impl.2} parent=1 // loop_body
      %s25 = ssub.s32 %s20, 1
      %s26 = ssub.s32 %s20, 2
      %s27 = sadd.s32 %s20, 1
      %s29 = sadd.s32 %s28, 1
      %p32 = scmp.eq.s32.totalorder %s20, 1
      %p33 = scmp.ne.s32.totalorder %s28, %s30
      %p34 = scmp.eq.s32.totalorder %s20, 0
      %p35 = por %p33, %p34
      %p36 = scmp.ne.s32.totalorder %s28, %s30
      %p37 = scmp.eq.s32.totalorder %s25, 1
      %p38 = por %p36, %p37
      %p39 = scmp.ne.s32.totalorder %s30, %s31
      %p40 = scmp.eq.s32.totalorder %s25, 0
      %p41 = por %p39, %p40
      %p42 = scmp.ne.s32.totalorder %s30, %s31
      %p43 = scmp.eq.s32.totalorder %s26, 1
      %p44 = por %p42, %p43
      %p46 = scmp.ne.s32.totalorder %s31, %s45
      %p47 = scmp.eq.s32.totalorder %s26, 0
      %p48 = por %p46, %p47
      %s49 = ssub.s32 %s20, %s27
      %p50 = scmp.eq.s32.totalorder %s49, 0
      %s52 = sadd.s32 %s51, 1
      %s53 = scalar_select %p50, %s51, %s52
      %p56 = pneg %p50
      %p57 = scmp.eq.s32.totalorder %s20, 1
      %p58 = por %p56, %p57
      %p59 = scmp.ne.s32.totalorder %s51, %s54
      %p60 = scmp.eq.s32.totalorder %s20, 0
      %p61 = por %p59, %p60
      %p62 = scmp.ne.s32.totalorder %s51, %s54
      %p63 = scmp.eq.s32.totalorder %s25, 1
      %p64 = por %p62, %p63
      %p65 = scmp.ne.s32.totalorder %s54, %s55
      %p66 = scmp.eq.s32.totalorder %s25, 0
      %p67 = por %p65, %p66
      %p68 = scmp.ne.s32.totalorder %s54, %s55
      %p69 = scmp.eq.s32.totalorder %s26, 1
      %p70 = por %p68, %p69
      %p72 = scmp.ne.s32.totalorder %s55, %s71
      %p73 = scmp.eq.s32.totalorder %s26, 0
      %p74 = por %p72, %p73
      %s75 = ssub.s32 %s20, %s27
      %p76 = scmp.eq.s32.totalorder %s75, 0
      %s78 = sadd.s32 %s77, 1
      %s79 = scalar_select %p76, %s77, %s78
      %p82 = pneg %p76
      %p83 = scmp.eq.s32.totalorder %s20, 1
      %p84 = por %p82, %p83
      %p85 = scmp.ne.s32.totalorder %s77, %s80
      %p86 = scmp.eq.s32.totalorder %s20, 0
      %p87 = por %p85, %p86
      %p88 = scmp.ne.s32.totalorder %s77, %s80
      %p89 = scmp.eq.s32.totalorder %s25, 1
      %p90 = por %p88, %p89
      %p91 = scmp.ne.s32.totalorder %s80, %s81
      %p92 = scmp.eq.s32.totalorder %s25, 0
      %p93 = por %p91, %p92
      %p94 = scmp.ne.s32.totalorder %s80, %s81
      %p95 = scmp.eq.s32.totalorder %s26, 1
      %p96 = por %p94, %p95
      %p98 = scmp.ne.s32.totalorder %s81, %s97
      %p99 = scmp.eq.s32.totalorder %s26, 0
      %p100 = por %p98, %p99
      %s101 = ssub.s32 %s20, %s27
      %p102 = scmp.eq.s32.totalorder %s101, 0
      %s104 = sadd.s32 %s103, 1
      %s105 = scalar_select %p102, %s103, %s104
      %p108 = pneg %p102
      %p109 = scmp.eq.s32.totalorder %s20, 1
      %p110 = por %p108, %p109
      %p111 = scmp.ne.s32.totalorder %s103, %s106
      %p112 = scmp.eq.s32.totalorder %s20, 0
      %p113 = por %p111, %p112
      %p114 = scmp.ne.s32.totalorder %s103, %s106
      %p115 = scmp.eq.s32.totalorder %s25, 1
      %p116 = por %p114, %p115
      %p117 = scmp.ne.s32.totalorder %s106, %s107
      %p118 = scmp.eq.s32.totalorder %s25, 0
      %p119 = por %p117, %p118
      %p120 = scmp.ne.s32.totalorder %s106, %s107
      %p121 = scmp.eq.s32.totalorder %s26, 1
      %p122 = por %p120, %p121
      %p124 = scmp.ne.s32.totalorder %s107, %s123
      %p125 = scmp.eq.s32.totalorder %s26, 0
      %p126 = por %p124, %p125
      %p127 = scmp.le.s32.totalorder 1, %s20
      %p128 = scmp.lt.s32.totalorder %s20, 3
      %p129 = pnand %p127, %p128
      %p130 = pneg %p129
      // Predicated region
      $region9: #{_forward_impl.2} parent=5 // pred_check
        _
      $region10: #{_forward_impl.2} parent=5 // pred_check_branch
        %132 = sbr.rel (%p129) target = $region12
      $region11: #{_forward_impl.2} parent=5 // pred_region
        %s133 = ssub.s32 %s20, 1
        // Predicated region
        $region13: #{_forward_impl.2} parent=11 // pred_check
          %p134 = pneg %p41
        $region14: #{_forward_impl.2} parent=11 // pred_check_branch
          %136 = sbr.rel (%p134) target = $region16
        $region15: #{_forward_impl.2} parent=11 // pred_region
          %s138 = ssub.s32 640, 640
          %139 = vsyncadd [#allocation4], %s138
          %s140 = sshll.u32 [#allocation3], 4
          %s141 = int_to_ptr.vmem [resolvable:$true] %s140
          %146 = dma.hbm_to_vmem [thread:$0]  %s0, 640, %s141, [#allocation4], 128, 128, 8
        $region16: #{_forward_impl.2} parent=11 // pred_fallthru
          _
      $region12: #{_forward_impl.2} parent=5 // pred_fallthru
        _
      %p147 = scmp.lt.s32.totalorder %s20, 2
      // Predicated region
      $region17: #{_forward_impl.2} parent=5 // pred_check
        %p148 = pneg %p147
      $region18: #{_forward_impl.2} parent=5 // pred_check_branch
        %150 = sbr.rel (%p148) target = $region20
      $region19: #{_forward_impl.2} parent=5 // pred_region
        // Predicated region
        $region21: #{_forward_impl.2} parent=19 // pred_check
          %p151 = pneg %p61
        $region22: #{_forward_impl.2} parent=19 // pred_check_branch
          %153 = sbr.rel (%p151) target = $region24
        $region23: #{_forward_impl.2} parent=19 // pred_region
          %s154 = sand.u32 %s51, 1
          %s155 = scalar_lea.sflag [#allocation7], %s154
          %s156 = sand.u32 %s51, 1
          %s157 = smul.addr %s156, 64
          %s158 = scalar_lea.vmem [#allocation6], %s157
          %s160 = ssub.s32 1024, 1024
          %161 = vsyncadd %s155, %s160
          %s162 = smul.addr %s20, 8
          %s163 = smul.addr %s162, 128
          %s164 = scalar_lea.hbm %s1, %s163
          %s165 = sshll.u32 %s158, 4
          %s166 = int_to_ptr.vmem [resolvable:$true] %s165
          %171 = dma.hbm_to_vmem [thread:$0]  %s164, 1024, %s166, %s155, 128, 128, 8
        $region24: #{_forward_impl.2} parent=19 // pred_fallthru
          _
      $region20: #{_forward_impl.2} parent=5 // pred_fallthru
        _
      %p172 = scmp.le.s32.totalorder 1, %s20
      %p173 = scmp.lt.s32.totalorder %s20, 3
      %p174 = pnand %p172, %p173
      %p175 = pneg %p174
      // Predicated region
      $region25: #{_forward_impl.2} parent=5 // pred_check
        _
      $region26: #{_forward_impl.2} parent=5 // pred_check_branch
        %177 = sbr.rel (%p174) target = $region28
      $region27: #{_forward_impl.2} parent=5 // pred_region
        %s178 = ssub.s32 %s20, 1
        // Predicated region
        $region29: #{_forward_impl.2} parent=27 // pred_check
          %p179 = pneg %p41
        $region30: #{_forward_impl.2} parent=27 // pred_check_branch
          %181 = sbr.rel (%p179) target = $region32
        $region31: #{_forward_impl.2} parent=27 // pred_region
          %182 = dma.done [#allocation4], 640
        $region32: #{_forward_impl.2} parent=27 // pred_fallthru
          _
        %s183 = sand.u32 %s54, 1
        %s184 = scalar_lea.sflag [#allocation7], %s183
        %s185 = sand.u32 %s54, 1
        %s186 = smul.addr %s185, 64
        %s187 = scalar_lea.vmem [#allocation6], %s186
        // Predicated region
        $region33: #{_forward_impl.2} parent=27 // pred_check
          %p188 = pneg %p67
        $region34: #{_forward_impl.2} parent=27 // pred_check_branch
          %190 = sbr.rel (%p188) target = $region36
        $region35: #{_forward_impl.2} parent=27 // pred_region
          %191 = dma.done %s184, 1024
        $region36: #{_forward_impl.2} parent=27 // pred_fallthru
          _
        %p192 = pneg %p41
        %p193 = pneg %p38
        %s194 = sand.u32 %s54, 1
        %s195 = scalar_lea.sflag [#allocation7], %s194
        %s196 = sand.u32 %s54, 1
        %s197 = smul.addr %s196, 64
        %s198 = scalar_lea.vmem [#allocation6], %s197
        %p199 = pneg %p67
        %p200 = pneg %p64
        %p201 = pneg %p93
        %p202 = pneg %p90
        %s203 = sand.u32 %s80, 1
        %s204 = scalar_lea.sflag [#allocation5], %s203
        %s205 = sand.u32 %s80, 1
        %s206 = smul.addr %s205, 16
        %s207 = scalar_lea.vmem [#allocation8], %s206
        %p208 = pneg %p119
        %p209 = pneg %p116
        %s210 = sand.u32 %s106, 1
        %s211 = scalar_lea.sflag [#allocation10], %s210
        %s212 = sand.u32 %s106, 1
        %s213 = smul.addr %s212, 2
        %s214 = scalar_lea.vmem [#allocation9], %s213
        %vm215 = vcmask 139264
        %216 = vst.msk [vmem:[#allocation2] sm:$0x1] %vm215, 0.0
        %217 = vst.msk [vmem:[#allocation2 + $0x18] sm:$0x1] %vm215, 0.0
        %218 = vst.msk [vmem:[#allocation2 + $0x30] sm:$0x1] %vm215, 0.0
        %219 = vst.msk [vmem:[#allocation2 + $0x48] sm:$0x1] %vm215, 0.0
        %220 = vst.msk [vmem:[#allocation2 + $0x11] sm:$0x1] %vm215, 0.0
        %221 = vst.msk [vmem:[#allocation2 + $0x29] sm:$0x1] %vm215, 0.0
        %222 = vst.msk [vmem:[#allocation2 + $0x41] sm:$0x1] %vm215, 0.0
        %223 = vst.msk [vmem:[#allocation2 + $0x59] sm:$0x1] %vm215, 0.0
        %vm224 = vcmask 7168
        %225 = vst.msk [vmem:[#allocation2] sm:$0xff] %vm224, 0.0
        %226 = vst.msk [vmem:[#allocation2 + $0x8] sm:$0xff] %vm224, 0.0
        %vm227 = vcmask 1024
        %228 = vst.msk [vmem:[#allocation2 + $0x10] sm:$0x3] %vm227, 0.0
        %229 = vst.msk [vmem:[#allocation2 + $0x18] sm:$0xff] %vm224, 0.0
        %230 = vst.msk [vmem:[#allocation2 + $0x20] sm:$0xff] %vm224, 0.0
        %231 = vst.msk [vmem:[#allocation2 + $0x28] sm:$0x3] %vm227, 0.0
        %232 = vst.msk [vmem:[#allocation2 + $0x30] sm:$0xff] %vm224, 0.0
        %233 = vst.msk [vmem:[#allocation2 + $0x38] sm:$0xff] %vm224, 0.0
        %234 = vst.msk [vmem:[#allocation2 + $0x40] sm:$0x3] %vm227, 0.0
        %235 = vst.msk [vmem:[#allocation2 + $0x48] sm:$0xff] %vm224, 0.0
        %236 = vst.msk [vmem:[#allocation2 + $0x50] sm:$0xff] %vm224, 0.0
        %237 = vst.msk [vmem:[#allocation2 + $0x58] sm:$0x3] %vm227, 0.0
        %vm238 = vcmask 146568
        %239 = vst.msk [vmem:[#allocation2] sm:$0xff] %vm238, 0.0
        %240 = vst.msk [vmem:[#allocation2 + $0x8] sm:$0xff] %vm238, 0.0
        %vm241 = vcmask 140424
        %242 = vst.msk [vmem:[#allocation2 + $0x10] sm:$0x3] %vm241, 0.0
        %243 = vst.msk [vmem:[#allocation2 + $0x18] sm:$0xff] %vm238, 0.0
        %244 = vst.msk [vmem:[#allocation2 + $0x20] sm:$0xff] %vm238, 0.0
        %245 = vst.msk [vmem:[#allocation2 + $0x28] sm:$0x3] %vm241, 0.0
        %246 = vst.msk [vmem:[#allocation2 + $0x30] sm:$0xff] %vm238, 0.0
        %247 = vst.msk [vmem:[#allocation2 + $0x38] sm:$0xff] %vm238, 0.0
        %248 = vst.msk [vmem:[#allocation2 + $0x40] sm:$0x3] %vm241, 0.0
        %249 = vst.msk [vmem:[#allocation2 + $0x48] sm:$0xff] %vm238, 0.0
        %250 = vst.msk [vmem:[#allocation2 + $0x50] sm:$0xff] %vm238, 0.0
        %251 = vst.msk [vmem:[#allocation2 + $0x58] sm:$0x3] %vm241, 0.0
        %v252 = vld [vmem:[%s187] sm:$0xff]
        %v253 = vld [vmem:[%s187 + $0x8] sm:$0xff]
        %256 = vrot.lane.b32.xlu0 %v252, 1
        %v257 = vpop.permute.xlu0 %256
        %258 = vrot.lane.b32.xlu0 %v253, 1
        %v259 = vpop.permute.xlu0 %258
        %vm262 = vcmask 138248
        %263 = vst.msk [vmem:[#allocation2 + $0x1] sm:$0xff] %vm262, %v257
        %264 = vst.msk [vmem:[#allocation2 + $0x9] sm:$0xff] %vm262, %v259
        %s265 = scalar_lea.vmem %s187, 16 [#allocation6]
        %v266 = vld [vmem:[%s265] sm:$0xff]
        %v267 = vld [vmem:[%s265 + $0x8] sm:$0xff]
        %270 = vrot.lane.b32.xlu0 %v266, 1
        %v271 = vpop.permute.xlu0 %270
        %272 = vrot.lane.b32.xlu0 %v267, 1
        %v273 = vpop.permute.xlu0 %272
        %s276 = scalar_lea.vmem [#allocation2], 24
        %277 = vst.msk [vmem:[%s276 + $0x1] sm:$0xff] %vm262, %v271
        %278 = vst.msk [vmem:[%s276 + $0x9] sm:$0xff] %vm262, %v273
        %s279 = scalar_lea.vmem %s187, 32 [#allocation6]
        %v280 = vld [vmem:[%s279] sm:$0xff]
        %v281 = vld [vmem:[%s279 + $0x8] sm:$0xff]
        %284 = vrot.lane.b32.xlu0 %v280, 1
        %v285 = vpop.permute.xlu0 %284
        %286 = vrot.lane.b32.xlu0 %v281, 1
        %v287 = vpop.permute.xlu0 %286
        %s290 = scalar_lea.vmem [#allocation2], 48
        %291 = vst.msk [vmem:[%s290 + $0x1] sm:$0xff] %vm262, %v285
        %292 = vst.msk [vmem:[%s290 + $0x9] sm:$0xff] %vm262, %v287
        %s293 = scalar_lea.vmem %s187, 48 [#allocation6]
        %v294 = vld [vmem:[%s293] sm:$0xff]
        %v295 = vld [vmem:[%s293 + $0x8] sm:$0xff]
        %298 = vrot.lane.b32.xlu0 %v294, 1
        %v299 = vpop.permute.xlu0 %298
        %300 = vrot.lane.b32.xlu0 %v295, 1
        %v301 = vpop.permute.xlu0 %300
        %s304 = scalar_lea.vmem [#allocation2], 72
        %305 = vst.msk [vmem:[%s304 + $0x1] sm:$0xff] %vm262, %v299
        %306 = vst.msk [vmem:[%s304 + $0x9] sm:$0xff] %vm262, %v301
        %v307 = vld [vmem:[#allocation2] sm:$0xff]
        %v308 = vld [vmem:[#allocation2 + $0x8] sm:$0xff]
        %311 = vrot.lane.b32.xlu0 %v307, 16
        %v312 = vpop.permute.xlu0 %311
        %313 = vrot.lane.b32.xlu0 %v308, 16
        %v314 = vpop.permute.xlu0 %313
        %317 = vrot.lane.b32.xlu0 %v307, 32
        %v318 = vpop.permute.xlu0 %317
        %319 = vrot.lane.b32.xlu0 %v308, 32
        %v320 = vpop.permute.xlu0 %319
        %323 = vrot.lane.b32.xlu0 %v307, 48
        %v324 = vpop.permute.xlu0 %323
        %325 = vrot.lane.b32.xlu0 %v308, 48
        %v326 = vpop.permute.xlu0 %325
        %vm329 = vcmask 130048
        %v330 = vsel %vm329, %v307, %v312
        %v331 = vsel %vm329, %v308, %v314
        %vm332 = vcmask 261120
        %v333 = vsel %vm332, %v330, %v318
        %v334 = vsel %vm332, %v331, %v320
        %vm335 = vcmask 392192
        %v336 = vsel %vm335, %v333, %v324
        %v337 = vsel %vm335, %v334, %v326
        %v338 = vld [vmem:[#allocation3] sm:$0x1]
        %v339 = vlaneseq
        %v340 = vshrl.u32 %v339, 7
        %v341 = vsub.s32 0, %v340
        %v342 = vrot.slane %v338, %v341
        %v343 = vmul.f32 %v342, %v336
        %v344 = vmul.f32 %v342, %v337
        %v345 = vadd.f32 %v343, 0.0
        %v346 = vadd.f32 %v344, 0.0
        %347 = vrot.lane.b32.xlu0 %v307, 127
        %v348 = vpop.permute.xlu0 %347
        %349 = vrot.lane.b32.xlu0 %v308, 127
        %v350 = vpop.permute.xlu0 %349
        %353 = vrot.lane.b32.xlu0 %v307, 15
        %v354 = vpop.permute.xlu0 %353
        %355 = vrot.lane.b32.xlu0 %v308, 15
        %v356 = vpop.permute.xlu0 %355
        %359 = vrot.lane.b32.xlu0 %v307, 31
        %v360 = vpop.permute.xlu0 %359
        %361 = vrot.lane.b32.xlu0 %v308, 31
        %v362 = vpop.permute.xlu0 %361
        %365 = vrot.lane.b32.xlu0 %v307, 47
        %v366 = vpop.permute.xlu0 %365
        %367 = vrot.lane.b32.xlu0 %v308, 47
        %v368 = vpop.permute.xlu0 %367
        %v371 = vsel %vm329, %v348, %v354
        %v372 = vsel %vm329, %v350, %v356
        %v373 = vsel %vm332, %v371, %v360
        %v374 = vsel %vm332, %v372, %v362
        %v375 = vsel %vm335, %v373, %v366
        %v376 = vsel %vm335, %v374, %v368
        %v377 = vld [vmem:[#allocation3 + $0x1] sm:$0x1]
        %v378 = vlaneseq
        %v379 = vshrl.u32 %v378, 7
        %v380 = vsub.s32 0, %v379
        %v381 = vrot.slane %v377, %v380
        %v382 = vmul.f32 %v381, %v375
        %v383 = vmul.f32 %v381, %v376
        %v384 = vadd.f32 %v345, %v382
        %v385 = vadd.f32 %v346, %v383
        %386 = vrot.lane.b32.xlu0 %v307, 126
        %v387 = vpop.permute.xlu0 %386
        %388 = vrot.lane.b32.xlu0 %v308, 126
        %v389 = vpop.permute.xlu0 %388
        %392 = vrot.lane.b32.xlu0 %v307, 14
        %v393 = vpop.permute.xlu0 %392
        %394 = vrot.lane.b32.xlu0 %v308, 14
        %v395 = vpop.permute.xlu0 %394
        %398 = vrot.lane.b32.xlu0 %v307, 30
        %v399 = vpop.permute.xlu0 %398
        %400 = vrot.lane.b32.xlu0 %v308, 30
        %v401 = vpop.permute.xlu0 %400
        %404 = vrot.lane.b32.xlu0 %v307, 46
        %v405 = vpop.permute.xlu0 %404
        %406 = vrot.lane.b32.xlu0 %v308, 46
        %v407 = vpop.permute.xlu0 %406
        %v410 = vsel %vm329, %v387, %v393
        %v411 = vsel %vm329, %v389, %v395
        %v412 = vsel %vm332, %v410, %v399
        %v413 = vsel %vm332, %v411, %v401
        %v414 = vsel %vm335, %v412, %v405
        %v415 = vsel %vm335, %v413, %v407
        %v416 = vld [vmem:[#allocation3 + $0x2] sm:$0x1]
        %v417 = vlaneseq
        %v418 = vshrl.u32 %v417, 7
        %v419 = vsub.s32 0, %v418
        %v420 = vrot.slane %v416, %v419
        %v421 = vmul.f32 %v420, %v414
        %v422 = vmul.f32 %v420, %v415
        %v423 = vadd.f32 %v384, %v421
        %v424 = vadd.f32 %v385, %v422
        %v425 = vld [vmem:[#allocation2 + $0x1] sm:$0xff]
        %v426 = vld [vmem:[#allocation2 + $0x9] sm:$0xff]
        %429 = vrot.lane.b32.xlu0 %v425, 16
        %v430 = vpop.permute.xlu0 %429
        %431 = vrot.lane.b32.xlu0 %v426, 16
        %v432 = vpop.permute.xlu0 %431
        %435 = vrot.lane.b32.xlu0 %v425, 32
        %v436 = vpop.permute.xlu0 %435
        %437 = vrot.lane.b32.xlu0 %v426, 32
        %v438 = vpop.permute.xlu0 %437
        %441 = vrot.lane.b32.xlu0 %v425, 48
        %v442 = vpop.permute.xlu0 %441
        %443 = vrot.lane.b32.xlu0 %v426, 48
        %v444 = vpop.permute.xlu0 %443
        %v447 = vsel %vm329, %v425, %v430
        %v448 = vsel %vm329, %v426, %v432
        %v449 = vsel %vm332, %v447, %v436
        %v450 = vsel %vm332, %v448, %v438
        %v451 = vsel %vm335, %v449, %v442
        %v452 = vsel %vm335, %v450, %v444
        %v453 = vld [vmem:[#allocation3 + $0x3] sm:$0x1]
        %v454 = vlaneseq
        %v455 = vshrl.u32 %v454, 7
        %v456 = vsub.s32 0, %v455
        %v457 = vrot.slane %v453, %v456
        %v458 = vmul.f32 %v457, %v451
        %v459 = vmul.f32 %v457, %v452
        %v460 = vadd.f32 %v423, %v458
        %v461 = vadd.f32 %v424, %v459
        %462 = vrot.lane.b32.xlu0 %v425, 127
        %v463 = vpop.permute.xlu0 %462
        %464 = vrot.lane.b32.xlu0 %v426, 127
        %v465 = vpop.permute.xlu0 %464
        %468 = vrot.lane.b32.xlu0 %v425, 15
        %v469 = vpop.permute.xlu0 %468
        %470 = vrot.lane.b32.xlu0 %v426, 15
        %v471 = vpop.permute.xlu0 %470
        %474 = vrot.lane.b32.xlu0 %v425, 31
        %v475 = vpop.permute.xlu0 %474
        %476 = vrot.lane.b32.xlu0 %v426, 31
        %v477 = vpop.permute.xlu0 %476
        %480 = vrot.lane.b32.xlu0 %v425, 47
        %v481 = vpop.permute.xlu0 %480
        %482 = vrot.lane.b32.xlu0 %v426, 47
        %v483 = vpop.permute.xlu0 %482
        %v486 = vsel %vm329, %v463, %v469
        %v487 = vsel %vm329, %v465, %v471
        %v488 = vsel %vm332, %v486, %v475
        %v489 = vsel %vm332, %v487, %v477
        %v490 = vsel %vm335, %v488, %v481
        %v491 = vsel %vm335, %v489, %v483
        %v492 = vld [vmem:[#allocation3 + $0x4] sm:$0x1]
        %v493 = vlaneseq
        %v494 = vshrl.u32 %v493, 7
        %v495 = vsub.s32 0, %v494
        %v496 = vrot.slane %v492, %v495
        %v497 = vmul.f32 %v496, %v490
        %v498 = vmul.f32 %v496, %v491
        %v499 = vadd.f32 %v460, %v497
        %v500 = vadd.f32 %v461, %v498
        %501 = vrot.lane.b32.xlu0 %v425, 126
        %v502 = vpop.permute.xlu0 %501
        %503 = vrot.lane.b32.xlu0 %v426, 126
        %v504 = vpop.permute.xlu0 %503
        %507 = vrot.lane.b32.xlu0 %v425, 14
        %v508 = vpop.permute.xlu0 %507
        %509 = vrot.lane.b32.xlu0 %v426, 14
        %v510 = vpop.permute.xlu0 %509
        %513 = vrot.lane.b32.xlu0 %v425, 30
        %v514 = vpop.permute.xlu0 %513
        %515 = vrot.lane.b32.xlu0 %v426, 30
        %v516 = vpop.permute.xlu0 %515
        %519 = vrot.lane.b32.xlu0 %v425, 46
        %v520 = vpop.permute.xlu0 %519
        %521 = vrot.lane.b32.xlu0 %v426, 46
        %v522 = vpop.permute.xlu0 %521
        %v525 = vsel %vm329, %v502, %v508
        %v526 = vsel %vm329, %v504, %v510
        %v527 = vsel %vm332, %v525, %v514
        %v528 = vsel %vm332, %v526, %v516
        %v529 = vsel %vm335, %v527, %v520
        %v530 = vsel %vm335, %v528, %v522
        %v531 = vld [vmem:[#allocation3 + $0x5] sm:$0x1]
        %v532 = vlaneseq
        %v533 = vshrl.u32 %v532, 7
        %v534 = vsub.s32 0, %v533
        %v535 = vrot.slane %v531, %v534
        %v536 = vmul.f32 %v535, %v529
        %v537 = vmul.f32 %v535, %v530
        %v538 = vadd.f32 %v499, %v536
        %v539 = vadd.f32 %v500, %v537
        %v540 = vld [vmem:[#allocation2 + $0x2] sm:$0xff]
        %v541 = vld [vmem:[#allocation2 + $0xa] sm:$0xff]
        %544 = vrot.lane.b32.xlu0 %v540, 16
        %v545 = vpop.permute.xlu0 %544
        %546 = vrot.lane.b32.xlu0 %v541, 16
        %v547 = vpop.permute.xlu0 %546
        %550 = vrot.lane.b32.xlu0 %v540, 32
        %v551 = vpop.permute.xlu0 %550
        %552 = vrot.lane.b32.xlu0 %v541, 32
        %v553 = vpop.permute.xlu0 %552
        %556 = vrot.lane.b32.xlu0 %v540, 48
        %v557 = vpop.permute.xlu0 %556
        %558 = vrot.lane.b32.xlu0 %v541, 48
        %v559 = vpop.permute.xlu0 %558
        %v562 = vsel %vm329, %v540, %v545
        %v563 = vsel %vm329, %v541, %v547
        %v564 = vsel %vm332, %v562, %v551
        %v565 = vsel %vm332, %v563, %v553
        %v566 = vsel %vm335, %v564, %v557
        %v567 = vsel %vm335, %v565, %v559
        %v568 = vld [vmem:[#allocation3 + $0x6] sm:$0x1]
        %v569 = vlaneseq
        %v570 = vshrl.u32 %v569, 7
        %v571 = vsub.s32 0, %v570
        %v572 = vrot.slane %v568, %v571
        %v573 = vmul.f32 %v572, %v566
        %v574 = vmul.f32 %v572, %v567
        %v575 = vadd.f32 %v538, %v573
        %v576 = vadd.f32 %v539, %v574
        %577 = vrot.lane.b32.xlu0 %v540, 127
        %v578 = vpop.permute.xlu0 %577
        %579 = vrot.lane.b32.xlu0 %v541, 127
        %v580 = vpop.permute.xlu0 %579
        %583 = vrot.lane.b32.xlu0 %v540, 15
        %v584 = vpop.permute.xlu0 %583
        %585 = vrot.lane.b32.xlu0 %v541, 15
        %v586 = vpop.permute.xlu0 %585
        %589 = vrot.lane.b32.xlu0 %v540, 31
        %v590 = vpop.permute.xlu0 %589
        %591 = vrot.lane.b32.xlu0 %v541, 31
        %v592 = vpop.permute.xlu0 %591
        %595 = vrot.lane.b32.xlu0 %v540, 47
        %v596 = vpop.permute.xlu0 %595
        %597 = vrot.lane.b32.xlu0 %v541, 47
        %v598 = vpop.permute.xlu0 %597
        %v601 = vsel %vm329, %v578, %v584
        %v602 = vsel %vm329, %v580, %v586
        %v603 = vsel %vm332, %v601, %v590
        %v604 = vsel %vm332, %v602, %v592
        %v605 = vsel %vm335, %v603, %v596
        %v606 = vsel %vm335, %v604, %v598
        %v607 = vld [vmem:[#allocation3 + $0x7] sm:$0x1]
        %v608 = vlaneseq
        %v609 = vshrl.u32 %v608, 7
        %v610 = vsub.s32 0, %v609
        %v611 = vrot.slane %v607, %v610
        %v612 = vmul.f32 %v611, %v605
        %v613 = vmul.f32 %v611, %v606
        %v614 = vadd.f32 %v575, %v612
        %v615 = vadd.f32 %v576, %v613
        %616 = vrot.lane.b32.xlu0 %v540, 126
        %v617 = vpop.permute.xlu0 %616
        %618 = vrot.lane.b32.xlu0 %v541, 126
        %v619 = vpop.permute.xlu0 %618
        %622 = vrot.lane.b32.xlu0 %v540, 14
        %v623 = vpop.permute.xlu0 %622
        %624 = vrot.lane.b32.xlu0 %v541, 14
        %v625 = vpop.permute.xlu0 %624
        %628 = vrot.lane.b32.xlu0 %v540, 30
        %v629 = vpop.permute.xlu0 %628
        %630 = vrot.lane.b32.xlu0 %v541, 30
        %v631 = vpop.permute.xlu0 %630
        %634 = vrot.lane.b32.xlu0 %v540, 46
        %v635 = vpop.permute.xlu0 %634
        %636 = vrot.lane.b32.xlu0 %v541, 46
        %v637 = vpop.permute.xlu0 %636
        %v640 = vsel %vm329, %v617, %v623
        %v641 = vsel %vm329, %v619, %v625
        %v642 = vsel %vm332, %v640, %v629
        %v643 = vsel %vm332, %v641, %v631
        %v644 = vsel %vm335, %v642, %v635
        %v645 = vsel %vm335, %v643, %v637
        %v646 = vld [vmem:[#allocation3 + $0x8] sm:$0x1]
        %v647 = vlaneseq
        %v648 = vshrl.u32 %v647, 7
        %v649 = vsub.s32 0, %v648
        %v650 = vrot.slane %v646, %v649
        %v651 = vmul.f32 %v650, %v644
        %v652 = vmul.f32 %v650, %v645
        %v653 = vadd.f32 %v614, %v651
        %v654 = vadd.f32 %v615, %v652
        %v655 = vld [vmem:[%s276] sm:$0xff]
        %v656 = vld [vmem:[%s276 + $0x8] sm:$0xff]
        %659 = vrot.lane.b32.xlu0 %v655, 16
        %v660 = vpop.permute.xlu0 %659
        %661 = vrot.lane.b32.xlu0 %v656, 16
        %v662 = vpop.permute.xlu0 %661
        %665 = vrot.lane.b32.xlu0 %v655, 32
        %v666 = vpop.permute.xlu0 %665
        %667 = vrot.lane.b32.xlu0 %v656, 32
        %v668 = vpop.permute.xlu0 %667
        %671 = vrot.lane.b32.xlu0 %v655, 48
        %v672 = vpop.permute.xlu0 %671
        %673 = vrot.lane.b32.xlu0 %v656, 48
        %v674 = vpop.permute.xlu0 %673
        %v677 = vsel %vm329, %v655, %v660
        %v678 = vsel %vm329, %v656, %v662
        %v679 = vsel %vm332, %v677, %v666
        %v680 = vsel %vm332, %v678, %v668
        %v681 = vsel %vm335, %v679, %v672
        %v682 = vsel %vm335, %v680, %v674
        %v683 = vld [vmem:[#allocation3 + $0x9] sm:$0x1]
        %v684 = vlaneseq
        %v685 = vshrl.u32 %v684, 7
        %v686 = vsub.s32 0, %v685
        %v687 = vrot.slane %v683, %v686
        %v688 = vmul.f32 %v687, %v681
        %v689 = vmul.f32 %v687, %v682
        %v690 = vadd.f32 %v653, %v688
        %v691 = vadd.f32 %v654, %v689
        %692 = vrot.lane.b32.xlu0 %v655, 127
        %v693 = vpop.permute.xlu0 %692
        %694 = vrot.lane.b32.xlu0 %v656, 127
        %v695 = vpop.permute.xlu0 %694
        %698 = vrot.lane.b32.xlu0 %v655, 15
        %v699 = vpop.permute.xlu0 %698
        %700 = vrot.lane.b32.xlu0 %v656, 15
        %v701 = vpop.permute.xlu0 %700
        %704 = vrot.lane.b32.xlu0 %v655, 31
        %v705 = vpop.permute.xlu0 %704
        %706 = vrot.lane.b32.xlu0 %v656, 31
        %v707 = vpop.permute.xlu0 %706
        %710 = vrot.lane.b32.xlu0 %v655, 47
        %v711 = vpop.permute.xlu0 %710
        %712 = vrot.lane.b32.xlu0 %v656, 47
        %v713 = vpop.permute.xlu0 %712
        %v716 = vsel %vm329, %v693, %v699
        %v717 = vsel %vm329, %v695, %v701
        %v718 = vsel %vm332, %v716, %v705
        %v719 = vsel %vm332, %v717, %v707
        %v720 = vsel %vm335, %v718, %v711
        %v721 = vsel %vm335, %v719, %v713
        %v722 = vld [vmem:[#allocation3 + $0xa] sm:$0x1]
        %v723 = vlaneseq
        %v724 = vshrl.u32 %v723, 7
        %v725 = vsub.s32 0, %v724
        %v726 = vrot.slane %v722, %v725
        %v727 = vmul.f32 %v726, %v720
        %v728 = vmul.f32 %v726, %v721
        %v729 = vadd.f32 %v690, %v727
        %v730 = vadd.f32 %v691, %v728
        %731 = vrot.lane.b32.xlu0 %v655, 126
        %v732 = vpop.permute.xlu0 %731
        %733 = vrot.lane.b32.xlu0 %v656, 126
        %v734 = vpop.permute.xlu0 %733
        %737 = vrot.lane.b32.xlu0 %v655, 14
        %v738 = vpop.permute.xlu0 %737
        %739 = vrot.lane.b32.xlu0 %v656, 14
        %v740 = vpop.permute.xlu0 %739
        %743 = vrot.lane.b32.xlu0 %v655, 30
        %v744 = vpop.permute.xlu0 %743
        %745 = vrot.lane.b32.xlu0 %v656, 30
        %v746 = vpop.permute.xlu0 %745
        %749 = vrot.lane.b32.xlu0 %v655, 46
        %v750 = vpop.permute.xlu0 %749
        %751 = vrot.lane.b32.xlu0 %v656, 46
        %v752 = vpop.permute.xlu0 %751
        %v755 = vsel %vm329, %v732, %v738
        %v756 = vsel %vm329, %v734, %v740
        %v757 = vsel %vm332, %v755, %v744
        %v758 = vsel %vm332, %v756, %v746
        %v759 = vsel %vm335, %v757, %v750
        %v760 = vsel %vm335, %v758, %v752
        %v761 = vld [vmem:[#allocation3 + $0xb] sm:$0x1]
        %v762 = vlaneseq
        %v763 = vshrl.u32 %v762, 7
        %v764 = vsub.s32 0, %v763
        %v765 = vrot.slane %v761, %v764
        %v766 = vmul.f32 %v765, %v759
        %v767 = vmul.f32 %v765, %v760
        %v768 = vadd.f32 %v729, %v766
        %v769 = vadd.f32 %v730, %v767
        %v770 = vld [vmem:[%s276 + $0x1] sm:$0xff]
        %v771 = vld [vmem:[%s276 + $0x9] sm:$0xff]
        %774 = vrot.lane.b32.xlu0 %v770, 16
        %v775 = vpop.permute.xlu0 %774
        %776 = vrot.lane.b32.xlu0 %v771, 16
        %v777 = vpop.permute.xlu0 %776
        %780 = vrot.lane.b32.xlu0 %v770, 32
        %v781 = vpop.permute.xlu0 %780
        %782 = vrot.lane.b32.xlu0 %v771, 32
        %v783 = vpop.permute.xlu0 %782
        %786 = vrot.lane.b32.xlu0 %v770, 48
        %v787 = vpop.permute.xlu0 %786
        %788 = vrot.lane.b32.xlu0 %v771, 48
        %v789 = vpop.permute.xlu0 %788
        %v792 = vsel %vm329, %v770, %v775
        %v793 = vsel %vm329, %v771, %v777
        %v794 = vsel %vm332, %v792, %v781
        %v795 = vsel %vm332, %v793, %v783
        %v796 = vsel %vm335, %v794, %v787
        %v797 = vsel %vm335, %v795, %v789
        %v798 = vld [vmem:[#allocation3 + $0xc] sm:$0x1]
        %v799 = vlaneseq
        %v800 = vshrl.u32 %v799, 7
        %v801 = vsub.s32 0, %v800
        %v802 = vrot.slane %v798, %v801
        %v803 = vmul.f32 %v802, %v796
        %v804 = vmul.f32 %v802, %v797
        %v805 = vadd.f32 %v768, %v803
        %v806 = vadd.f32 %v769, %v804
        %807 = vrot.lane.b32.xlu0 %v770, 127
        %v808 = vpop.permute.xlu0 %807
        %809 = vrot.lane.b32.xlu0 %v771, 127
        %v810 = vpop.permute.xlu0 %809
        %813 = vrot.lane.b32.xlu0 %v770, 15
        %v814 = vpop.permute.xlu0 %813
        %815 = vrot.lane.b32.xlu0 %v771, 15
        %v816 = vpop.permute.xlu0 %815
        %819 = vrot.lane.b32.xlu0 %v770, 31
        %v820 = vpop.permute.xlu0 %819
        %821 = vrot.lane.b32.xlu0 %v771, 31
        %v822 = vpop.permute.xlu0 %821
        %825 = vrot.lane.b32.xlu0 %v770, 47
        %v826 = vpop.permute.xlu0 %825
        %827 = vrot.lane.b32.xlu0 %v771, 47
        %v828 = vpop.permute.xlu0 %827
        %v831 = vsel %vm329, %v808, %v814
        %v832 = vsel %vm329, %v810, %v816
        %v833 = vsel %vm332, %v831, %v820
        %v834 = vsel %vm332, %v832, %v822
        %v835 = vsel %vm335, %v833, %v826
        %v836 = vsel %vm335, %v834, %v828
        %v837 = vld [vmem:[#allocation3 + $0xd] sm:$0x1]
        %v838 = vlaneseq
        %v839 = vshrl.u32 %v838, 7
        %v840 = vsub.s32 0, %v839
        %v841 = vrot.slane %v837, %v840
        %v842 = vmul.f32 %v841, %v835
        %v843 = vmul.f32 %v841, %v836
        %v844 = vadd.f32 %v805, %v842
        %v845 = vadd.f32 %v806, %v843
        %846 = vrot.lane.b32.xlu0 %v770, 126
        %v847 = vpop.permute.xlu0 %846
        %848 = vrot.lane.b32.xlu0 %v771, 126
        %v849 = vpop.permute.xlu0 %848
        %852 = vrot.lane.b32.xlu0 %v770, 14
        %v853 = vpop.permute.xlu0 %852
        %854 = vrot.lane.b32.xlu0 %v771, 14
        %v855 = vpop.permute.xlu0 %854
        %858 = vrot.lane.b32.xlu0 %v770, 30
        %v859 = vpop.permute.xlu0 %858
        %860 = vrot.lane.b32.xlu0 %v771, 30
        %v861 = vpop.permute.xlu0 %860
        %864 = vrot.lane.b32.xlu0 %v770, 46
        %v865 = vpop.permute.xlu0 %864
        %866 = vrot.lane.b32.xlu0 %v771, 46
        %v867 = vpop.permute.xlu0 %866
        %v870 = vsel %vm329, %v847, %v853
        %v871 = vsel %vm329, %v849, %v855
        %v872 = vsel %vm332, %v870, %v859
        %v873 = vsel %vm332, %v871, %v861
        %v874 = vsel %vm335, %v872, %v865
        %v875 = vsel %vm335, %v873, %v867
        %v876 = vld [vmem:[#allocation3 + $0xe] sm:$0x1]
        %v877 = vlaneseq
        %v878 = vshrl.u32 %v877, 7
        %v879 = vsub.s32 0, %v878
        %v880 = vrot.slane %v876, %v879
        %v881 = vmul.f32 %v880, %v874
        %v882 = vmul.f32 %v880, %v875
        %v883 = vadd.f32 %v844, %v881
        %v884 = vadd.f32 %v845, %v882
        %v885 = vld [vmem:[%s276 + $0x2] sm:$0xff]
        %v886 = vld [vmem:[%s276 + $0xa] sm:$0xff]
        %889 = vrot.lane.b32.xlu0 %v885, 16
        %v890 = vpop.permute.xlu0 %889
        %891 = vrot.lane.b32.xlu0 %v886, 16
        %v892 = vpop.permute.xlu0 %891
        %895 = vrot.lane.b32.xlu0 %v885, 32
        %v896 = vpop.permute.xlu0 %895
        %897 = vrot.lane.b32.xlu0 %v886, 32
        %v898 = vpop.permute.xlu0 %897
        %901 = vrot.lane.b32.xlu0 %v885, 48
        %v902 = vpop.permute.xlu0 %901
        %903 = vrot.lane.b32.xlu0 %v886, 48
        %v904 = vpop.permute.xlu0 %903
        %v907 = vsel %vm329, %v885, %v890
        %v908 = vsel %vm329, %v886, %v892
        %v909 = vsel %vm332, %v907, %v896
        %v910 = vsel %vm332, %v908, %v898
        %v911 = vsel %vm335, %v909, %v902
        %v912 = vsel %vm335, %v910, %v904
        %v913 = vld [vmem:[#allocation3 + $0xf] sm:$0x1]
        %v914 = vlaneseq
        %v915 = vshrl.u32 %v914, 7
        %v916 = vsub.s32 0, %v915
        %v917 = vrot.slane %v913, %v916
        %v918 = vmul.f32 %v917, %v911
        %v919 = vmul.f32 %v917, %v912
        %v920 = vadd.f32 %v883, %v918
        %v921 = vadd.f32 %v884, %v919
        %922 = vrot.lane.b32.xlu0 %v885, 127
        %v923 = vpop.permute.xlu0 %922
        %924 = vrot.lane.b32.xlu0 %v886, 127
        %v925 = vpop.permute.xlu0 %924
        %928 = vrot.lane.b32.xlu0 %v885, 15
        %v929 = vpop.permute.xlu0 %928
        %930 = vrot.lane.b32.xlu0 %v886, 15
        %v931 = vpop.permute.xlu0 %930
        %934 = vrot.lane.b32.xlu0 %v885, 31
        %v935 = vpop.permute.xlu0 %934
        %936 = vrot.lane.b32.xlu0 %v886, 31
        %v937 = vpop.permute.xlu0 %936
        %940 = vrot.lane.b32.xlu0 %v885, 47
        %v941 = vpop.permute.xlu0 %940
        %942 = vrot.lane.b32.xlu0 %v886, 47
        %v943 = vpop.permute.xlu0 %942
        %v946 = vsel %vm329, %v923, %v929
        %v947 = vsel %vm329, %v925, %v931
        %v948 = vsel %vm332, %v946, %v935
        %v949 = vsel %vm332, %v947, %v937
        %v950 = vsel %vm335, %v948, %v941
        %v951 = vsel %vm335, %v949, %v943
        %v952 = vld [vmem:[#allocation3 + $0x10] sm:$0x1]
        %v953 = vlaneseq
        %v954 = vshrl.u32 %v953, 7
        %v955 = vsub.s32 0, %v954
        %v956 = vrot.slane %v952, %v955
        %v957 = vmul.f32 %v956, %v950
        %v958 = vmul.f32 %v956, %v951
        %v959 = vadd.f32 %v920, %v957
        %v960 = vadd.f32 %v921, %v958
        %961 = vrot.lane.b32.xlu0 %v885, 126
        %v962 = vpop.permute.xlu0 %961
        %963 = vrot.lane.b32.xlu0 %v886, 126
        %v964 = vpop.permute.xlu0 %963
        %967 = vrot.lane.b32.xlu0 %v885, 14
        %v968 = vpop.permute.xlu0 %967
        %969 = vrot.lane.b32.xlu0 %v886, 14
        %v970 = vpop.permute.xlu0 %969
        %973 = vrot.lane.b32.xlu0 %v885, 30
        %v974 = vpop.permute.xlu0 %973
        %975 = vrot.lane.b32.xlu0 %v886, 30
        %v976 = vpop.permute.xlu0 %975
        %979 = vrot.lane.b32.xlu0 %v885, 46
        %v980 = vpop.permute.xlu0 %979
        %981 = vrot.lane.b32.xlu0 %v886, 46
        %v982 = vpop.permute.xlu0 %981
        %v985 = vsel %vm329, %v962, %v968
        %v986 = vsel %vm329, %v964, %v970
        %v987 = vsel %vm332, %v985, %v974
        %v988 = vsel %vm332, %v986, %v976
        %v989 = vsel %vm335, %v987, %v980
        %v990 = vsel %vm335, %v988, %v982
        %v991 = vld [vmem:[#allocation3 + $0x11] sm:$0x1]
        %v992 = vlaneseq
        %v993 = vshrl.u32 %v992, 7
        %v994 = vsub.s32 0, %v993
        %v995 = vrot.slane %v991, %v994
        %v996 = vmul.f32 %v995, %v989
        %v997 = vmul.f32 %v995, %v990
        %v998 = vadd.f32 %v959, %v996
        %v999 = vadd.f32 %v960, %v997
        %v1000 = vld [vmem:[%s290] sm:$0xff]
        %v1001 = vld [vmem:[%s290 + $0x8] sm:$0xff]
        %1004 = vrot.lane.b32.xlu0 %v1000, 16
        %v1005 = vpop.permute.xlu0 %1004
        %1006 = vrot.lane.b32.xlu0 %v1001, 16
        %v1007 = vpop.permute.xlu0 %1006
        %1010 = vrot.lane.b32.xlu0 %v1000, 32
        %v1011 = vpop.permute.xlu0 %1010
        %1012 = vrot.lane.b32.xlu0 %v1001, 32
        %v1013 = vpop.permute.xlu0 %1012
        %1016 = vrot.lane.b32.xlu0 %v1000, 48
        %v1017 = vpop.permute.xlu0 %1016
        %1018 = vrot.lane.b32.xlu0 %v1001, 48
        %v1019 = vpop.permute.xlu0 %1018
        %v1022 = vsel %vm329, %v1000, %v1005
        %v1023 = vsel %vm329, %v1001, %v1007
        %v1024 = vsel %vm332, %v1022, %v1011
        %v1025 = vsel %vm332, %v1023, %v1013
        %v1026 = vsel %vm335, %v1024, %v1017
        %v1027 = vsel %vm335, %v1025, %v1019
        %v1028 = vld [vmem:[#allocation3 + $0x12] sm:$0x1]
        %v1029 = vlaneseq
        %v1030 = vshrl.u32 %v1029, 7
        %v1031 = vsub.s32 0, %v1030
        %v1032 = vrot.slane %v1028, %v1031
        %v1033 = vmul.f32 %v1032, %v1026
        %v1034 = vmul.f32 %v1032, %v1027
        %v1035 = vadd.f32 %v998, %v1033
        %v1036 = vadd.f32 %v999, %v1034
        %1037 = vrot.lane.b32.xlu0 %v1000, 127
        %v1038 = vpop.permute.xlu0 %1037
        %1039 = vrot.lane.b32.xlu0 %v1001, 127
        %v1040 = vpop.permute.xlu0 %1039
        %1043 = vrot.lane.b32.xlu0 %v1000, 15
        %v1044 = vpop.permute.xlu0 %1043
        %1045 = vrot.lane.b32.xlu0 %v1001, 15
        %v1046 = vpop.permute.xlu0 %1045
        %1049 = vrot.lane.b32.xlu0 %v1000, 31
        %v1050 = vpop.permute.xlu0 %1049
        %1051 = vrot.lane.b32.xlu0 %v1001, 31
        %v1052 = vpop.permute.xlu0 %1051
        %1055 = vrot.lane.b32.xlu0 %v1000, 47
        %v1056 = vpop.permute.xlu0 %1055
        %1057 = vrot.lane.b32.xlu0 %v1001, 47
        %v1058 = vpop.permute.xlu0 %1057
        %v1061 = vsel %vm329, %v1038, %v1044
        %v1062 = vsel %vm329, %v1040, %v1046
        %v1063 = vsel %vm332, %v1061, %v1050
        %v1064 = vsel %vm332, %v1062, %v1052
        %v1065 = vsel %vm335, %v1063, %v1056
        %v1066 = vsel %vm335, %v1064, %v1058
        %v1067 = vld [vmem:[#allocation3 + $0x13] sm:$0x1]
        %v1068 = vlaneseq
        %v1069 = vshrl.u32 %v1068, 7
        %v1070 = vsub.s32 0, %v1069
        %v1071 = vrot.slane %v1067, %v1070
        %v1072 = vmul.f32 %v1071, %v1065
        %v1073 = vmul.f32 %v1071, %v1066
        %v1074 = vadd.f32 %v1035, %v1072
        %v1075 = vadd.f32 %v1036, %v1073
        %1076 = vrot.lane.b32.xlu0 %v1000, 126
        %v1077 = vpop.permute.xlu0 %1076
        %1078 = vrot.lane.b32.xlu0 %v1001, 126
        %v1079 = vpop.permute.xlu0 %1078
        %1082 = vrot.lane.b32.xlu0 %v1000, 14
        %v1083 = vpop.permute.xlu0 %1082
        %1084 = vrot.lane.b32.xlu0 %v1001, 14
        %v1085 = vpop.permute.xlu0 %1084
        %1088 = vrot.lane.b32.xlu0 %v1000, 30
        %v1089 = vpop.permute.xlu0 %1088
        %1090 = vrot.lane.b32.xlu0 %v1001, 30
        %v1091 = vpop.permute.xlu0 %1090
        %1094 = vrot.lane.b32.xlu0 %v1000, 46
        %v1095 = vpop.permute.xlu0 %1094
        %1096 = vrot.lane.b32.xlu0 %v1001, 46
        %v1097 = vpop.permute.xlu0 %1096
        %v1100 = vsel %vm329, %v1077, %v1083
        %v1101 = vsel %vm329, %v1079, %v1085
        %v1102 = vsel %vm332, %v1100, %v1089
        %v1103 = vsel %vm332, %v1101, %v1091
        %v1104 = vsel %vm335, %v1102, %v1095
        %v1105 = vsel %vm335, %v1103, %v1097
        %v1106 = vld [vmem:[#allocation3 + $0x14] sm:$0x1]
        %v1107 = vlaneseq
        %v1108 = vshrl.u32 %v1107, 7
        %v1109 = vsub.s32 0, %v1108
        %v1110 = vrot.slane %v1106, %v1109
        %v1111 = vmul.f32 %v1110, %v1104
        %v1112 = vmul.f32 %v1110, %v1105
        %v1113 = vadd.f32 %v1074, %v1111
        %v1114 = vadd.f32 %v1075, %v1112
        %v1115 = vld [vmem:[%s290 + $0x1] sm:$0xff]
        %v1116 = vld [vmem:[%s290 + $0x9] sm:$0xff]
        %1119 = vrot.lane.b32.xlu0 %v1115, 16
        %v1120 = vpop.permute.xlu0 %1119
        %1121 = vrot.lane.b32.xlu0 %v1116, 16
        %v1122 = vpop.permute.xlu0 %1121
        %1125 = vrot.lane.b32.xlu0 %v1115, 32
        %v1126 = vpop.permute.xlu0 %1125
        %1127 = vrot.lane.b32.xlu0 %v1116, 32
        %v1128 = vpop.permute.xlu0 %1127
        %1131 = vrot.lane.b32.xlu0 %v1115, 48
        %v1132 = vpop.permute.xlu0 %1131
        %1133 = vrot.lane.b32.xlu0 %v1116, 48
        %v1134 = vpop.permute.xlu0 %1133
        %v1137 = vsel %vm329, %v1115, %v1120
        %v1138 = vsel %vm329, %v1116, %v1122
        %v1139 = vsel %vm332, %v1137, %v1126
        %v1140 = vsel %vm332, %v1138, %v1128
        %v1141 = vsel %vm335, %v1139, %v1132
        %v1142 = vsel %vm335, %v1140, %v1134
        %v1143 = vld [vmem:[#allocation3 + $0x15] sm:$0x1]
        %v1144 = vlaneseq
        %v1145 = vshrl.u32 %v1144, 7
        %v1146 = vsub.s32 0, %v1145
        %v1147 = vrot.slane %v1143, %v1146
        %v1148 = vmul.f32 %v1147, %v1141
        %v1149 = vmul.f32 %v1147, %v1142
        %v1150 = vadd.f32 %v1113, %v1148
        %v1151 = vadd.f32 %v1114, %v1149
        %1152 = vrot.lane.b32.xlu0 %v1115, 127
        %v1153 = vpop.permute.xlu0 %1152
        %1154 = vrot.lane.b32.xlu0 %v1116, 127
        %v1155 = vpop.permute.xlu0 %1154
        %1158 = vrot.lane.b32.xlu0 %v1115, 15
        %v1159 = vpop.permute.xlu0 %1158
        %1160 = vrot.lane.b32.xlu0 %v1116, 15
        %v1161 = vpop.permute.xlu0 %1160
        %1164 = vrot.lane.b32.xlu0 %v1115, 31
        %v1165 = vpop.permute.xlu0 %1164
        %1166 = vrot.lane.b32.xlu0 %v1116, 31
        %v1167 = vpop.permute.xlu0 %1166
        %1170 = vrot.lane.b32.xlu0 %v1115, 47
        %v1171 = vpop.permute.xlu0 %1170
        %1172 = vrot.lane.b32.xlu0 %v1116, 47
        %v1173 = vpop.permute.xlu0 %1172
        %v1176 = vsel %vm329, %v1153, %v1159
        %v1177 = vsel %vm329, %v1155, %v1161
        %v1178 = vsel %vm332, %v1176, %v1165
        %v1179 = vsel %vm332, %v1177, %v1167
        %v1180 = vsel %vm335, %v1178, %v1171
        %v1181 = vsel %vm335, %v1179, %v1173
        %v1182 = vld [vmem:[#allocation3 + $0x16] sm:$0x1]
        %v1183 = vlaneseq
        %v1184 = vshrl.u32 %v1183, 7
        %v1185 = vsub.s32 0, %v1184
        %v1186 = vrot.slane %v1182, %v1185
        %v1187 = vmul.f32 %v1186, %v1180
        %v1188 = vmul.f32 %v1186, %v1181
        %v1189 = vadd.f32 %v1150, %v1187
        %v1190 = vadd.f32 %v1151, %v1188
        %1191 = vrot.lane.b32.xlu0 %v1115, 126
        %v1192 = vpop.permute.xlu0 %1191
        %1193 = vrot.lane.b32.xlu0 %v1116, 126
        %v1194 = vpop.permute.xlu0 %1193
        %1197 = vrot.lane.b32.xlu0 %v1115, 14
        %v1198 = vpop.permute.xlu0 %1197
        %1199 = vrot.lane.b32.xlu0 %v1116, 14
        %v1200 = vpop.permute.xlu0 %1199
        %1203 = vrot.lane.b32.xlu0 %v1115, 30
        %v1204 = vpop.permute.xlu0 %1203
        %1205 = vrot.lane.b32.xlu0 %v1116, 30
        %v1206 = vpop.permute.xlu0 %1205
        %1209 = vrot.lane.b32.xlu0 %v1115, 46
        %v1210 = vpop.permute.xlu0 %1209
        %1211 = vrot.lane.b32.xlu0 %v1116, 46
        %v1212 = vpop.permute.xlu0 %1211
        %v1215 = vsel %vm329, %v1192, %v1198
        %v1216 = vsel %vm329, %v1194, %v1200
        %v1217 = vsel %vm332, %v1215, %v1204
        %v1218 = vsel %vm332, %v1216, %v1206
        %v1219 = vsel %vm335, %v1217, %v1210
        %v1220 = vsel %vm335, %v1218, %v1212
        %v1221 = vld [vmem:[#allocation3 + $0x17] sm:$0x1]
        %v1222 = vlaneseq
        %v1223 = vshrl.u32 %v1222, 7
        %v1224 = vsub.s32 0, %v1223
        %v1225 = vrot.slane %v1221, %v1224
        %v1226 = vmul.f32 %v1225, %v1219
        %v1227 = vmul.f32 %v1225, %v1220
        %v1228 = vadd.f32 %v1189, %v1226
        %v1229 = vadd.f32 %v1190, %v1227
        %v1230 = vld [vmem:[%s290 + $0x2] sm:$0xff]
        %v1231 = vld [vmem:[%s290 + $0xa] sm:$0xff]
        %1234 = vrot.lane.b32.xlu0 %v1230, 16
        %v1235 = vpop.permute.xlu0 %1234
        %1236 = vrot.lane.b32.xlu0 %v1231, 16
        %v1237 = vpop.permute.xlu0 %1236
        %1240 = vrot.lane.b32.xlu0 %v1230, 32
        %v1241 = vpop.permute.xlu0 %1240
        %1242 = vrot.lane.b32.xlu0 %v1231, 32
        %v1243 = vpop.permute.xlu0 %1242
        %1246 = vrot.lane.b32.xlu0 %v1230, 48
        %v1247 = vpop.permute.xlu0 %1246
        %1248 = vrot.lane.b32.xlu0 %v1231, 48
        %v1249 = vpop.permute.xlu0 %1248
        %v1252 = vsel %vm329, %v1230, %v1235
        %v1253 = vsel %vm329, %v1231, %v1237
        %v1254 = vsel %vm332, %v1252, %v1241
        %v1255 = vsel %vm332, %v1253, %v1243
        %v1256 = vsel %vm335, %v1254, %v1247
        %v1257 = vsel %vm335, %v1255, %v1249
        %v1258 = vld [vmem:[#allocation3 + $0x18] sm:$0x1]
        %v1259 = vlaneseq
        %v1260 = vshrl.u32 %v1259, 7
        %v1261 = vsub.s32 0, %v1260
        %v1262 = vrot.slane %v1258, %v1261
        %v1263 = vmul.f32 %v1262, %v1256
        %v1264 = vmul.f32 %v1262, %v1257
        %v1265 = vadd.f32 %v1228, %v1263
        %v1266 = vadd.f32 %v1229, %v1264
        %1267 = vrot.lane.b32.xlu0 %v1230, 127
        %v1268 = vpop.permute.xlu0 %1267
        %1269 = vrot.lane.b32.xlu0 %v1231, 127
        %v1270 = vpop.permute.xlu0 %1269
        %1273 = vrot.lane.b32.xlu0 %v1230, 15
        %v1274 = vpop.permute.xlu0 %1273
        %1275 = vrot.lane.b32.xlu0 %v1231, 15
        %v1276 = vpop.permute.xlu0 %1275
        %1279 = vrot.lane.b32.xlu0 %v1230, 31
        %v1280 = vpop.permute.xlu0 %1279
        %1281 = vrot.lane.b32.xlu0 %v1231, 31
        %v1282 = vpop.permute.xlu0 %1281
        %1285 = vrot.lane.b32.xlu0 %v1230, 47
        %v1286 = vpop.permute.xlu0 %1285
        %1287 = vrot.lane.b32.xlu0 %v1231, 47
        %v1288 = vpop.permute.xlu0 %1287
        %v1291 = vsel %vm329, %v1268, %v1274
        %v1292 = vsel %vm329, %v1270, %v1276
        %v1293 = vsel %vm332, %v1291, %v1280
        %v1294 = vsel %vm332, %v1292, %v1282
        %v1295 = vsel %vm335, %v1293, %v1286
        %v1296 = vsel %vm335, %v1294, %v1288
        %v1297 = vld [vmem:[#allocation3 + $0x19] sm:$0x1]
        %v1298 = vlaneseq
        %v1299 = vshrl.u32 %v1298, 7
        %v1300 = vsub.s32 0, %v1299
        %v1301 = vrot.slane %v1297, %v1300
        %v1302 = vmul.f32 %v1301, %v1295
        %v1303 = vmul.f32 %v1301, %v1296
        %v1304 = vadd.f32 %v1265, %v1302
        %v1305 = vadd.f32 %v1266, %v1303
        %1306 = vrot.lane.b32.xlu0 %v1230, 126
        %v1307 = vpop.permute.xlu0 %1306
        %1308 = vrot.lane.b32.xlu0 %v1231, 126
        %v1309 = vpop.permute.xlu0 %1308
        %1312 = vrot.lane.b32.xlu0 %v1230, 14
        %v1313 = vpop.permute.xlu0 %1312
        %1314 = vrot.lane.b32.xlu0 %v1231, 14
        %v1315 = vpop.permute.xlu0 %1314
        %1318 = vrot.lane.b32.xlu0 %v1230, 30
        %v1319 = vpop.permute.xlu0 %1318
        %1320 = vrot.lane.b32.xlu0 %v1231, 30
        %v1321 = vpop.permute.xlu0 %1320
        %1324 = vrot.lane.b32.xlu0 %v1230, 46
        %v1325 = vpop.permute.xlu0 %1324
        %1326 = vrot.lane.b32.xlu0 %v1231, 46
        %v1327 = vpop.permute.xlu0 %1326
        %v1330 = vsel %vm329, %v1307, %v1313
        %v1331 = vsel %vm329, %v1309, %v1315
        %v1332 = vsel %vm332, %v1330, %v1319
        %v1333 = vsel %vm332, %v1331, %v1321
        %v1334 = vsel %vm335, %v1332, %v1325
        %v1335 = vsel %vm335, %v1333, %v1327
        %v1336 = vld [vmem:[#allocation3 + $0x1a] sm:$0x1]
        %v1337 = vlaneseq
        %v1338 = vshrl.u32 %v1337, 7
        %v1339 = vsub.s32 0, %v1338
        %v1340 = vrot.slane %v1336, %v1339
        %v1341 = vmul.f32 %v1340, %v1334
        %v1342 = vmul.f32 %v1340, %v1335
        %v1343 = vadd.f32 %v1304, %v1341
        %v1344 = vadd.f32 %v1305, %v1342
        %v1345 = vld [vmem:[%s304] sm:$0xff]
        %v1346 = vld [vmem:[%s304 + $0x8] sm:$0xff]
        %1349 = vrot.lane.b32.xlu0 %v1345, 16
        %v1350 = vpop.permute.xlu0 %1349
        %1351 = vrot.lane.b32.xlu0 %v1346, 16
        %v1352 = vpop.permute.xlu0 %1351
        %1355 = vrot.lane.b32.xlu0 %v1345, 32
        %v1356 = vpop.permute.xlu0 %1355
        %1357 = vrot.lane.b32.xlu0 %v1346, 32
        %v1358 = vpop.permute.xlu0 %1357
        %1361 = vrot.lane.b32.xlu0 %v1345, 48
        %v1362 = vpop.permute.xlu0 %1361
        %1363 = vrot.lane.b32.xlu0 %v1346, 48
        %v1364 = vpop.permute.xlu0 %1363
        %v1367 = vsel %vm329, %v1345, %v1350
        %v1368 = vsel %vm329, %v1346, %v1352
        %v1369 = vsel %vm332, %v1367, %v1356
        %v1370 = vsel %vm332, %v1368, %v1358
        %v1371 = vsel %vm335, %v1369, %v1362
        %v1372 = vsel %vm335, %v1370, %v1364
        %v1373 = vld [vmem:[#allocation3 + $0x1b] sm:$0x1]
        %v1374 = vlaneseq
        %v1375 = vshrl.u32 %v1374, 7
        %v1376 = vsub.s32 0, %v1375
        %v1377 = vrot.slane %v1373, %v1376
        %v1378 = vmul.f32 %v1377, %v1371
        %v1379 = vmul.f32 %v1377, %v1372
        %v1380 = vadd.f32 %v1343, %v1378
        %v1381 = vadd.f32 %v1344, %v1379
        %1382 = vrot.lane.b32.xlu0 %v1345, 127
        %v1383 = vpop.permute.xlu0 %1382
        %1384 = vrot.lane.b32.xlu0 %v1346, 127
        %v1385 = vpop.permute.xlu0 %1384
        %1388 = vrot.lane.b32.xlu0 %v1345, 15
        %v1389 = vpop.permute.xlu0 %1388
        %1390 = vrot.lane.b32.xlu0 %v1346, 15
        %v1391 = vpop.permute.xlu0 %1390
        %1394 = vrot.lane.b32.xlu0 %v1345, 31
        %v1395 = vpop.permute.xlu0 %1394
        %1396 = vrot.lane.b32.xlu0 %v1346, 31
        %v1397 = vpop.permute.xlu0 %1396
        %1400 = vrot.lane.b32.xlu0 %v1345, 47
        %v1401 = vpop.permute.xlu0 %1400
        %1402 = vrot.lane.b32.xlu0 %v1346, 47
        %v1403 = vpop.permute.xlu0 %1402
        %v1406 = vsel %vm329, %v1383, %v1389
        %v1407 = vsel %vm329, %v1385, %v1391
        %v1408 = vsel %vm332, %v1406, %v1395
        %v1409 = vsel %vm332, %v1407, %v1397
        %v1410 = vsel %vm335, %v1408, %v1401
        %v1411 = vsel %vm335, %v1409, %v1403
        %v1412 = vld [vmem:[#allocation3 + $0x1c] sm:$0x1]
        %v1413 = vlaneseq
        %v1414 = vshrl.u32 %v1413, 7
        %v1415 = vsub.s32 0, %v1414
        %v1416 = vrot.slane %v1412, %v1415
        %v1417 = vmul.f32 %v1416, %v1410
        %v1418 = vmul.f32 %v1416, %v1411
        %v1419 = vadd.f32 %v1380, %v1417
        %v1420 = vadd.f32 %v1381, %v1418
        %1421 = vrot.lane.b32.xlu0 %v1345, 126
        %v1422 = vpop.permute.xlu0 %1421
        %1423 = vrot.lane.b32.xlu0 %v1346, 126
        %v1424 = vpop.permute.xlu0 %1423
        %1427 = vrot.lane.b32.xlu0 %v1345, 14
        %v1428 = vpop.permute.xlu0 %1427
        %1429 = vrot.lane.b32.xlu0 %v1346, 14
        %v1430 = vpop.permute.xlu0 %1429
        %1433 = vrot.lane.b32.xlu0 %v1345, 30
        %v1434 = vpop.permute.xlu0 %1433
        %1435 = vrot.lane.b32.xlu0 %v1346, 30
        %v1436 = vpop.permute.xlu0 %1435
        %1439 = vrot.lane.b32.xlu0 %v1345, 46
        %v1440 = vpop.permute.xlu0 %1439
        %1441 = vrot.lane.b32.xlu0 %v1346, 46
        %v1442 = vpop.permute.xlu0 %1441
        %v1445 = vsel %vm329, %v1422, %v1428
        %v1446 = vsel %vm329, %v1424, %v1430
        %v1447 = vsel %vm332, %v1445, %v1434
        %v1448 = vsel %vm332, %v1446, %v1436
        %v1449 = vsel %vm335, %v1447, %v1440
        %v1450 = vsel %vm335, %v1448, %v1442
        %v1451 = vld [vmem:[#allocation3 + $0x1d] sm:$0x1]
        %v1452 = vlaneseq
        %v1453 = vshrl.u32 %v1452, 7
        %v1454 = vsub.s32 0, %v1453
        %v1455 = vrot.slane %v1451, %v1454
        %v1456 = vmul.f32 %v1455, %v1449
        %v1457 = vmul.f32 %v1455, %v1450
        %v1458 = vadd.f32 %v1419, %v1456
        %v1459 = vadd.f32 %v1420, %v1457
        %v1460 = vld [vmem:[%s304 + $0x1] sm:$0xff]
        %v1461 = vld [vmem:[%s304 + $0x9] sm:$0xff]
        %1464 = vrot.lane.b32.xlu0 %v1460, 16
        %v1465 = vpop.permute.xlu0 %1464
        %1466 = vrot.lane.b32.xlu0 %v1461, 16
        %v1467 = vpop.permute.xlu0 %1466
        %1470 = vrot.lane.b32.xlu0 %v1460, 32
        %v1471 = vpop.permute.xlu0 %1470
        %1472 = vrot.lane.b32.xlu0 %v1461, 32
        %v1473 = vpop.permute.xlu0 %1472
        %1476 = vrot.lane.b32.xlu0 %v1460, 48
        %v1477 = vpop.permute.xlu0 %1476
        %1478 = vrot.lane.b32.xlu0 %v1461, 48
        %v1479 = vpop.permute.xlu0 %1478
        %v1482 = vsel %vm329, %v1460, %v1465
        %v1483 = vsel %vm329, %v1461, %v1467
        %v1484 = vsel %vm332, %v1482, %v1471
        %v1485 = vsel %vm332, %v1483, %v1473
        %v1486 = vsel %vm335, %v1484, %v1477
        %v1487 = vsel %vm335, %v1485, %v1479
        %v1488 = vld [vmem:[#allocation3 + $0x1e] sm:$0x1]
        %v1489 = vlaneseq
        %v1490 = vshrl.u32 %v1489, 7
        %v1491 = vsub.s32 0, %v1490
        %v1492 = vrot.slane %v1488, %v1491
        %v1493 = vmul.f32 %v1492, %v1486
        %v1494 = vmul.f32 %v1492, %v1487
        %v1495 = vadd.f32 %v1458, %v1493
        %v1496 = vadd.f32 %v1459, %v1494
        %1497 = vrot.lane.b32.xlu0 %v1460, 127
        %v1498 = vpop.permute.xlu0 %1497
        %1499 = vrot.lane.b32.xlu0 %v1461, 127
        %v1500 = vpop.permute.xlu0 %1499
        %1503 = vrot.lane.b32.xlu0 %v1460, 15
        %v1504 = vpop.permute.xlu0 %1503
        %1505 = vrot.lane.b32.xlu0 %v1461, 15
        %v1506 = vpop.permute.xlu0 %1505
        %1509 = vrot.lane.b32.xlu0 %v1460, 31
        %v1510 = vpop.permute.xlu0 %1509
        %1511 = vrot.lane.b32.xlu0 %v1461, 31
        %v1512 = vpop.permute.xlu0 %1511
        %1515 = vrot.lane.b32.xlu0 %v1460, 47
        %v1516 = vpop.permute.xlu0 %1515
        %1517 = vrot.lane.b32.xlu0 %v1461, 47
        %v1518 = vpop.permute.xlu0 %1517
        %v1521 = vsel %vm329, %v1498, %v1504
        %v1522 = vsel %vm329, %v1500, %v1506
        %v1523 = vsel %vm332, %v1521, %v1510
        %v1524 = vsel %vm332, %v1522, %v1512
        %v1525 = vsel %vm335, %v1523, %v1516
        %v1526 = vsel %vm335, %v1524, %v1518
        %v1527 = vld [vmem:[#allocation3 + $0x1f] sm:$0x1]
        %v1528 = vlaneseq
        %v1529 = vshrl.u32 %v1528, 7
        %v1530 = vsub.s32 0, %v1529
        %v1531 = vrot.slane %v1527, %v1530
        %v1532 = vmul.f32 %v1531, %v1525
        %v1533 = vmul.f32 %v1531, %v1526
        %v1534 = vadd.f32 %v1495, %v1532
        %v1535 = vadd.f32 %v1496, %v1533
        %1536 = vrot.lane.b32.xlu0 %v1460, 126
        %v1537 = vpop.permute.xlu0 %1536
        %1538 = vrot.lane.b32.xlu0 %v1461, 126
        %v1539 = vpop.permute.xlu0 %1538
        %1542 = vrot.lane.b32.xlu0 %v1460, 14
        %v1543 = vpop.permute.xlu0 %1542
        %1544 = vrot.lane.b32.xlu0 %v1461, 14
        %v1545 = vpop.permute.xlu0 %1544
        %1548 = vrot.lane.b32.xlu0 %v1460, 30
        %v1549 = vpop.permute.xlu0 %1548
        %1550 = vrot.lane.b32.xlu0 %v1461, 30
        %v1551 = vpop.permute.xlu0 %1550
        %1554 = vrot.lane.b32.xlu0 %v1460, 46
        %v1555 = vpop.permute.xlu0 %1554
        %1556 = vrot.lane.b32.xlu0 %v1461, 46
        %v1557 = vpop.permute.xlu0 %1556
        %v1560 = vsel %vm329, %v1537, %v1543
        %v1561 = vsel %vm329, %v1539, %v1545
        %v1562 = vsel %vm332, %v1560, %v1549
        %v1563 = vsel %vm332, %v1561, %v1551
        %v1564 = vsel %vm335, %v1562, %v1555
        %v1565 = vsel %vm335, %v1563, %v1557
        %v1566 = vld [vmem:[#allocation3 + $0x20] sm:$0x1]
        %v1567 = vlaneseq
        %v1568 = vshrl.u32 %v1567, 7
        %v1569 = vsub.s32 0, %v1568
        %v1570 = vrot.slane %v1566, %v1569
        %v1571 = vmul.f32 %v1570, %v1564
        %v1572 = vmul.f32 %v1570, %v1565
        %v1573 = vadd.f32 %v1534, %v1571
        %v1574 = vadd.f32 %v1535, %v1572
        %v1575 = vld [vmem:[%s304 + $0x2] sm:$0xff]
        %v1576 = vld [vmem:[%s304 + $0xa] sm:$0xff]
        %1579 = vrot.lane.b32.xlu0 %v1575, 16
        %v1580 = vpop.permute.xlu0 %1579
        %1581 = vrot.lane.b32.xlu0 %v1576, 16
        %v1582 = vpop.permute.xlu0 %1581
        %1585 = vrot.lane.b32.xlu0 %v1575, 32
        %v1586 = vpop.permute.xlu0 %1585
        %1587 = vrot.lane.b32.xlu0 %v1576, 32
        %v1588 = vpop.permute.xlu0 %1587
        %1591 = vrot.lane.b32.xlu0 %v1575, 48
        %v1592 = vpop.permute.xlu0 %1591
        %1593 = vrot.lane.b32.xlu0 %v1576, 48
        %v1594 = vpop.permute.xlu0 %1593
        %v1597 = vsel %vm329, %v1575, %v1580
        %v1598 = vsel %vm329, %v1576, %v1582
        %v1599 = vsel %vm332, %v1597, %v1586
        %v1600 = vsel %vm332, %v1598, %v1588
        %v1601 = vsel %vm335, %v1599, %v1592
        %v1602 = vsel %vm335, %v1600, %v1594
        %v1603 = vld [vmem:[#allocation3 + $0x21] sm:$0x1]
        %v1604 = vlaneseq
        %v1605 = vshrl.u32 %v1604, 7
        %v1606 = vsub.s32 0, %v1605
        %v1607 = vrot.slane %v1603, %v1606
        %v1608 = vmul.f32 %v1607, %v1601
        %v1609 = vmul.f32 %v1607, %v1602
        %v1610 = vadd.f32 %v1573, %v1608
        %v1611 = vadd.f32 %v1574, %v1609
        %1612 = vrot.lane.b32.xlu0 %v1575, 127
        %v1613 = vpop.permute.xlu0 %1612
        %1614 = vrot.lane.b32.xlu0 %v1576, 127
        %v1615 = vpop.permute.xlu0 %1614
        %1618 = vrot.lane.b32.xlu0 %v1575, 15
        %v1619 = vpop.permute.xlu0 %1618
        %1620 = vrot.lane.b32.xlu0 %v1576, 15
        %v1621 = vpop.permute.xlu0 %1620
        %1624 = vrot.lane.b32.xlu0 %v1575, 31
        %v1625 = vpop.permute.xlu0 %1624
        %1626 = vrot.lane.b32.xlu0 %v1576, 31
        %v1627 = vpop.permute.xlu0 %1626
        %1630 = vrot.lane.b32.xlu0 %v1575, 47
        %v1631 = vpop.permute.xlu0 %1630
        %1632 = vrot.lane.b32.xlu0 %v1576, 47
        %v1633 = vpop.permute.xlu0 %1632
        %v1636 = vsel %vm329, %v1613, %v1619
        %v1637 = vsel %vm329, %v1615, %v1621
        %v1638 = vsel %vm332, %v1636, %v1625
        %v1639 = vsel %vm332, %v1637, %v1627
        %v1640 = vsel %vm335, %v1638, %v1631
        %v1641 = vsel %vm335, %v1639, %v1633
        %v1642 = vld [vmem:[#allocation3 + $0x22] sm:$0x1]
        %v1643 = vlaneseq
        %v1644 = vshrl.u32 %v1643, 7
        %v1645 = vsub.s32 0, %v1644
        %v1646 = vrot.slane %v1642, %v1645
        %v1647 = vmul.f32 %v1646, %v1640
        %v1648 = vmul.f32 %v1646, %v1641
        %v1649 = vadd.f32 %v1610, %v1647
        %v1650 = vadd.f32 %v1611, %v1648
        %1651 = vrot.lane.b32.xlu0 %v1575, 126
        %v1652 = vpop.permute.xlu0 %1651
        %1653 = vrot.lane.b32.xlu0 %v1576, 126
        %v1654 = vpop.permute.xlu0 %1653
        %1657 = vrot.lane.b32.xlu0 %v1575, 14
        %v1658 = vpop.permute.xlu0 %1657
        %1659 = vrot.lane.b32.xlu0 %v1576, 14
        %v1660 = vpop.permute.xlu0 %1659
        %1663 = vrot.lane.b32.xlu0 %v1575, 30
        %v1664 = vpop.permute.xlu0 %1663
        %1665 = vrot.lane.b32.xlu0 %v1576, 30
        %v1666 = vpop.permute.xlu0 %1665
        %1669 = vrot.lane.b32.xlu0 %v1575, 46
        %v1670 = vpop.permute.xlu0 %1669
        %1671 = vrot.lane.b32.xlu0 %v1576, 46
        %v1672 = vpop.permute.xlu0 %1671
        %v1675 = vsel %vm329, %v1652, %v1658
        %v1676 = vsel %vm329, %v1654, %v1660
        %v1677 = vsel %vm332, %v1675, %v1664
        %v1678 = vsel %vm332, %v1676, %v1666
        %v1679 = vsel %vm335, %v1677, %v1670
        %v1680 = vsel %vm335, %v1678, %v1672
        %v1681 = vld [vmem:[#allocation3 + $0x23] sm:$0x1]
        %v1682 = vlaneseq
        %v1683 = vshrl.u32 %v1682, 7
        %v1684 = vsub.s32 0, %v1683
        %v1685 = vrot.slane %v1681, %v1684
        %v1686 = vmul.f32 %v1685, %v1679
        %v1687 = vmul.f32 %v1685, %v1680
        %v1688 = vadd.f32 %v1649, %v1686
        %v1689 = vadd.f32 %v1650, %v1687
        %vm1690 = vcmask 523264
        %1691 = vst.msk [vmem:[%s207] sm:$0xff] %vm1690, %v1688
        %1692 = vst.msk [vmem:[%s207 + $0x8] sm:$0xff] %vm1690, %v1689
        %v1693 = vsel %vm329, %v1688, 0.0
        %v1694 = vsel %vm329, %v1689, 0.0
        %v1695 = vadd.f32 %v1693, %v1694
        %1696 = vadd.xlane.f32.xlu0 %v1695
        %v1697 = vpop.xlane.xlu0 %1696
        %v1698 = vrot.slane %v1697, 4
        %v1699 = vadd.f32 %v1697, %v1698
        %v1700 = vrot.slane %v1699, 2
        %v1701 = vadd.f32 %v1699, %v1700
        %v1702 = vrot.slane %v1701, 1
        %v1703 = vadd.f32 %v1701, %v1702
        %s1704 = vtos %v1703
        %v1705 = vstv %s1704
        %vm1706 = vcmask 0
        %1707 = vst.msk [vmem:[%s214] sm:$0x1] %vm1706, %v1705
        %v1708 = vmul.f32 %v1688, %v1688
        %v1709 = vmul.f32 %v1689, %v1689
        %v1710 = vsel %vm329, %v1708, 0.0
        %v1711 = vsel %vm329, %v1709, 0.0
        %v1712 = vadd.f32 %v1710, %v1711
        %1713 = vadd.xlane.f32.xlu0 %v1712
        %v1714 = vpop.xlane.xlu0 %1713
        %v1715 = vrot.slane %v1714, 4
        %v1716 = vadd.f32 %v1714, %v1715
        %v1717 = vrot.slane %v1716, 2
        %v1718 = vadd.f32 %v1716, %v1717
        %v1719 = vrot.slane %v1718, 1
        %v1720 = vadd.f32 %v1718, %v1719
        %s1721 = vtos %v1720
        %v1722 = vstv %s1721
        %1723 = vst.msk [vmem:[%s214 + $0x1] sm:$0x1] %vm1706, %v1722
        %1726 = vrot.lane.b32.xlu0 %v1688, 112
        %v1727 = vpop.permute.xlu0 %1726
        %1728 = vrot.lane.b32.xlu0 %v1689, 112
        %v1729 = vpop.permute.xlu0 %1728
        %v1732 = vsel %vm329, %v1727, 0.0
        %v1733 = vsel %vm329, %v1729, 0.0
        %v1734 = vadd.f32 %v1732, %v1733
        %1735 = vadd.xlane.f32.xlu0 %v1734
        %v1736 = vpop.xlane.xlu0 %1735
        %v1737 = vrot.slane %v1736, 4
        %v1738 = vadd.f32 %v1736, %v1737
        %v1739 = vrot.slane %v1738, 2
        %v1740 = vadd.f32 %v1738, %v1739
        %v1741 = vrot.slane %v1740, 1
        %v1742 = vadd.f32 %v1740, %v1741
        %s1743 = vtos %v1742
        %v1744 = vstv %s1743
        %vm1745 = vcmask 8200
        %1746 = vst.msk [vmem:[%s214] sm:$0x1] %vm1745, %v1744
        %1749 = vrot.lane.b32.xlu0 %v1708, 112
        %v1750 = vpop.permute.xlu0 %1749
        %1751 = vrot.lane.b32.xlu0 %v1709, 112
        %v1752 = vpop.permute.xlu0 %1751
        %v1755 = vsel %vm329, %v1750, 0.0
        %v1756 = vsel %vm329, %v1752, 0.0
        %v1757 = vadd.f32 %v1755, %v1756
        %1758 = vadd.xlane.f32.xlu0 %v1757
        %v1759 = vpop.xlane.xlu0 %1758
        %v1760 = vrot.slane %v1759, 4
        %v1761 = vadd.f32 %v1759, %v1760
        %v1762 = vrot.slane %v1761, 2
        %v1763 = vadd.f32 %v1761, %v1762
        %v1764 = vrot.slane %v1763, 1
        %v1765 = vadd.f32 %v1763, %v1764
        %s1766 = vtos %v1765
        %v1767 = vstv %s1766
        %1768 = vst.msk [vmem:[%s214 + $0x1] sm:$0x1] %vm1745, %v1767
        %1769 = vrot.lane.b32.xlu0 %v1688, 96
        %v1770 = vpop.permute.xlu0 %1769
        %1771 = vrot.lane.b32.xlu0 %v1689, 96
        %v1772 = vpop.permute.xlu0 %1771
        %v1775 = vsel %vm329, %v1770, 0.0
        %v1776 = vsel %vm329, %v1772, 0.0
        %v1777 = vadd.f32 %v1775, %v1776
        %1778 = vadd.xlane.f32.xlu0 %v1777
        %v1779 = vpop.xlane.xlu0 %1778
        %v1780 = vrot.slane %v1779, 4
        %v1781 = vadd.f32 %v1779, %v1780
        %v1782 = vrot.slane %v1781, 2
        %v1783 = vadd.f32 %v1781, %v1782
        %v1784 = vrot.slane %v1783, 1
        %v1785 = vadd.f32 %v1783, %v1784
        %s1786 = vtos %v1785
        %v1787 = vstv %s1786
        %vm1788 = vcmask 16400
        %1789 = vst.msk [vmem:[%s214] sm:$0x1] %vm1788, %v1787
        %1790 = vrot.lane.b32.xlu0 %v1708, 96
        %v1791 = vpop.permute.xlu0 %1790
        %1792 = vrot.lane.b32.xlu0 %v1709, 96
        %v1793 = vpop.permute.xlu0 %1792
        %v1796 = vsel %vm329, %v1791, 0.0
        %v1797 = vsel %vm329, %v1793, 0.0
        %v1798 = vadd.f32 %v1796, %v1797
        %1799 = vadd.xlane.f32.xlu0 %v1798
        %v1800 = vpop.xlane.xlu0 %1799
        %v1801 = vrot.slane %v1800, 4
        %v1802 = vadd.f32 %v1800, %v1801
        %v1803 = vrot.slane %v1802, 2
        %v1804 = vadd.f32 %v1802, %v1803
        %v1805 = vrot.slane %v1804, 1
        %v1806 = vadd.f32 %v1804, %v1805
        %s1807 = vtos %v1806
        %v1808 = vstv %s1807
        %1809 = vst.msk [vmem:[%s214 + $0x1] sm:$0x1] %vm1788, %v1808
        %1810 = vrot.lane.b32.xlu0 %v1688, 80
        %v1811 = vpop.permute.xlu0 %1810
        %1812 = vrot.lane.b32.xlu0 %v1689, 80
        %v1813 = vpop.permute.xlu0 %1812
        %v1816 = vsel %vm329, %v1811, 0.0
        %v1817 = vsel %vm329, %v1813, 0.0
        %v1818 = vadd.f32 %v1816, %v1817
        %1819 = vadd.xlane.f32.xlu0 %v1818
        %v1820 = vpop.xlane.xlu0 %1819
        %v1821 = vrot.slane %v1820, 4
        %v1822 = vadd.f32 %v1820, %v1821
        %v1823 = vrot.slane %v1822, 2
        %v1824 = vadd.f32 %v1822, %v1823
        %v1825 = vrot.slane %v1824, 1
        %v1826 = vadd.f32 %v1824, %v1825
        %s1827 = vtos %v1826
        %v1828 = vstv %s1827
        %vm1829 = vcmask 24600
        %1830 = vst.msk [vmem:[%s214] sm:$0x1] %vm1829, %v1828
        %1831 = vrot.lane.b32.xlu0 %v1708, 80
        %v1832 = vpop.permute.xlu0 %1831
        %1833 = vrot.lane.b32.xlu0 %v1709, 80
        %v1834 = vpop.permute.xlu0 %1833
        %v1837 = vsel %vm329, %v1832, 0.0
        %v1838 = vsel %vm329, %v1834, 0.0
        %v1839 = vadd.f32 %v1837, %v1838
        %1840 = vadd.xlane.f32.xlu0 %v1839
        %v1841 = vpop.xlane.xlu0 %1840
        %v1842 = vrot.slane %v1841, 4
        %v1843 = vadd.f32 %v1841, %v1842
        %v1844 = vrot.slane %v1843, 2
        %v1845 = vadd.f32 %v1843, %v1844
        %v1846 = vrot.slane %v1845, 1
        %v1847 = vadd.f32 %v1845, %v1846
        %s1848 = vtos %v1847
        %v1849 = vstv %s1848
        %1850 = vst.msk [vmem:[%s214 + $0x1] sm:$0x1] %vm1829, %v1849
        %s1851 = sand.u32 %s80, 1
        %s1852 = scalar_lea.sflag [#allocation5], %s1851
        %s1853 = sand.u32 %s80, 1
        %s1854 = smul.addr %s1853, 16
        %s1855 = scalar_lea.vmem [#allocation8], %s1854
        %s1856 = sand.u32 %s106, 1
        %s1857 = scalar_lea.sflag [#allocation10], %s1856
        %s1858 = sand.u32 %s106, 1
        %s1859 = smul.addr %s1858, 2
        %s1860 = scalar_lea.vmem [#allocation9], %s1859
        // Predicated region
        $region37: #{_forward_impl.2} parent=27 // pred_check
          %p1861 = pneg %p90
        $region38: #{_forward_impl.2} parent=27 // pred_check_branch
          %1863 = sbr.rel (%p1861) target = $region40
        $region39: #{_forward_impl.2} parent=27 // pred_region
          %s1865 = ssub.s32 256, 256
          %1866 = vsyncadd %s1852, %s1865
          %s1867 = smul.addr %s25, 2
          %s1868 = smul.addr %s1867, 128
          %s1869 = scalar_lea.hbm %s2, %s1868
          %s1870 = sshll.u32 %s1855, 4
          %s1871 = int_to_ptr.vmem [resolvable:$true] %s1870
          %1876 = dma.vmem_to_hbm [thread:$0]  %s1871, 256, %s1869, %s1852, 128, 128, 8
        $region40: #{_forward_impl.2} parent=27 // pred_fallthru
          _
        // Predicated region
        $region41: #{_forward_impl.2} parent=27 // pred_check
          %p1877 = pneg %p116
        $region42: #{_forward_impl.2} parent=27 // pred_check_branch
          %1879 = sbr.rel (%p1877) target = $region44
        $region43: #{_forward_impl.2} parent=27 // pred_region
          %s1881 = ssub.s32 32, 32
          %1882 = vsyncadd %s1857, %s1881
          %s1883 = smul.addr %s25, 32
          %s1884 = scalar_lea.hbm %s3, %s1883
          %s1886 = sshll.u32 %s1860, 4
          %s1887 = int_to_ptr.vmem [resolvable:$true] %s1886
          %1889 = dma.vmem_to_hbm [thread:$0]  %s1887, 32, %s1884, %s1857
        $region44: #{_forward_impl.2} parent=27 // pred_fallthru
          _
      $region28: #{_forward_impl.2} parent=5 // pred_fallthru
        _
      %p1890 = scmp.le.s32.totalorder 2, %s20
      // Predicated region
      $region45: #{_forward_impl.2} parent=5 // pred_check
        %p1891 = pneg %p1890
      $region46: #{_forward_impl.2} parent=5 // pred_check_branch
        %1893 = sbr.rel (%p1891) target = $region48
      $region47: #{_forward_impl.2} parent=5 // pred_region
        %s1894 = ssub.s32 %s20, 2
        // Predicated region
        $region49: #{_forward_impl.2} parent=47 // pred_check
          %p1895 = pneg %p96
        $region50: #{_forward_impl.2} parent=47 // pred_check_branch
          %1897 = sbr.rel (%p1895) target = $region52
        $region51: #{_forward_impl.2} parent=47 // pred_region
          %s1898 = sand.u32 %s81, 1
          %s1899 = scalar_lea.sflag [#allocation5], %s1898
          %s1900 = sand.u32 %s81, 1
          %s1901 = smul.addr %s1900, 16
          %s1902 = scalar_lea.vmem [#allocation8], %s1901
          %1903 = dma.done %s1899, 256
        $region52: #{_forward_impl.2} parent=47 // pred_fallthru
          _
        // Predicated region
        $region53: #{_forward_impl.2} parent=47 // pred_check
          %p1904 = pneg %p122
        $region54: #{_forward_impl.2} parent=47 // pred_check_branch
          %1906 = sbr.rel (%p1904) target = $region56
        $region55: #{_forward_impl.2} parent=47 // pred_region
          %s1907 = sand.u32 %s107, 1
          %s1908 = scalar_lea.sflag [#allocation10], %s1907
          %s1909 = sand.u32 %s107, 1
          %s1910 = smul.addr %s1909, 2
          %s1911 = scalar_lea.vmem [#allocation9], %s1910
          %1912 = dma.done %s1908, 32
        $region56: #{_forward_impl.2} parent=47 // pred_fallthru
          _
      $region48: #{_forward_impl.2} parent=5 // pred_fallthru
        _
    $region6: #{_forward_impl.2} parent=1 // loop_footer
      %s24 = sadd.s32 1, %s20
    $region7: #{_forward_impl.2} parent=1 // loop_footer_branch
      %19 = sbr.rel target = $region3
    $region8: #{_forward_impl.2} parent=1 // loop_exit
      _
    %1913 = vsyncpa [#allocation4], 1
    %s1914 = scalar_lea.sflag [#allocation4], 1
    %1915 = vsyncpa %s1914, 1
    %1916 = vsyncpa [#allocation7], 1
    %s1917 = scalar_lea.sflag [#allocation7], 1
    %1918 = vsyncpa %s1917, 1
    %1919 = vsyncpa [#allocation5], 1
    %s1920 = scalar_lea.sflag [#allocation5], 1
    %1921 = vsyncpa %s1920, 1
    %1922 = vsyncpa [#allocation10], 1
    %s1923 = scalar_lea.sflag [#allocation10], 1
    %1924 = vsyncpa %s1923, 1

</llo_original>
